<compile_context>
chip_gen: v7x
topology: tpu7x:2x2x1
jax: 0.10.0
libtpu: 0.0.40
codegen_flags: <defaults>
</compile_context>

<pallas_src>
import functools

import jax
import jax.numpy as jnp
import numpy as np
from jax.experimental import pallas as pl
from jax.experimental.pallas import tpu as pltpu


# ----------------------------------------------------------------------------
# helpers (trace-time, concrete ints only)
# ----------------------------------------------------------------------------
def _round_up(x, m):
    return ((x + m - 1) // m) * m


# ----------------------------------------------------------------------------
# Fused kernel: 2-layer LSTM recurrence + per-chunk output projection.
# Grid = (batch_blocks [parallel], time_chunks [arbitrary]).
# ----------------------------------------------------------------------------
def _lstm_lm_kernel(x_ref, wih1_ref, whh1_ref, b1_ref, wih2_ref, whh2_ref,
                    b2_ref, wout_ref, bout_ref,
                    logits_ref, hn_ref, cn_ref,
                    h1_sc, c1_sc, h2_sc, c2_sc, h2buf,
                    *, seq_len, seq_pad):
    c_idx = pl.program_id(1)
    tc, bb, _ = x_ref.shape
    hdim = h1_sc.shape[-1]
    mask_tail = (seq_pad != seq_len)          # static python bool

    @pl.when(c_idx == 0)
    def _():
        h1_sc[...] = jnp.zeros_like(h1_sc)
        c1_sc[...] = jnp.zeros_like(c1_sc)
        h2_sc[...] = jnp.zeros_like(h2_sc)
        c2_sc[...] = jnp.zeros_like(c2_sc)

    # Hoisted once per grid step: weight reads and bias broadcasts
    # (JAX does not CSE broadcast_in_dim; don't redo these per timestep).
    w_ih1 = wih1_ref[...]
    w_hh1 = whh1_ref[...]
    w_ih2 = wih2_ref[...]
    w_hh2 = whh2_ref[...]
    b1 = jnp.broadcast_to(b1_ref[...], (bb, 4 * hdim))
    b2 = jnp.broadcast_to(b2_ref[...], (bb, 4 * hdim))

    def cell(x_bf16, h, c, w_ih, w_hh, bias):
        # Two accumulating MXU dots (no [x|h] concat copy); bf16 operands,
        # f32 accumulation; gate/elementwise math stays f32 (v5e-safe).
        gates = (jnp.dot(x_bf16, w_ih, preferred_element_type=jnp.float32)
                 + jnp.dot(h.astype(jnp.bfloat16), w_hh,
                           preferred_element_type=jnp.float32)
                 + bias)
        # Packed gate order is (i, f, o, g): one wide sigmoid + one tanh.
        ifo = jax.nn.sigmoid(gates[:, :3 * hdim])
        i = ifo[:, 0 * hdim:1 * hdim]
        f = ifo[:, 1 * hdim:2 * hdim]
        o = ifo[:, 2 * hdim:3 * hdim]
        g = jnp.tanh(gates[:, 3 * hdim:])
        c_new = f * c + i * g
        h_new = o * jnp.tanh(c_new)
        return h_new, c_new

    def step(t, carry):
        h1, c1, h2, c2 = carry
        nh1, nc1 = cell(x_ref[t], h1, c1, w_ih1, w_hh1, b1)
        nh2, nc2 = cell(nh1.astype(jnp.bfloat16), h2, c2, w_ih2, w_hh2, b2)
        h2buf[t] = nh2                                   # staged for projection
        if mask_tail:
            # Padded tail timesteps must not advance the recurrent state.
            valid = (c_idx * tc + t) < seq_len
            nh1 = jnp.where(valid, nh1, h1)
            nc1 = jnp.where(valid, nc1, c1)
            nh2 = jnp.where(valid, nh2, h2)
            nc2 = jnp.where(valid, nc2, c2)
        return nh1, nc1, nh2, nc2

    carry0 = (h1_sc[...], c1_sc[...], h2_sc[...], c2_sc[...])
    h1, c1, h2, c2 = jax.lax.fori_loop(0, tc, step, carry0, unroll=True)

    # carry recurrent state to the next chunk
    h1_sc[...] = h1
    c1_sc[...] = c1
    h2_sc[...] = h2
    c2_sc[...] = c2

    # Fused output projection for the whole chunk: one (tc*bb, h) x (h, v)
    # matmul, lane-dense store.  Removes the (S, B, H) HBM round-trip.
    hflat = h2buf[...].reshape(tc * bb, hdim).astype(jnp.bfloat16)
    logits = (jnp.dot(hflat, wout_ref[...], preferred_element_type=jnp.float32)
              + bout_ref[...])
    logits_ref[...] = logits.reshape(tc, bb, -1)

    # (h_n, c_n) written only once, on the last chunk
    @pl.when(c_idx == pl.num_programs(1) - 1)
    def _():
        hn_ref[0] = h1
        hn_ref[1] = h2
        cn_ref[0] = c1
        cn_ref[1] = c2


def lstm_lm(embeds, wih1, whh1, b1, wih2, whh2, b2, wout, bout,
            *, seq_len, tc):
    seq_pad, b_pad, e_pad = embeds.shape
    h_pad = whh1.shape[0]
    v_pad = wout.shape[1]
    n_chunks = seq_pad // tc

    # Batch-block parallel axis (second TensorCore on v7x when b_pad >= 16).
    nbb = 2 if (b_pad % 16 == 0) else 1
    bb = b_pad // nbb

    kernel = functools.partial(_lstm_lm_kernel, seq_len=seq_len,
                               seq_pad=seq_pad)

    out_shapes = (
        jax.ShapeDtypeStruct((seq_pad, b_pad, v_pad), jnp.float32),  # logits
        jax.ShapeDtypeStruct((2, b_pad, h_pad), jnp.float32),        # h_n
        jax.ShapeDtypeStruct((2, b_pad, h_pad), jnp.float32),        # c_n
    )

    grid_spec = pltpu.PrefetchScalarGridSpec(
        num_scalar_prefetch=0,
        grid=(nbb, n_chunks),
        in_specs=[
            pl.BlockSpec((tc, bb, e_pad), lambda b, c: (c, b, 0)),
            pl.BlockSpec(wih1.shape, lambda b, c: (0, 0)),   # resident weights
            pl.BlockSpec(whh1.shape, lambda b, c: (0, 0)),
            pl.BlockSpec(b1.shape, lambda b, c: (0, 0)),
            pl.BlockSpec(wih2.shape, lambda b, c: (0, 0)),
            pl.BlockSpec(whh2.shape, lambda b, c: (0, 0)),
            pl.BlockSpec(b2.shape, lambda b, c: (0, 0)),
            pl.BlockSpec(wout.shape, lambda b, c: (0, 0)),
            pl.BlockSpec(bout.shape, lambda b, c: (0, 0)),
        ],
        out_specs=[
            pl.BlockSpec((tc, bb, v_pad), lambda b, c: (c, b, 0)),
            pl.BlockSpec((2, bb, h_pad), lambda b, c: (0, b, 0)),
            pl.BlockSpec((2, bb, h_pad), lambda b, c: (0, b, 0)),
        ],
        scratch_shapes=[
            pltpu.VMEM((bb, h_pad), jnp.float32),       # h1
            pltpu.VMEM((bb, h_pad), jnp.float32),       # c1
            pltpu.VMEM((bb, h_pad), jnp.float32),       # h2
            pltpu.VMEM((bb, h_pad), jnp.float32),       # c2
            pltpu.VMEM((tc, bb, h_pad), jnp.float32),   # chunk h2 staging
        ],
    )

    return pl.pallas_call(
        kernel,
        out_shape=out_shapes,
        grid_spec=grid_spec,
        compiler_params=pltpu.CompilerParams(
            dimension_semantics=("parallel", "arbitrary"),
            vmem_limit_bytes=64 * 1024 * 1024),
    )(embeds, wih1, whh1, b1, wih2, whh2, b2, wout, bout)


# ----------------------------------------------------------------------------
# Full forward pass (PoetryModel.forward with hidden=None)
# ----------------------------------------------------------------------------
@functools.partial(jax.jit, static_argnames=("hidden_dim", "vocab_size", "chunk"))
def poetry_forward(tokens, packed, *, hidden_dim, vocab_size, chunk=16):
    seq_len, batch = tokens.shape
    b_pad = _round_up(batch, 8)
    tc = min(chunk, seq_len)
    seq_pad = _round_up(seq_len, tc)

    # Pad batch (sublanes) and seq (whole chunks); padded rows/steps are
    # computed but sliced away (padded steps don't touch the carry).
    tokens_p = jnp.pad(tokens, ((0, seq_pad - seq_len), (0, b_pad - batch)))
    # TODO(synk): fuse this gather into the kernel (scalar-prefetch tokens +
    #             DMA row gather) to avoid the (S, B, E) HBM round-trip.
    embeds = jnp.take(packed["embedding"], tokens_p, axis=0)  # bf16 (S,B,E)

    logits_p, h_n, c_n = lstm_lm(
        embeds,
        packed["wih1"], packed["whh1"], packed["b1"],
        packed["wih2"], packed["whh2"], packed["b2"],
        packed["w_out"], packed["b_out"],
        seq_len=seq_len, tc=tc,
    )

    logits = logits_p[:seq_len, :batch, :vocab_size]
    logits = logits.reshape(seq_len * batch, vocab_size)
    h_n = h_n[:, :batch, :hidden_dim]
    c_n = c_n[:, :batch, :hidden_dim]
    return logits, (h_n, c_n)


# ----------------------------------------------------------------------------
# Parameter handling
# ----------------------------------------------------------------------------
def init_params(key, vocab_size, embedding_dim, hidden_dim):
    """Raw (unpadded, PyTorch-layout-equivalent, gate order i,f,g,o) params."""
    ks = jax.random.split(key, 12)
    s = 1.0 / np.sqrt(hidden_dim)

    def u(k, shape):
        return jax.random.uniform(k, shape, jnp.float32, minval=-s, maxval=s)

    return {
        "embedding": jax.random.normal(ks[0], (vocab_size, embedding_dim),
                                       jnp.float32),
        "wih1": u(ks[1], (embedding_dim, 4 * hidden_dim)),
        "whh1": u(ks[2], (hidden_dim, 4 * hidden_dim)),
        "b1": u(ks[3], (4 * hidden_dim,)) + u(ks[4], (4 * hidden_dim,)),
        "wih2": u(ks[5], (hidden_dim, 4 * hidden_dim)),
        "whh2": u(ks[6], (hidden_dim, 4 * hidden_dim)),
        "b2": u(ks[7], (4 * hidden_dim,)) + u(ks[8], (4 * hidden_dim,)),
        "w_out": u(ks[9], (hidden_dim, vocab_size)),
        "b_out": u(ks[10], (vocab_size,)),
    }


def pack_params(raw, vocab_size, embedding_dim, hidden_dim,
                *, weights_dtype=jnp.bfloat16):
    """Pad to lane multiples, reorder gates to (i,f,o,g), bf16 matmul weights."""
    E, H, V = embedding_dim, hidden_dim, vocab_size
    e_pad = _round_up(E, 128)
    h_pad = _round_up(H, 128)
    v_pad = _round_up(V, 128)

    # PyTorch gate order is (i, f, g, o); repack to (i, f, o, g) so one wide
    # sigmoid covers the first three gate blocks and one tanh covers the last.
    perm = (0, 1, 3, 2)

    def gate_pack(w):   # (..., 4H) -> (..., 4*h_pad), reorder + zero-pad gates
        lead = w.shape[:-1]
        w = w.reshape(lead + (4, H))[..., perm, :]
        w = jnp.pad(w, [(0, 0)] * len(lead) + [(0, 0), (0, h_pad - H)])
        return w.reshape(lead + (4 * h_pad,))

    def row_pad(w, rows, dtype):
        return jnp.pad(w, ((0, rows - w.shape[0]), (0, 0))).astype(dtype)

    return {
        "embedding": jnp.pad(raw["embedding"],
                             ((0, 0), (0, e_pad - E))).astype(weights_dtype),
        "wih1": row_pad(gate_pack(raw["wih1"]), e_pad, weights_dtype),
        "whh1": row_pad(gate_pack(raw["whh1"]), h_pad, weights_dtype),
        "b1": gate_pack(raw["b1"])[None, :].astype(jnp.float32),
        "wih2": row_pad(gate_pack(raw["wih2"]), h_pad, weights_dtype),
        "whh2": row_pad(gate_pack(raw["whh2"]), h_pad, weights_dtype),
        "b2": gate_pack(raw["b2"])[None, :].astype(jnp.float32),
        "w_out": jnp.pad(raw["w_out"],
                         ((0, h_pad - H), (0, v_pad - V))).astype(weights_dtype),
        "b_out": jnp.pad(raw["b_out"], (0, v_pad - V))[None, :].astype(jnp.float32),
    }


# ----------------------------------------------------------------------------
# Pure-JAX reference (unpadded) for validation
# ----------------------------------------------------------------------------
def reference_forward(tokens, params, hidden_dim):
    seq_len, batch = tokens.shape
    embeds = jnp.take(params["embedding"], tokens, axis=0)
    hi = jax.lax.Precision.HIGHEST

    def cell(x, h, c, w_ih, w_hh, b):
        gates = (jnp.dot(x, w_ih, precision=hi)
                 + jnp.dot(h, w_hh, precision=hi) + b)
        i, f, g, o = jnp.split(gates, 4, axis=-1)
        c_new = jax.nn.sigmoid(f) * c + jax.nn.sigmoid(i) * jnp.tanh(g)
        h_new = jax.nn.sigmoid(o) * jnp.tanh(c_new)
        return h_new, c_new

    def step(carry, x_t):
        h1, c1, h2, c2 = carry
        h1, c1 = cell(x_t, h1, c1, params["wih1"], params["whh1"], params["b1"])
        h2, c2 = cell(h1, h2, c2, params["wih2"], params["whh2"], params["b2"])
        return (h1, c1, h2, c2), h2

    z = jnp.zeros((batch, hidden_dim), jnp.float32)
    (h1, c1, h2, c2), outs = jax.lax.scan(step, (z, z, z, z), embeds)
    logits = (jnp.dot(outs.reshape(seq_len * batch, hidden_dim),
                      params["w_out"], precision=hi) + params["b_out"])
    return logits, (jnp.stack([h1, h2]), jnp.stack([c1, c2]))


# ----------------------------------------------------------------------------
if __name__ == "__main__":
    vocab_size, embedding_dim, hidden_dim = 128, 32, 32
    seq_len, batch = 8, 4

    key = jax.random.PRNGKey(0)
    pkey, tkey = jax.random.split(key)
    raw = init_params(pkey, vocab_size, embedding_dim, hidden_dim)
    packed = pack_params(raw, vocab_size, embedding_dim, hidden_dim)
    tokens = jax.random.randint(tkey, (seq_len, batch), 0, vocab_size, jnp.int32)

    logits, (h_n, c_n) = poetry_forward(tokens, packed,
                                        hidden_dim=hidden_dim,
                                        vocab_size=vocab_size,
                                        chunk=16)
    jax.block_until_ready((logits, h_n, c_n))

    assert logits.shape == (seq_len * batch, vocab_size)
    assert h_n.shape == (2, batch, hidden_dim)
    assert c_n.shape == (2, batch, hidden_dim)

    # Reference uses the same bf16-rounded matmul weights (kernel accumulates
    # in f32); remaining mismatch is only per-step activation rounding.
    raw_ref = dict(raw)
    for k in ("embedding", "wih1", "whh1", "wih2", "whh2", "w_out"):
        raw_ref[k] = raw[k].astype(jnp.bfloat16).astype(jnp.float32)
    ref_logits, (ref_h, ref_c) = reference_forward(tokens, raw_ref, hidden_dim)

    np.testing.assert_allclose(np.asarray(logits), np.asarray(ref_logits),
                               rtol=2e-2, atol=2e-2)
    np.testing.assert_allclose(np.asarray(h_n), np.asarray(ref_h),
                               rtol=2e-2, atol=2e-2)
    np.testing.assert_allclose(np.asarray(c_n), np.asarray(ref_c),
                               rtol=2e-2, atol=2e-2)

    print("KERNEL_OK")
</pallas_src>

<mosaic_0001>
module attributes {stable_mosaic.version = 11 : i64} {
  func.func @_lstm_lm_kernel(%arg0: i32, %arg1: i32, %arg2: memref<8x8x128xbf16, #tpu.memory_space<vmem>>, %arg3: memref<128x512xbf16, #tpu.memory_space<vmem>>, %arg4: memref<128x512xbf16, #tpu.memory_space<vmem>>, %arg5: memref<1x512xf32, #tpu.memory_space<vmem>>, %arg6: memref<128x512xbf16, #tpu.memory_space<vmem>>, %arg7: memref<128x512xbf16, #tpu.memory_space<vmem>>, %arg8: memref<1x512xf32, #tpu.memory_space<vmem>>, %arg9: memref<128x128xbf16, #tpu.memory_space<vmem>>, %arg10: memref<1x128xf32, #tpu.memory_space<vmem>>, %arg11: memref<8x8x128xf32, #tpu.memory_space<vmem>>, %arg12: memref<2x8x128xf32, #tpu.memory_space<vmem>>, %arg13: memref<2x8x128xf32, #tpu.memory_space<vmem>>, %arg14: memref<8x128xf32, #tpu.memory_space<vmem>>, %arg15: memref<8x128xf32, #tpu.memory_space<vmem>>, %arg16: memref<8x128xf32, #tpu.memory_space<vmem>>, %arg17: memref<8x128xf32, #tpu.memory_space<vmem>>, %arg18: memref<8x8x128xf32, #tpu.memory_space<vmem>>) attributes {dimension_semantics = [#tpu.dimension_semantics<parallel>, #tpu.dimension_semantics<arbitrary>], iteration_bounds = array<i64: 1, 1>, scalar_prefetch = 0 : i64, scratch_operands = 5 : i64, tpu.core_type = #tpu.core_type<tc>, window_params = [{transform_indices = @transform_0, window_bounds = array<i64: 8, 8, 128>}, {pipeline_mode = #tpu.pipeline_mode<synchronous>, transform_indices = @transform_1, window_bounds = array<i64: 128, 512>}, {pipeline_mode = #tpu.pipeline_mode<synchronous>, transform_indices = @transform_2, window_bounds = array<i64: 128, 512>}, {pipeline_mode = #tpu.pipeline_mode<synchronous>, transform_indices = @transform_3, window_bounds = array<i64: 1, 512>}, {pipeline_mode = #tpu.pipeline_mode<synchronous>, transform_indices = @transform_4, window_bounds = array<i64: 128, 512>}, {pipeline_mode = #tpu.pipeline_mode<synchronous>, transform_indices = @transform_5, window_bounds = array<i64: 128, 512>}, {pipeline_mode = #tpu.pipeline_mode<synchronous>, transform_indices = @transform_6, window_bounds = array<i64: 1, 512>}, {pipeline_mode = #tpu.pipeline_mode<synchronous>, transform_indices = @transform_7, window_bounds = array<i64: 128, 128>}, {pipeline_mode = #tpu.pipeline_mode<synchronous>, transform_indices = @transform_8, window_bounds = array<i64: 1, 128>}, {transform_indices = @transform_9, window_bounds = array<i64: 8, 8, 128>}, {transform_indices = @transform_10, window_bounds = array<i64: 2, 8, 128>}, {transform_indices = @transform_11, window_bounds = array<i64: 2, 8, 128>}]} {
    %c0_i32 = arith.constant 0 : i32
    %0 = arith.cmpi eq, %arg1, %c0_i32 : i32
    %1 = arith.extui %0 : i1 to i32
    %c0_i32_0 = arith.constant 0 : i32
    %2 = arith.cmpi ne, %1, %c0_i32_0 : i32
    scf.if %2 {
      %cst_121 = arith.constant 0.000000e+00 : f32
      %434 = vector.broadcast %cst_121 : f32 to vector<8x128xf32>
      %c0_122 = arith.constant 0 : index
      %c0_123 = arith.constant 0 : index
      %435 = vector.load %arg14[%c0_122, %c0_123] : memref<8x128xf32, #tpu.memory_space<vmem>>, vector<8x128xf32>
      tpu.vector_store %arg14[%c0_122, %c0_123], %434 {strides = array<i32>} : memref<8x128xf32, #tpu.memory_space<vmem>>, vector<8x128xf32>,
      %cst_124 = arith.constant 0.000000e+00 : f32
      %436 = vector.broadcast %cst_124 : f32 to vector<8x128xf32>
      %c0_125 = arith.constant 0 : index
      %c0_126 = arith.constant 0 : index
      %437 = vector.load %arg15[%c0_125, %c0_126] : memref<8x128xf32, #tpu.memory_space<vmem>>, vector<8x128xf32>
      tpu.vector_store %arg15[%c0_125, %c0_126], %436 {strides = array<i32>} : memref<8x128xf32, #tpu.memory_space<vmem>>, vector<8x128xf32>,
      %cst_127 = arith.constant 0.000000e+00 : f32
      %438 = vector.broadcast %cst_127 : f32 to vector<8x128xf32>
      %c0_128 = arith.constant 0 : index
      %c0_129 = arith.constant 0 : index
      %439 = vector.load %arg16[%c0_128, %c0_129] : memref<8x128xf32, #tpu.memory_space<vmem>>, vector<8x128xf32>
      tpu.vector_store %arg16[%c0_128, %c0_129], %438 {strides = array<i32>} : memref<8x128xf32, #tpu.memory_space<vmem>>, vector<8x128xf32>,
      %cst_130 = arith.constant 0.000000e+00 : f32
      %440 = vector.broadcast %cst_130 : f32 to vector<8x128xf32>
      %c0_131 = arith.constant 0 : index
      %c0_132 = arith.constant 0 : index
      %441 = vector.load %arg17[%c0_131, %c0_132] : memref<8x128xf32, #tpu.memory_space<vmem>>, vector<8x128xf32>
      tpu.vector_store %arg17[%c0_131, %c0_132], %440 {strides = array<i32>} : memref<8x128xf32, #tpu.memory_space<vmem>>, vector<8x128xf32>,
    } else {
    }
    %c0 = arith.constant 0 : index
    %c0_1 = arith.constant 0 : index
    %3 = vector.load %arg3[%c0, %c0_1] : memref<128x512xbf16, #tpu.memory_space<vmem>>, vector<128x512xbf16>
    %c0_2 = arith.constant 0 : index
    %c0_3 = arith.constant 0 : index
    %4 = vector.load %arg4[%c0_2, %c0_3] : memref<128x512xbf16, #tpu.memory_space<vmem>>, vector<128x512xbf16>
    %c0_4 = arith.constant 0 : index
    %c0_5 = arith.constant 0 : index
    %5 = vector.load %arg6[%c0_4, %c0_5] : memref<128x512xbf16, #tpu.memory_space<vmem>>, vector<128x512xbf16>
    %c0_6 = arith.constant 0 : index
    %c0_7 = arith.constant 0 : index
    %6 = vector.load %arg7[%c0_6, %c0_7] : memref<128x512xbf16, #tpu.memory_space<vmem>>, vector<128x512xbf16>
    %c0_8 = arith.constant 0 : index
    %c0_9 = arith.constant 0 : index
    %7 = vector.load %arg5[%c0_8, %c0_9] : memref<1x512xf32, #tpu.memory_space<vmem>>, vector<1x512xf32>
    %8 = vector.shape_cast %7 : vector<1x512xf32> to vector<1x512xf32>
    %9 = vector.broadcast %8 : vector<1x512xf32> to vector<8x512xf32>
    %c0_10 = arith.constant 0 : index
    %c0_11 = arith.constant 0 : index
    %10 = vector.load %arg8[%c0_10, %c0_11] : memref<1x512xf32, #tpu.memory_space<vmem>>, vector<1x512xf32>
    %11 = vector.shape_cast %10 : vector<1x512xf32> to vector<1x512xf32>
    %12 = vector.broadcast %11 : vector<1x512xf32> to vector<8x512xf32>
    %c0_12 = arith.constant 0 : index
    %c0_13 = arith.constant 0 : index
    %13 = vector.load %arg14[%c0_12, %c0_13] : memref<8x128xf32, #tpu.memory_space<vmem>>, vector<8x128xf32>
    %c0_14 = arith.constant 0 : index
    %c0_15 = arith.constant 0 : index
    %14 = vector.load %arg15[%c0_14, %c0_15] : memref<8x128xf32, #tpu.memory_space<vmem>>, vector<8x128xf32>
    %c0_16 = arith.constant 0 : index
    %c0_17 = arith.constant 0 : index
    %15 = vector.load %arg16[%c0_16, %c0_17] : memref<8x128xf32, #tpu.memory_space<vmem>>, vector<8x128xf32>
    %c0_18 = arith.constant 0 : index
    %c0_19 = arith.constant 0 : index
    %16 = vector.load %arg17[%c0_18, %c0_19] : memref<8x128xf32, #tpu.memory_space<vmem>>, vector<8x128xf32>
    %c0_i32_20 = arith.constant 0 : i32
    %17 = arith.index_cast %c0_i32_20 : i32 to index
    %c0_21 = arith.constant 0 : index
    %c0_22 = arith.constant 0 : index
    %18 = vector.load %arg2[%17, %c0_21, %c0_22] : memref<8x8x128xbf16, #tpu.memory_space<vmem>>, vector<1x8x128xbf16>
    %19 = vector.shape_cast %18 : vector<1x8x128xbf16> to vector<8x128xbf16>
    %cst = arith.constant dense<0.000000e+00> : vector<8x512xf32>
    %20 = tpu.matmul %19, %3, %cst {dimension_numbers = #tpu.dot_dimension_numbers<[1], [0], [0], [1], [0, 0, 1, 1], [], []>} : vector<8x128xbf16>, vector<128x512xbf16>, vector<8x512xf32> -> vector<8x512xf32>
    %21 = arith.truncf %13 : vector<8x128xf32> to vector<8x128xbf16>
    %cst_23 = arith.constant dense<0.000000e+00> : vector<8x512xf32>
    %22 = tpu.matmul %21, %4, %cst_23 {dimension_numbers = #tpu.dot_dimension_numbers<[1], [0], [0], [1], [0, 0, 1, 1], [], []>} : vector<8x128xbf16>, vector<128x512xbf16>, vector<8x512xf32> -> vector<8x512xf32>
    %23 = arith.addf %20, %22 : vector<8x512xf32>
    %24 = arith.addf %23, %9 : vector<8x512xf32>
    %25 = vector.extract_strided_slice %24 {offsets = [0, 0], sizes = [8, 384], strides = [1, 1]} : vector<8x512xf32> to vector<8x384xf32>
    %26 = arith.negf %25 : vector<8x384xf32>
    %27 = math.exp %26 : vector<8x384xf32>
    %cst_24 = arith.constant 1.000000e+00 : f32
    %28 = vector.broadcast %cst_24 : f32 to vector<8x384xf32>
    %29 = arith.addf %28, %27 : vector<8x384xf32>
    %30 = arith.divf %28, %29 : vector<8x384xf32>
    %31 = vector.extract_strided_slice %30 {offsets = [0, 0], sizes = [8, 128], strides = [1, 1]} : vector<8x384xf32> to vector<8x128xf32>
    %32 = vector.extract_strided_slice %30 {offsets = [0, 128], sizes = [8, 128], strides = [1, 1]} : vector<8x384xf32> to vector<8x128xf32>
    %33 = vector.extract_strided_slice %30 {offsets = [0, 256], sizes = [8, 128], strides = [1, 1]} : vector<8x384xf32> to vector<8x128xf32>
    %34 = vector.extract_strided_slice %24 {offsets = [0, 384], sizes = [8, 128], strides = [1, 1]} : vector<8x512xf32> to vector<8x128xf32>
    %35 = math.tanh %34 : vector<8x128xf32>
    %36 = arith.mulf %32, %14 : vector<8x128xf32>
    %37 = arith.mulf %31, %35 : vector<8x128xf32>
    %38 = arith.addf %36, %37 : vector<8x128xf32>
    %39 = math.tanh %38 : vector<8x128xf32>
    %40 = arith.mulf %33, %39 : vector<8x128xf32>
    %41 = arith.truncf %40 : vector<8x128xf32> to vector<8x128xbf16>
    %cst_25 = arith.constant dense<0.000000e+00> : vector<8x512xf32>
    %42 = tpu.matmul %41, %5, %cst_25 {dimension_numbers = #tpu.dot_dimension_numbers<[1], [0], [0], [1], [0, 0, 1, 1], [], []>} : vector<8x128xbf16>, vector<128x512xbf16>, vector<8x512xf32> -> vector<8x512xf32>
    %43 = arith.truncf %15 : vector<8x128xf32> to vector<8x128xbf16>
    %cst_26 = arith.constant dense<0.000000e+00> : vector<8x512xf32>
    %44 = tpu.matmul %43, %6, %cst_26 {dimension_numbers = #tpu.dot_dimension_numbers<[1], [0], [0], [1], [0, 0, 1, 1], [], []>} : vector<8x128xbf16>, vector<128x512xbf16>, vector<8x512xf32> -> vector<8x512xf32>
    %45 = arith.addf %42, %44 : vector<8x512xf32>
    %46 = arith.addf %45, %12 : vector<8x512xf32>
    %47 = vector.extract_strided_slice %46 {offsets = [0, 0], sizes = [8, 384], strides = [1, 1]} : vector<8x512xf32> to vector<8x384xf32>
    %48 = arith.negf %47 : vector<8x384xf32>
    %49 = math.exp %48 : vector<8x384xf32>
    %cst_27 = arith.constant 1.000000e+00 : f32
    %50 = vector.broadcast %cst_27 : f32 to vector<8x384xf32>
    %51 = arith.addf %50, %49 : vector<8x384xf32>
    %52 = arith.divf %50, %51 : vector<8x384xf32>
    %53 = vector.extract_strided_slice %52 {offsets = [0, 0], sizes = [8, 128], strides = [1, 1]} : vector<8x384xf32> to vector<8x128xf32>
    %54 = vector.extract_strided_slice %52 {offsets = [0, 128], sizes = [8, 128], strides = [1, 1]} : vector<8x384xf32> to vector<8x128xf32>
    %55 = vector.extract_strided_slice %52 {offsets = [0, 256], sizes = [8, 128], strides = [1, 1]} : vector<8x384xf32> to vector<8x128xf32>
    %56 = vector.extract_strided_slice %46 {offsets = [0, 384], sizes = [8, 128], strides = [1, 1]} : vector<8x512xf32> to vector<8x128xf32>
    %57 = math.tanh %56 : vector<8x128xf32>
    %58 = arith.mulf %54, %16 : vector<8x128xf32>
    %59 = arith.mulf %53, %57 : vector<8x128xf32>
    %60 = arith.addf %58, %59 : vector<8x128xf32>
    %61 = math.tanh %60 : vector<8x128xf32>
    %62 = arith.mulf %55, %61 : vector<8x128xf32>
    %63 = arith.index_cast %c0_i32_20 : i32 to index
    %c0_28 = arith.constant 0 : index
    %c0_29 = arith.constant 0 : index
    %64 = vector.load %arg18[%63, %c0_28, %c0_29] : memref<8x8x128xf32, #tpu.memory_space<vmem>>, vector<1x8x128xf32>
    %65 = vector.shape_cast %64 : vector<1x8x128xf32> to vector<8x128xf32>
    %66 = vector.shape_cast %62 : vector<8x128xf32> to vector<1x8x128xf32>
    tpu.vector_store %arg18[%63, %c0_28, %c0_29], %66 {strides = array<i32>} : memref<8x8x128xf32, #tpu.memory_space<vmem>>, vector<1x8x128xf32>,
    %c1_i32 = arith.constant 1 : i32
    %67 = arith.index_cast %c1_i32 : i32 to index
    %c0_30 = arith.constant 0 : index
    %c0_31 = arith.constant 0 : index
    %68 = vector.load %arg2[%67, %c0_30, %c0_31] : memref<8x8x128xbf16, #tpu.memory_space<vmem>>, vector<1x8x128xbf16>
    %69 = vector.shape_cast %68 : vector<1x8x128xbf16> to vector<8x128xbf16>
    %cst_32 = arith.constant dense<0.000000e+00> : vector<8x512xf32>
    %70 = tpu.matmul %69, %3, %cst_32 {dimension_numbers = #tpu.dot_dimension_numbers<[1], [0], [0], [1], [0, 0, 1, 1], [], []>} : vector<8x128xbf16>, vector<128x512xbf16>, vector<8x512xf32> -> vector<8x512xf32>
    %71 = arith.truncf %40 : vector<8x128xf32> to vector<8x128xbf16>
    %cst_33 = arith.constant dense<0.000000e+00> : vector<8x512xf32>
    %72 = tpu.matmul %71, %4, %cst_33 {dimension_numbers = #tpu.dot_dimension_numbers<[1], [0], [0], [1], [0, 0, 1, 1], [], []>} : vector<8x128xbf16>, vector<128x512xbf16>, vector<8x512xf32> -> vector<8x512xf32>
    %73 = arith.addf %70, %72 : vector<8x512xf32>
    %74 = arith.addf %73, %9 : vector<8x512xf32>
    %75 = vector.extract_strided_slice %74 {offsets = [0, 0], sizes = [8, 384], strides = [1, 1]} : vector<8x512xf32> to vector<8x384xf32>
    %76 = arith.negf %75 : vector<8x384xf32>
    %77 = math.exp %76 : vector<8x384xf32>
    %cst_34 = arith.constant 1.000000e+00 : f32
    %78 = vector.broadcast %cst_34 : f32 to vector<8x384xf32>
    %79 = arith.addf %78, %77 : vector<8x384xf32>
    %80 = arith.divf %78, %79 : vector<8x384xf32>
    %81 = vector.extract_strided_slice %80 {offsets = [0, 0], sizes = [8, 128], strides = [1, 1]} : vector<8x384xf32> to vector<8x128xf32>
    %82 = vector.extract_strided_slice %80 {offsets = [0, 128], sizes = [8, 128], strides = [1, 1]} : vector<8x384xf32> to vector<8x128xf32>
    %83 = vector.extract_strided_slice %80 {offsets = [0, 256], sizes = [8, 128], strides = [1, 1]} : vector<8x384xf32> to vector<8x128xf32>
    %84 = vector.extract_strided_slice %74 {offsets = [0, 384], sizes = [8, 128], strides = [1, 1]} : vector<8x512xf32> to vector<8x128xf32>
    %85 = math.tanh %84 : vector<8x128xf32>
    %86 = arith.mulf %82, %38 : vector<8x128xf32>
    %87 = arith.mulf %81, %85 : vector<8x128xf32>
    %88 = arith.addf %86, %87 : vector<8x128xf32>
    %89 = math.tanh %88 : vector<8x128xf32>
    %90 = arith.mulf %83, %89 : vector<8x128xf32>
    %91 = arith.truncf %90 : vector<8x128xf32> to vector<8x128xbf16>
    %cst_35 = arith.constant dense<0.000000e+00> : vector<8x512xf32>
    %92 = tpu.matmul %91, %5, %cst_35 {dimension_numbers = #tpu.dot_dimension_numbers<[1], [0], [0], [1], [0, 0, 1, 1], [], []>} : vector<8x128xbf16>, vector<128x512xbf16>, vector<8x512xf32> -> vector<8x512xf32>
    %93 = arith.truncf %62 : vector<8x128xf32> to vector<8x128xbf16>
    %cst_36 = arith.constant dense<0.000000e+00> : vector<8x512xf32>
    %94 = tpu.matmul %93, %6, %cst_36 {dimension_numbers = #tpu.dot_dimension_numbers<[1], [0], [0], [1], [0, 0, 1, 1], [], []>} : vector<8x128xbf16>, vector<128x512xbf16>, vector<8x512xf32> -> vector<8x512xf32>
    %95 = arith.addf %92, %94 : vector<8x512xf32>
    %96 = arith.addf %95, %12 : vector<8x512xf32>
    %97 = vector.extract_strided_slice %96 {offsets = [0, 0], sizes = [8, 384], strides = [1, 1]} : vector<8x512xf32> to vector<8x384xf32>
    %98 = arith.negf %97 : vector<8x384xf32>
    %99 = math.exp %98 : vector<8x384xf32>
    %cst_37 = arith.constant 1.000000e+00 : f32
    %100 = vector.broadcast %cst_37 : f32 to vector<8x384xf32>
    %101 = arith.addf %100, %99 : vector<8x384xf32>
    %102 = arith.divf %100, %101 : vector<8x384xf32>
    %103 = vector.extract_strided_slice %102 {offsets = [0, 0], sizes = [8, 128], strides = [1, 1]} : vector<8x384xf32> to vector<8x128xf32>
    %104 = vector.extract_strided_slice %102 {offsets = [0, 128], sizes = [8, 128], strides = [1, 1]} : vector<8x384xf32> to vector<8x128xf32>
    %105 = vector.extract_strided_slice %102 {offsets = [0, 256], sizes = [8, 128], strides = [1, 1]} : vector<8x384xf32> to vector<8x128xf32>
    %106 = vector.extract_strided_slice %96 {offsets = [0, 384], sizes = [8, 128], strides = [1, 1]} : vector<8x512xf32> to vector<8x128xf32>
    %107 = math.tanh %106 : vector<8x128xf32>
    %108 = arith.mulf %104, %60 : vector<8x128xf32>
    %109 = arith.mulf %103, %107 : vector<8x128xf32>
    %110 = arith.addf %108, %109 : vector<8x128xf32>
    %111 = math.tanh %110 : vector<8x128xf32>
    %112 = arith.mulf %105, %111 : vector<8x128xf32>
    %113 = arith.index_cast %c1_i32 : i32 to index
    %c0_38 = arith.constant 0 : index
    %c0_39 = arith.constant 0 : index
    %114 = vector.load %arg18[%113, %c0_38, %c0_39] : memref<8x8x128xf32, #tpu.memory_space<vmem>>, vector<1x8x128xf32>
    %115 = vector.shape_cast %114 : vector<1x8x128xf32> to vector<8x128xf32>
    %116 = vector.shape_cast %112 : vector<8x128xf32> to vector<1x8x128xf32>
    tpu.vector_store %arg18[%113, %c0_38, %c0_39], %116 {strides = array<i32>} : memref<8x8x128xf32, #tpu.memory_space<vmem>>, vector<1x8x128xf32>,
    %c2_i32 = arith.constant 2 : i32
    %117 = arith.index_cast %c2_i32 : i32 to index
    %c0_40 = arith.constant 0 : index
    %c0_41 = arith.constant 0 : index
    %118 = vector.load %arg2[%117, %c0_40, %c0_41] : memref<8x8x128xbf16, #tpu.memory_space<vmem>>, vector<1x8x128xbf16>
    %119 = vector.shape_cast %118 : vector<1x8x128xbf16> to vector<8x128xbf16>
    %cst_42 = arith.constant dense<0.000000e+00> : vector<8x512xf32>
    %120 = tpu.matmul %119, %3, %cst_42 {dimension_numbers = #tpu.dot_dimension_numbers<[1], [0], [0], [1], [0, 0, 1, 1], [], []>} : vector<8x128xbf16>, vector<128x512xbf16>, vector<8x512xf32> -> vector<8x512xf32>
    %121 = arith.truncf %90 : vector<8x128xf32> to vector<8x128xbf16>
    %cst_43 = arith.constant dense<0.000000e+00> : vector<8x512xf32>
    %122 = tpu.matmul %121, %4, %cst_43 {dimension_numbers = #tpu.dot_dimension_numbers<[1], [0], [0], [1], [0, 0, 1, 1], [], []>} : vector<8x128xbf16>, vector<128x512xbf16>, vector<8x512xf32> -> vector<8x512xf32>
    %123 = arith.addf %120, %122 : vector<8x512xf32>
    %124 = arith.addf %123, %9 : vector<8x512xf32>
    %125 = vector.extract_strided_slice %124 {offsets = [0, 0], sizes = [8, 384], strides = [1, 1]} : vector<8x512xf32> to vector<8x384xf32>
    %126 = arith.negf %125 : vector<8x384xf32>
    %127 = math.exp %126 : vector<8x384xf32>
    %cst_44 = arith.constant 1.000000e+00 : f32
    %128 = vector.broadcast %cst_44 : f32 to vector<8x384xf32>
    %129 = arith.addf %128, %127 : vector<8x384xf32>
    %130 = arith.divf %128, %129 : vector<8x384xf32>
    %131 = vector.extract_strided_slice %130 {offsets = [0, 0], sizes = [8, 128], strides = [1, 1]} : vector<8x384xf32> to vector<8x128xf32>
    %132 = vector.extract_strided_slice %130 {offsets = [0, 128], sizes = [8, 128], strides = [1, 1]} : vector<8x384xf32> to vector<8x128xf32>
    %133 = vector.extract_strided_slice %130 {offsets = [0, 256], sizes = [8, 128], strides = [1, 1]} : vector<8x384xf32> to vector<8x128xf32>
    %134 = vector.extract_strided_slice %124 {offsets = [0, 384], sizes = [8, 128], strides = [1, 1]} : vector<8x512xf32> to vector<8x128xf32>
    %135 = math.tanh %134 : vector<8x128xf32>
    %136 = arith.mulf %132, %88 : vector<8x128xf32>
    %137 = arith.mulf %131, %135 : vector<8x128xf32>
    %138 = arith.addf %136, %137 : vector<8x128xf32>
    %139 = math.tanh %138 : vector<8x128xf32>
    %140 = arith.mulf %133, %139 : vector<8x128xf32>
    %141 = arith.truncf %140 : vector<8x128xf32> to vector<8x128xbf16>
    %cst_45 = arith.constant dense<0.000000e+00> : vector<8x512xf32>
    %142 = tpu.matmul %141, %5, %cst_45 {dimension_numbers = #tpu.dot_dimension_numbers<[1], [0], [0], [1], [0, 0, 1, 1], [], []>} : vector<8x128xbf16>, vector<128x512xbf16>, vector<8x512xf32> -> vector<8x512xf32>
    %143 = arith.truncf %112 : vector<8x128xf32> to vector<8x128xbf16>
    %cst_46 = arith.constant dense<0.000000e+00> : vector<8x512xf32>
    %144 = tpu.matmul %143, %6, %cst_46 {dimension_numbers = #tpu.dot_dimension_numbers<[1], [0], [0], [1], [0, 0, 1, 1], [], []>} : vector<8x128xbf16>, vector<128x512xbf16>, vector<8x512xf32> -> vector<8x512xf32>
    %145 = arith.addf %142, %144 : vector<8x512xf32>
    %146 = arith.addf %145, %12 : vector<8x512xf32>
    %147 = vector.extract_strided_slice %146 {offsets = [0, 0], sizes = [8, 384], strides = [1, 1]} : vector<8x512xf32> to vector<8x384xf32>
    %148 = arith.negf %147 : vector<8x384xf32>
    %149 = math.exp %148 : vector<8x384xf32>
    %cst_47 = arith.constant 1.000000e+00 : f32
    %150 = vector.broadcast %cst_47 : f32 to vector<8x384xf32>
    %151 = arith.addf %150, %149 : vector<8x384xf32>
    %152 = arith.divf %150, %151 : vector<8x384xf32>
    %153 = vector.extract_strided_slice %152 {offsets = [0, 0], sizes = [8, 128], strides = [1, 1]} : vector<8x384xf32> to vector<8x128xf32>
    %154 = vector.extract_strided_slice %152 {offsets = [0, 128], sizes = [8, 128], strides = [1, 1]} : vector<8x384xf32> to vector<8x128xf32>
    %155 = vector.extract_strided_slice %152 {offsets = [0, 256], sizes = [8, 128], strides = [1, 1]} : vector<8x384xf32> to vector<8x128xf32>
    %156 = vector.extract_strided_slice %146 {offsets = [0, 384], sizes = [8, 128], strides = [1, 1]} : vector<8x512xf32> to vector<8x128xf32>
    %157 = math.tanh %156 : vector<8x128xf32>
    %158 = arith.mulf %154, %110 : vector<8x128xf32>
    %159 = arith.mulf %153, %157 : vector<8x128xf32>
    %160 = arith.addf %158, %159 : vector<8x128xf32>
    %161 = math.tanh %160 : vector<8x128xf32>
    %162 = arith.mulf %155, %161 : vector<8x128xf32>
    %163 = arith.index_cast %c2_i32 : i32 to index
    %c0_48 = arith.constant 0 : index
    %c0_49 = arith.constant 0 : index
    %164 = vector.load %arg18[%163, %c0_48, %c0_49] : memref<8x8x128xf32, #tpu.memory_space<vmem>>, vector<1x8x128xf32>
    %165 = vector.shape_cast %164 : vector<1x8x128xf32> to vector<8x128xf32>
    %166 = vector.shape_cast %162 : vector<8x128xf32> to vector<1x8x128xf32>
    tpu.vector_store %arg18[%163, %c0_48, %c0_49], %166 {strides = array<i32>} : memref<8x8x128xf32, #tpu.memory_space<vmem>>, vector<1x8x128xf32>,
    %c3_i32 = arith.constant 3 : i32
    %167 = arith.index_cast %c3_i32 : i32 to index
    %c0_50 = arith.constant 0 : index
    %c0_51 = arith.constant 0 : index
    %168 = vector.load %arg2[%167, %c0_50, %c0_51] : memref<8x8x128xbf16, #tpu.memory_space<vmem>>, vector<1x8x128xbf16>
    %169 = vector.shape_cast %168 : vector<1x8x128xbf16> to vector<8x128xbf16>
    %cst_52 = arith.constant dense<0.000000e+00> : vector<8x512xf32>
    %170 = tpu.matmul %169, %3, %cst_52 {dimension_numbers = #tpu.dot_dimension_numbers<[1], [0], [0], [1], [0, 0, 1, 1], [], []>} : vector<8x128xbf16>, vector<128x512xbf16>, vector<8x512xf32> -> vector<8x512xf32>
    %171 = arith.truncf %140 : vector<8x128xf32> to vector<8x128xbf16>
    %cst_53 = arith.constant dense<0.000000e+00> : vector<8x512xf32>
    %172 = tpu.matmul %171, %4, %cst_53 {dimension_numbers = #tpu.dot_dimension_numbers<[1], [0], [0], [1], [0, 0, 1, 1], [], []>} : vector<8x128xbf16>, vector<128x512xbf16>, vector<8x512xf32> -> vector<8x512xf32>
    %173 = arith.addf %170, %172 : vector<8x512xf32>
    %174 = arith.addf %173, %9 : vector<8x512xf32>
    %175 = vector.extract_strided_slice %174 {offsets = [0, 0], sizes = [8, 384], strides = [1, 1]} : vector<8x512xf32> to vector<8x384xf32>
    %176 = arith.negf %175 : vector<8x384xf32>
    %177 = math.exp %176 : vector<8x384xf32>
    %cst_54 = arith.constant 1.000000e+00 : f32
    %178 = vector.broadcast %cst_54 : f32 to vector<8x384xf32>
    %179 = arith.addf %178, %177 : vector<8x384xf32>
    %180 = arith.divf %178, %179 : vector<8x384xf32>
    %181 = vector.extract_strided_slice %180 {offsets = [0, 0], sizes = [8, 128], strides = [1, 1]} : vector<8x384xf32> to vector<8x128xf32>
    %182 = vector.extract_strided_slice %180 {offsets = [0, 128], sizes = [8, 128], strides = [1, 1]} : vector<8x384xf32> to vector<8x128xf32>
    %183 = vector.extract_strided_slice %180 {offsets = [0, 256], sizes = [8, 128], strides = [1, 1]} : vector<8x384xf32> to vector<8x128xf32>
    %184 = vector.extract_strided_slice %174 {offsets = [0, 384], sizes = [8, 128], strides = [1, 1]} : vector<8x512xf32> to vector<8x128xf32>
    %185 = math.tanh %184 : vector<8x128xf32>
    %186 = arith.mulf %182, %138 : vector<8x128xf32>
    %187 = arith.mulf %181, %185 : vector<8x128xf32>
    %188 = arith.addf %186, %187 : vector<8x128xf32>
    %189 = math.tanh %188 : vector<8x128xf32>
    %190 = arith.mulf %183, %189 : vector<8x128xf32>
    %191 = arith.truncf %190 : vector<8x128xf32> to vector<8x128xbf16>
    %cst_55 = arith.constant dense<0.000000e+00> : vector<8x512xf32>
    %192 = tpu.matmul %191, %5, %cst_55 {dimension_numbers = #tpu.dot_dimension_numbers<[1], [0], [0], [1], [0, 0, 1, 1], [], []>} : vector<8x128xbf16>, vector<128x512xbf16>, vector<8x512xf32> -> vector<8x512xf32>
    %193 = arith.truncf %162 : vector<8x128xf32> to vector<8x128xbf16>
    %cst_56 = arith.constant dense<0.000000e+00> : vector<8x512xf32>
    %194 = tpu.matmul %193, %6, %cst_56 {dimension_numbers = #tpu.dot_dimension_numbers<[1], [0], [0], [1], [0, 0, 1, 1], [], []>} : vector<8x128xbf16>, vector<128x512xbf16>, vector<8x512xf32> -> vector<8x512xf32>
    %195 = arith.addf %192, %194 : vector<8x512xf32>
    %196 = arith.addf %195, %12 : vector<8x512xf32>
    %197 = vector.extract_strided_slice %196 {offsets = [0, 0], sizes = [8, 384], strides = [1, 1]} : vector<8x512xf32> to vector<8x384xf32>
    %198 = arith.negf %197 : vector<8x384xf32>
    %199 = math.exp %198 : vector<8x384xf32>
    %cst_57 = arith.constant 1.000000e+00 : f32
    %200 = vector.broadcast %cst_57 : f32 to vector<8x384xf32>
    %201 = arith.addf %200, %199 : vector<8x384xf32>
    %202 = arith.divf %200, %201 : vector<8x384xf32>
    %203 = vector.extract_strided_slice %202 {offsets = [0, 0], sizes = [8, 128], strides = [1, 1]} : vector<8x384xf32> to vector<8x128xf32>
    %204 = vector.extract_strided_slice %202 {offsets = [0, 128], sizes = [8, 128], strides = [1, 1]} : vector<8x384xf32> to vector<8x128xf32>
    %205 = vector.extract_strided_slice %202 {offsets = [0, 256], sizes = [8, 128], strides = [1, 1]} : vector<8x384xf32> to vector<8x128xf32>
    %206 = vector.extract_strided_slice %196 {offsets = [0, 384], sizes = [8, 128], strides = [1, 1]} : vector<8x512xf32> to vector<8x128xf32>
    %207 = math.tanh %206 : vector<8x128xf32>
    %208 = arith.mulf %204, %160 : vector<8x128xf32>
    %209 = arith.mulf %203, %207 : vector<8x128xf32>
    %210 = arith.addf %208, %209 : vector<8x128xf32>
    %211 = math.tanh %210 : vector<8x128xf32>
    %212 = arith.mulf %205, %211 : vector<8x128xf32>
    %213 = arith.index_cast %c3_i32 : i32 to index
    %c0_58 = arith.constant 0 : index
    %c0_59 = arith.constant 0 : index
    %214 = vector.load %arg18[%213, %c0_58, %c0_59] : memref<8x8x128xf32, #tpu.memory_space<vmem>>, vector<1x8x128xf32>
    %215 = vector.shape_cast %214 : vector<1x8x128xf32> to vector<8x128xf32>
    %216 = vector.shape_cast %212 : vector<8x128xf32> to vector<1x8x128xf32>
    tpu.vector_store %arg18[%213, %c0_58, %c0_59], %216 {strides = array<i32>} : memref<8x8x128xf32, #tpu.memory_space<vmem>>, vector<1x8x128xf32>,
    %c4_i32 = arith.constant 4 : i32
    %217 = arith.index_cast %c4_i32 : i32 to index
    %c0_60 = arith.constant 0 : index
    %c0_61 = arith.constant 0 : index
    %218 = vector.load %arg2[%217, %c0_60, %c0_61] : memref<8x8x128xbf16, #tpu.memory_space<vmem>>, vector<1x8x128xbf16>
    %219 = vector.shape_cast %218 : vector<1x8x128xbf16> to vector<8x128xbf16>
    %cst_62 = arith.constant dense<0.000000e+00> : vector<8x512xf32>
    %220 = tpu.matmul %219, %3, %cst_62 {dimension_numbers = #tpu.dot_dimension_numbers<[1], [0], [0], [1], [0, 0, 1, 1], [], []>} : vector<8x128xbf16>, vector<128x512xbf16>, vector<8x512xf32> -> vector<8x512xf32>
    %221 = arith.truncf %190 : vector<8x128xf32> to vector<8x128xbf16>
    %cst_63 = arith.constant dense<0.000000e+00> : vector<8x512xf32>
    %222 = tpu.matmul %221, %4, %cst_63 {dimension_numbers = #tpu.dot_dimension_numbers<[1], [0], [0], [1], [0, 0, 1, 1], [], []>} : vector<8x128xbf16>, vector<128x512xbf16>, vector<8x512xf32> -> vector<8x512xf32>
    %223 = arith.addf %220, %222 : vector<8x512xf32>
    %224 = arith.addf %223, %9 : vector<8x512xf32>
    %225 = vector.extract_strided_slice %224 {offsets = [0, 0], sizes = [8, 384], strides = [1, 1]} : vector<8x512xf32> to vector<8x384xf32>
    %226 = arith.negf %225 : vector<8x384xf32>
    %227 = math.exp %226 : vector<8x384xf32>
    %cst_64 = arith.constant 1.000000e+00 : f32
    %228 = vector.broadcast %cst_64 : f32 to vector<8x384xf32>
    %229 = arith.addf %228, %227 : vector<8x384xf32>
    %230 = arith.divf %228, %229 : vector<8x384xf32>
    %231 = vector.extract_strided_slice %230 {offsets = [0, 0], sizes = [8, 128], strides = [1, 1]} : vector<8x384xf32> to vector<8x128xf32>
    %232 = vector.extract_strided_slice %230 {offsets = [0, 128], sizes = [8, 128], strides = [1, 1]} : vector<8x384xf32> to vector<8x128xf32>
    %233 = vector.extract_strided_slice %230 {offsets = [0, 256], sizes = [8, 128], strides = [1, 1]} : vector<8x384xf32> to vector<8x128xf32>
    %234 = vector.extract_strided_slice %224 {offsets = [0, 384], sizes = [8, 128], strides = [1, 1]} : vector<8x512xf32> to vector<8x128xf32>
    %235 = math.tanh %234 : vector<8x128xf32>
    %236 = arith.mulf %232, %188 : vector<8x128xf32>
    %237 = arith.mulf %231, %235 : vector<8x128xf32>
    %238 = arith.addf %236, %237 : vector<8x128xf32>
    %239 = math.tanh %238 : vector<8x128xf32>
    %240 = arith.mulf %233, %239 : vector<8x128xf32>
    %241 = arith.truncf %240 : vector<8x128xf32> to vector<8x128xbf16>
    %cst_65 = arith.constant dense<0.000000e+00> : vector<8x512xf32>
    %242 = tpu.matmul %241, %5, %cst_65 {dimension_numbers = #tpu.dot_dimension_numbers<[1], [0], [0], [1], [0, 0, 1, 1], [], []>} : vector<8x128xbf16>, vector<128x512xbf16>, vector<8x512xf32> -> vector<8x512xf32>
    %243 = arith.truncf %212 : vector<8x128xf32> to vector<8x128xbf16>
    %cst_66 = arith.constant dense<0.000000e+00> : vector<8x512xf32>
    %244 = tpu.matmul %243, %6, %cst_66 {dimension_numbers = #tpu.dot_dimension_numbers<[1], [0], [0], [1], [0, 0, 1, 1], [], []>} : vector<8x128xbf16>, vector<128x512xbf16>, vector<8x512xf32> -> vector<8x512xf32>
    %245 = arith.addf %242, %244 : vector<8x512xf32>
    %246 = arith.addf %245, %12 : vector<8x512xf32>
    %247 = vector.extract_strided_slice %246 {offsets = [0, 0], sizes = [8, 384], strides = [1, 1]} : vector<8x512xf32> to vector<8x384xf32>
    %248 = arith.negf %247 : vector<8x384xf32>
    %249 = math.exp %248 : vector<8x384xf32>
    %cst_67 = arith.constant 1.000000e+00 : f32
    %250 = vector.broadcast %cst_67 : f32 to vector<8x384xf32>
    %251 = arith.addf %250, %249 : vector<8x384xf32>
    %252 = arith.divf %250, %251 : vector<8x384xf32>
    %253 = vector.extract_strided_slice %252 {offsets = [0, 0], sizes = [8, 128], strides = [1, 1]} : vector<8x384xf32> to vector<8x128xf32>
    %254 = vector.extract_strided_slice %252 {offsets = [0, 128], sizes = [8, 128], strides = [1, 1]} : vector<8x384xf32> to vector<8x128xf32>
    %255 = vector.extract_strided_slice %252 {offsets = [0, 256], sizes = [8, 128], strides = [1, 1]} : vector<8x384xf32> to vector<8x128xf32>
    %256 = vector.extract_strided_slice %246 {offsets = [0, 384], sizes = [8, 128], strides = [1, 1]} : vector<8x512xf32> to vector<8x128xf32>
    %257 = math.tanh %256 : vector<8x128xf32>
    %258 = arith.mulf %254, %210 : vector<8x128xf32>
    %259 = arith.mulf %253, %257 : vector<8x128xf32>
    %260 = arith.addf %258, %259 : vector<8x128xf32>
    %261 = math.tanh %260 : vector<8x128xf32>
    %262 = arith.mulf %255, %261 : vector<8x128xf32>
    %263 = arith.index_cast %c4_i32 : i32 to index
    %c0_68 = arith.constant 0 : index
    %c0_69 = arith.constant 0 : index
    %264 = vector.load %arg18[%263, %c0_68, %c0_69] : memref<8x8x128xf32, #tpu.memory_space<vmem>>, vector<1x8x128xf32>
    %265 = vector.shape_cast %264 : vector<1x8x128xf32> to vector<8x128xf32>
    %266 = vector.shape_cast %262 : vector<8x128xf32> to vector<1x8x128xf32>
    tpu.vector_store %arg18[%263, %c0_68, %c0_69], %266 {strides = array<i32>} : memref<8x8x128xf32, #tpu.memory_space<vmem>>, vector<1x8x128xf32>,
    %c5_i32 = arith.constant 5 : i32
    %267 = arith.index_cast %c5_i32 : i32 to index
    %c0_70 = arith.constant 0 : index
    %c0_71 = arith.constant 0 : index
    %268 = vector.load %arg2[%267, %c0_70, %c0_71] : memref<8x8x128xbf16, #tpu.memory_space<vmem>>, vector<1x8x128xbf16>
    %269 = vector.shape_cast %268 : vector<1x8x128xbf16> to vector<8x128xbf16>
    %cst_72 = arith.constant dense<0.000000e+00> : vector<8x512xf32>
    %270 = tpu.matmul %269, %3, %cst_72 {dimension_numbers = #tpu.dot_dimension_numbers<[1], [0], [0], [1], [0, 0, 1, 1], [], []>} : vector<8x128xbf16>, vector<128x512xbf16>, vector<8x512xf32> -> vector<8x512xf32>
    %271 = arith.truncf %240 : vector<8x128xf32> to vector<8x128xbf16>
    %cst_73 = arith.constant dense<0.000000e+00> : vector<8x512xf32>
    %272 = tpu.matmul %271, %4, %cst_73 {dimension_numbers = #tpu.dot_dimension_numbers<[1], [0], [0], [1], [0, 0, 1, 1], [], []>} : vector<8x128xbf16>, vector<128x512xbf16>, vector<8x512xf32> -> vector<8x512xf32>
    %273 = arith.addf %270, %272 : vector<8x512xf32>
    %274 = arith.addf %273, %9 : vector<8x512xf32>
    %275 = vector.extract_strided_slice %274 {offsets = [0, 0], sizes = [8, 384], strides = [1, 1]} : vector<8x512xf32> to vector<8x384xf32>
    %276 = arith.negf %275 : vector<8x384xf32>
    %277 = math.exp %276 : vector<8x384xf32>
    %cst_74 = arith.constant 1.000000e+00 : f32
    %278 = vector.broadcast %cst_74 : f32 to vector<8x384xf32>
    %279 = arith.addf %278, %277 : vector<8x384xf32>
    %280 = arith.divf %278, %279 : vector<8x384xf32>
    %281 = vector.extract_strided_slice %280 {offsets = [0, 0], sizes = [8, 128], strides = [1, 1]} : vector<8x384xf32> to vector<8x128xf32>
    %282 = vector.extract_strided_slice %280 {offsets = [0, 128], sizes = [8, 128], strides = [1, 1]} : vector<8x384xf32> to vector<8x128xf32>
    %283 = vector.extract_strided_slice %280 {offsets = [0, 256], sizes = [8, 128], strides = [1, 1]} : vector<8x384xf32> to vector<8x128xf32>
    %284 = vector.extract_strided_slice %274 {offsets = [0, 384], sizes = [8, 128], strides = [1, 1]} : vector<8x512xf32> to vector<8x128xf32>
    %285 = math.tanh %284 : vector<8x128xf32>
    %286 = arith.mulf %282, %238 : vector<8x128xf32>
    %287 = arith.mulf %281, %285 : vector<8x128xf32>
    %288 = arith.addf %286, %287 : vector<8x128xf32>
    %289 = math.tanh %288 : vector<8x128xf32>
    %290 = arith.mulf %283, %289 : vector<8x128xf32>
    %291 = arith.truncf %290 : vector<8x128xf32> to vector<8x128xbf16>
    %cst_75 = arith.constant dense<0.000000e+00> : vector<8x512xf32>
    %292 = tpu.matmul %291, %5, %cst_75 {dimension_numbers = #tpu.dot_dimension_numbers<[1], [0], [0], [1], [0, 0, 1, 1], [], []>} : vector<8x128xbf16>, vector<128x512xbf16>, vector<8x512xf32> -> vector<8x512xf32>
    %293 = arith.truncf %262 : vector<8x128xf32> to vector<8x128xbf16>
    %cst_76 = arith.constant dense<0.000000e+00> : vector<8x512xf32>
    %294 = tpu.matmul %293, %6, %cst_76 {dimension_numbers = #tpu.dot_dimension_numbers<[1], [0], [0], [1], [0, 0, 1, 1], [], []>} : vector<8x128xbf16>, vector<128x512xbf16>, vector<8x512xf32> -> vector<8x512xf32>
    %295 = arith.addf %292, %294 : vector<8x512xf32>
    %296 = arith.addf %295, %12 : vector<8x512xf32>
    %297 = vector.extract_strided_slice %296 {offsets = [0, 0], sizes = [8, 384], strides = [1, 1]} : vector<8x512xf32> to vector<8x384xf32>
    %298 = arith.negf %297 : vector<8x384xf32>
    %299 = math.exp %298 : vector<8x384xf32>
    %cst_77 = arith.constant 1.000000e+00 : f32
    %300 = vector.broadcast %cst_77 : f32 to vector<8x384xf32>
    %301 = arith.addf %300, %299 : vector<8x384xf32>
    %302 = arith.divf %300, %301 : vector<8x384xf32>
    %303 = vector.extract_strided_slice %302 {offsets = [0, 0], sizes = [8, 128], strides = [1, 1]} : vector<8x384xf32> to vector<8x128xf32>
    %304 = vector.extract_strided_slice %302 {offsets = [0, 128], sizes = [8, 128], strides = [1, 1]} : vector<8x384xf32> to vector<8x128xf32>
    %305 = vector.extract_strided_slice %302 {offsets = [0, 256], sizes = [8, 128], strides = [1, 1]} : vector<8x384xf32> to vector<8x128xf32>
    %306 = vector.extract_strided_slice %296 {offsets = [0, 384], sizes = [8, 128], strides = [1, 1]} : vector<8x512xf32> to vector<8x128xf32>
    %307 = math.tanh %306 : vector<8x128xf32>
    %308 = arith.mulf %304, %260 : vector<8x128xf32>
    %309 = arith.mulf %303, %307 : vector<8x128xf32>
    %310 = arith.addf %308, %309 : vector<8x128xf32>
    %311 = math.tanh %310 : vector<8x128xf32>
    %312 = arith.mulf %305, %311 : vector<8x128xf32>
    %313 = arith.index_cast %c5_i32 : i32 to index
    %c0_78 = arith.constant 0 : index
    %c0_79 = arith.constant 0 : index
    %314 = vector.load %arg18[%313, %c0_78, %c0_79] : memref<8x8x128xf32, #tpu.memory_space<vmem>>, vector<1x8x128xf32>
    %315 = vector.shape_cast %314 : vector<1x8x128xf32> to vector<8x128xf32>
    %316 = vector.shape_cast %312 : vector<8x128xf32> to vector<1x8x128xf32>
    tpu.vector_store %arg18[%313, %c0_78, %c0_79], %316 {strides = array<i32>} : memref<8x8x128xf32, #tpu.memory_space<vmem>>, vector<1x8x128xf32>,
    %c6_i32 = arith.constant 6 : i32
    %317 = arith.index_cast %c6_i32 : i32 to index
    %c0_80 = arith.constant 0 : index
    %c0_81 = arith.constant 0 : index
    %318 = vector.load %arg2[%317, %c0_80, %c0_81] : memref<8x8x128xbf16, #tpu.memory_space<vmem>>, vector<1x8x128xbf16>
    %319 = vector.shape_cast %318 : vector<1x8x128xbf16> to vector<8x128xbf16>
    %cst_82 = arith.constant dense<0.000000e+00> : vector<8x512xf32>
    %320 = tpu.matmul %319, %3, %cst_82 {dimension_numbers = #tpu.dot_dimension_numbers<[1], [0], [0], [1], [0, 0, 1, 1], [], []>} : vector<8x128xbf16>, vector<128x512xbf16>, vector<8x512xf32> -> vector<8x512xf32>
    %321 = arith.truncf %290 : vector<8x128xf32> to vector<8x128xbf16>
    %cst_83 = arith.constant dense<0.000000e+00> : vector<8x512xf32>
    %322 = tpu.matmul %321, %4, %cst_83 {dimension_numbers = #tpu.dot_dimension_numbers<[1], [0], [0], [1], [0, 0, 1, 1], [], []>} : vector<8x128xbf16>, vector<128x512xbf16>, vector<8x512xf32> -> vector<8x512xf32>
    %323 = arith.addf %320, %322 : vector<8x512xf32>
    %324 = arith.addf %323, %9 : vector<8x512xf32>
    %325 = vector.extract_strided_slice %324 {offsets = [0, 0], sizes = [8, 384], strides = [1, 1]} : vector<8x512xf32> to vector<8x384xf32>
    %326 = arith.negf %325 : vector<8x384xf32>
    %327 = math.exp %326 : vector<8x384xf32>
    %cst_84 = arith.constant 1.000000e+00 : f32
    %328 = vector.broadcast %cst_84 : f32 to vector<8x384xf32>
    %329 = arith.addf %328, %327 : vector<8x384xf32>
    %330 = arith.divf %328, %329 : vector<8x384xf32>
    %331 = vector.extract_strided_slice %330 {offsets = [0, 0], sizes = [8, 128], strides = [1, 1]} : vector<8x384xf32> to vector<8x128xf32>
    %332 = vector.extract_strided_slice %330 {offsets = [0, 128], sizes = [8, 128], strides = [1, 1]} : vector<8x384xf32> to vector<8x128xf32>
    %333 = vector.extract_strided_slice %330 {offsets = [0, 256], sizes = [8, 128], strides = [1, 1]} : vector<8x384xf32> to vector<8x128xf32>
    %334 = vector.extract_strided_slice %324 {offsets = [0, 384], sizes = [8, 128], strides = [1, 1]} : vector<8x512xf32> to vector<8x128xf32>
    %335 = math.tanh %334 : vector<8x128xf32>
    %336 = arith.mulf %332, %288 : vector<8x128xf32>
    %337 = arith.mulf %331, %335 : vector<8x128xf32>
    %338 = arith.addf %336, %337 : vector<8x128xf32>
    %339 = math.tanh %338 : vector<8x128xf32>
    %340 = arith.mulf %333, %339 : vector<8x128xf32>
    %341 = arith.truncf %340 : vector<8x128xf32> to vector<8x128xbf16>
    %cst_85 = arith.constant dense<0.000000e+00> : vector<8x512xf32>
    %342 = tpu.matmul %341, %5, %cst_85 {dimension_numbers = #tpu.dot_dimension_numbers<[1], [0], [0], [1], [0, 0, 1, 1], [], []>} : vector<8x128xbf16>, vector<128x512xbf16>, vector<8x512xf32> -> vector<8x512xf32>
    %343 = arith.truncf %312 : vector<8x128xf32> to vector<8x128xbf16>
    %cst_86 = arith.constant dense<0.000000e+00> : vector<8x512xf32>
    %344 = tpu.matmul %343, %6, %cst_86 {dimension_numbers = #tpu.dot_dimension_numbers<[1], [0], [0], [1], [0, 0, 1, 1], [], []>} : vector<8x128xbf16>, vector<128x512xbf16>, vector<8x512xf32> -> vector<8x512xf32>
    %345 = arith.addf %342, %344 : vector<8x512xf32>
    %346 = arith.addf %345, %12 : vector<8x512xf32>
    %347 = vector.extract_strided_slice %346 {offsets = [0, 0], sizes = [8, 384], strides = [1, 1]} : vector<8x512xf32> to vector<8x384xf32>
    %348 = arith.negf %347 : vector<8x384xf32>
    %349 = math.exp %348 : vector<8x384xf32>
    %cst_87 = arith.constant 1.000000e+00 : f32
    %350 = vector.broadcast %cst_87 : f32 to vector<8x384xf32>
    %351 = arith.addf %350, %349 : vector<8x384xf32>
    %352 = arith.divf %350, %351 : vector<8x384xf32>
    %353 = vector.extract_strided_slice %352 {offsets = [0, 0], sizes = [8, 128], strides = [1, 1]} : vector<8x384xf32> to vector<8x128xf32>
    %354 = vector.extract_strided_slice %352 {offsets = [0, 128], sizes = [8, 128], strides = [1, 1]} : vector<8x384xf32> to vector<8x128xf32>
    %355 = vector.extract_strided_slice %352 {offsets = [0, 256], sizes = [8, 128], strides = [1, 1]} : vector<8x384xf32> to vector<8x128xf32>
    %356 = vector.extract_strided_slice %346 {offsets = [0, 384], sizes = [8, 128], strides = [1, 1]} : vector<8x512xf32> to vector<8x128xf32>
    %357 = math.tanh %356 : vector<8x128xf32>
    %358 = arith.mulf %354, %310 : vector<8x128xf32>
    %359 = arith.mulf %353, %357 : vector<8x128xf32>
    %360 = arith.addf %358, %359 : vector<8x128xf32>
    %361 = math.tanh %360 : vector<8x128xf32>
    %362 = arith.mulf %355, %361 : vector<8x128xf32>
    %363 = arith.index_cast %c6_i32 : i32 to index
    %c0_88 = arith.constant 0 : index
    %c0_89 = arith.constant 0 : index
    %364 = vector.load %arg18[%363, %c0_88, %c0_89] : memref<8x8x128xf32, #tpu.memory_space<vmem>>, vector<1x8x128xf32>
    %365 = vector.shape_cast %364 : vector<1x8x128xf32> to vector<8x128xf32>
    %366 = vector.shape_cast %362 : vector<8x128xf32> to vector<1x8x128xf32>
    tpu.vector_store %arg18[%363, %c0_88, %c0_89], %366 {strides = array<i32>} : memref<8x8x128xf32, #tpu.memory_space<vmem>>, vector<1x8x128xf32>,
    %c7_i32 = arith.constant 7 : i32
    %367 = arith.index_cast %c7_i32 : i32 to index
    %c0_90 = arith.constant 0 : index
    %c0_91 = arith.constant 0 : index
    %368 = vector.load %arg2[%367, %c0_90, %c0_91] : memref<8x8x128xbf16, #tpu.memory_space<vmem>>, vector<1x8x128xbf16>
    %369 = vector.shape_cast %368 : vector<1x8x128xbf16> to vector<8x128xbf16>
    %cst_92 = arith.constant dense<0.000000e+00> : vector<8x512xf32>
    %370 = tpu.matmul %369, %3, %cst_92 {dimension_numbers = #tpu.dot_dimension_numbers<[1], [0], [0], [1], [0, 0, 1, 1], [], []>} : vector<8x128xbf16>, vector<128x512xbf16>, vector<8x512xf32> -> vector<8x512xf32>
    %371 = arith.truncf %340 : vector<8x128xf32> to vector<8x128xbf16>
    %cst_93 = arith.constant dense<0.000000e+00> : vector<8x512xf32>
    %372 = tpu.matmul %371, %4, %cst_93 {dimension_numbers = #tpu.dot_dimension_numbers<[1], [0], [0], [1], [0, 0, 1, 1], [], []>} : vector<8x128xbf16>, vector<128x512xbf16>, vector<8x512xf32> -> vector<8x512xf32>
    %373 = arith.addf %370, %372 : vector<8x512xf32>
    %374 = arith.addf %373, %9 : vector<8x512xf32>
    %375 = vector.extract_strided_slice %374 {offsets = [0, 0], sizes = [8, 384], strides = [1, 1]} : vector<8x512xf32> to vector<8x384xf32>
    %376 = arith.negf %375 : vector<8x384xf32>
    %377 = math.exp %376 : vector<8x384xf32>
    %cst_94 = arith.constant 1.000000e+00 : f32
    %378 = vector.broadcast %cst_94 : f32 to vector<8x384xf32>
    %379 = arith.addf %378, %377 : vector<8x384xf32>
    %380 = arith.divf %378, %379 : vector<8x384xf32>
    %381 = vector.extract_strided_slice %380 {offsets = [0, 0], sizes = [8, 128], strides = [1, 1]} : vector<8x384xf32> to vector<8x128xf32>
    %382 = vector.extract_strided_slice %380 {offsets = [0, 128], sizes = [8, 128], strides = [1, 1]} : vector<8x384xf32> to vector<8x128xf32>
    %383 = vector.extract_strided_slice %380 {offsets = [0, 256], sizes = [8, 128], strides = [1, 1]} : vector<8x384xf32> to vector<8x128xf32>
    %384 = vector.extract_strided_slice %374 {offsets = [0, 384], sizes = [8, 128], strides = [1, 1]} : vector<8x512xf32> to vector<8x128xf32>
    %385 = math.tanh %384 : vector<8x128xf32>
    %386 = arith.mulf %382, %338 : vector<8x128xf32>
    %387 = arith.mulf %381, %385 : vector<8x128xf32>
    %388 = arith.addf %386, %387 : vector<8x128xf32>
    %389 = math.tanh %388 : vector<8x128xf32>
    %390 = arith.mulf %383, %389 : vector<8x128xf32>
    %391 = arith.truncf %390 : vector<8x128xf32> to vector<8x128xbf16>
    %cst_95 = arith.constant dense<0.000000e+00> : vector<8x512xf32>
    %392 = tpu.matmul %391, %5, %cst_95 {dimension_numbers = #tpu.dot_dimension_numbers<[1], [0], [0], [1], [0, 0, 1, 1], [], []>} : vector<8x128xbf16>, vector<128x512xbf16>, vector<8x512xf32> -> vector<8x512xf32>
    %393 = arith.truncf %362 : vector<8x128xf32> to vector<8x128xbf16>
    %cst_96 = arith.constant dense<0.000000e+00> : vector<8x512xf32>
    %394 = tpu.matmul %393, %6, %cst_96 {dimension_numbers = #tpu.dot_dimension_numbers<[1], [0], [0], [1], [0, 0, 1, 1], [], []>} : vector<8x128xbf16>, vector<128x512xbf16>, vector<8x512xf32> -> vector<8x512xf32>
    %395 = arith.addf %392, %394 : vector<8x512xf32>
    %396 = arith.addf %395, %12 : vector<8x512xf32>
    %397 = vector.extract_strided_slice %396 {offsets = [0, 0], sizes = [8, 384], strides = [1, 1]} : vector<8x512xf32> to vector<8x384xf32>
    %398 = arith.negf %397 : vector<8x384xf32>
    %399 = math.exp %398 : vector<8x384xf32>
    %cst_97 = arith.constant 1.000000e+00 : f32
    %400 = vector.broadcast %cst_97 : f32 to vector<8x384xf32>
    %401 = arith.addf %400, %399 : vector<8x384xf32>
    %402 = arith.divf %400, %401 : vector<8x384xf32>
    %403 = vector.extract_strided_slice %402 {offsets = [0, 0], sizes = [8, 128], strides = [1, 1]} : vector<8x384xf32> to vector<8x128xf32>
    %404 = vector.extract_strided_slice %402 {offsets = [0, 128], sizes = [8, 128], strides = [1, 1]} : vector<8x384xf32> to vector<8x128xf32>
    %405 = vector.extract_strided_slice %402 {offsets = [0, 256], sizes = [8, 128], strides = [1, 1]} : vector<8x384xf32> to vector<8x128xf32>
    %406 = vector.extract_strided_slice %396 {offsets = [0, 384], sizes = [8, 128], strides = [1, 1]} : vector<8x512xf32> to vector<8x128xf32>
    %407 = math.tanh %406 : vector<8x128xf32>
    %408 = arith.mulf %404, %360 : vector<8x128xf32>
    %409 = arith.mulf %403, %407 : vector<8x128xf32>
    %410 = arith.addf %408, %409 : vector<8x128xf32>
    %411 = math.tanh %410 : vector<8x128xf32>
    %412 = arith.mulf %405, %411 : vector<8x128xf32>
    %413 = arith.index_cast %c7_i32 : i32 to index
    %c0_98 = arith.constant 0 : index
    %c0_99 = arith.constant 0 : index
    %414 = vector.load %arg18[%413, %c0_98, %c0_99] : memref<8x8x128xf32, #tpu.memory_space<vmem>>, vector<1x8x128xf32>
    %415 = vector.shape_cast %414 : vector<1x8x128xf32> to vector<8x128xf32>
    %416 = vector.shape_cast %412 : vector<8x128xf32> to vector<1x8x128xf32>
    tpu.vector_store %arg18[%413, %c0_98, %c0_99], %416 {strides = array<i32>} : memref<8x8x128xf32, #tpu.memory_space<vmem>>, vector<1x8x128xf32>,
    %c8_i32 = arith.constant 8 : i32
    %c0_100 = arith.constant 0 : index
    %c0_101 = arith.constant 0 : index
    %417 = vector.load %arg14[%c0_100, %c0_101] : memref<8x128xf32, #tpu.memory_space<vmem>>, vector<8x128xf32>
    tpu.vector_store %arg14[%c0_100, %c0_101], %390 {strides = array<i32>} : memref<8x128xf32, #tpu.memory_space<vmem>>, vector<8x128xf32>,
    %c0_102 = arith.constant 0 : index
    %c0_103 = arith.constant 0 : index
    %418 = vector.load %arg15[%c0_102, %c0_103] : memref<8x128xf32, #tpu.memory_space<vmem>>, vector<8x128xf32>
    tpu.vector_store %arg15[%c0_102, %c0_103], %388 {strides = array<i32>} : memref<8x128xf32, #tpu.memory_space<vmem>>, vector<8x128xf32>,
    %c0_104 = arith.constant 0 : index
    %c0_105 = arith.constant 0 : index
    %419 = vector.load %arg16[%c0_104, %c0_105] : memref<8x128xf32, #tpu.memory_space<vmem>>, vector<8x128xf32>
    tpu.vector_store %arg16[%c0_104, %c0_105], %412 {strides = array<i32>} : memref<8x128xf32, #tpu.memory_space<vmem>>, vector<8x128xf32>,
    %c0_106 = arith.constant 0 : index
    %c0_107 = arith.constant 0 : index
    %420 = vector.load %arg17[%c0_106, %c0_107] : memref<8x128xf32, #tpu.memory_space<vmem>>, vector<8x128xf32>
    tpu.vector_store %arg17[%c0_106, %c0_107], %410 {strides = array<i32>} : memref<8x128xf32, #tpu.memory_space<vmem>>, vector<8x128xf32>,
    %c0_108 = arith.constant 0 : index
    %c0_109 = arith.constant 0 : index
    %c0_110 = arith.constant 0 : index
    %421 = vector.load %arg18[%c0_108, %c0_109, %c0_110] : memref<8x8x128xf32, #tpu.memory_space<vmem>>, vector<8x8x128xf32>
    %422 = vector.shape_cast %421 : vector<8x8x128xf32> to vector<64x128xf32>
    %423 = arith.truncf %422 : vector<64x128xf32> to vector<64x128xbf16>
    %c0_111 = arith.constant 0 : index
    %c0_112 = arith.constant 0 : index
    %424 = vector.load %arg9[%c0_111, %c0_112] : memref<128x128xbf16, #tpu.memory_space<vmem>>, vector<128x128xbf16>
    %cst_113 = arith.constant dense<0.000000e+00> : vector<64x128xf32>
    %425 = tpu.matmul %423, %424, %cst_113 {dimension_numbers = #tpu.dot_dimension_numbers<[1], [0], [0], [1], [0, 0, 1, 1], [], []>} : vector<64x128xbf16>, vector<128x128xbf16>, vector<64x128xf32> -> vector<64x128xf32>
    %c0_114 = arith.constant 0 : index
    %c0_115 = arith.constant 0 : index
    %426 = vector.load %arg10[%c0_114, %c0_115] : memref<1x128xf32, #tpu.memory_space<vmem>>, vector<1x128xf32>
    %427 = vector.broadcast %426 : vector<1x128xf32> to vector<64x128xf32>
    %428 = arith.addf %425, %427 : vector<64x128xf32>
    %429 = vector.shape_cast %428 : vector<64x128xf32> to vector<8x8x128xf32>
    %c0_116 = arith.constant 0 : index
    %c0_117 = arith.constant 0 : index
    %c0_118 = arith.constant 0 : index
    %430 = vector.load %arg11[%c0_116, %c0_117, %c0_118] : memref<8x8x128xf32, #tpu.memory_space<vmem>>, vector<8x8x128xf32>
    tpu.vector_store %arg11[%c0_116, %c0_117, %c0_118], %429 {strides = array<i32>} : memref<8x8x128xf32, #tpu.memory_space<vmem>>, vector<8x8x128xf32>,
    %c0_i32_119 = arith.constant 0 : i32
    %431 = arith.cmpi eq, %arg1, %c0_i32_119 : i32
    %432 = arith.extui %431 : i1 to i32
    %c0_i32_120 = arith.constant 0 : i32
    %433 = arith.cmpi ne, %432, %c0_i32_120 : i32
    scf.if %433 {
      %c0_121 = arith.constant 0 : index
      %c0_122 = arith.constant 0 : index
      %c0_123 = arith.constant 0 : index
      %434 = vector.load %arg12[%c0_121, %c0_122, %c0_123] : memref<2x8x128xf32, #tpu.memory_space<vmem>>, vector<1x8x128xf32>
      %435 = vector.shape_cast %434 : vector<1x8x128xf32> to vector<8x128xf32>
      %436 = vector.shape_cast %390 : vector<8x128xf32> to vector<1x8x128xf32>
      tpu.vector_store %arg12[%c0_121, %c0_122, %c0_123], %436 {strides = array<i32>} : memref<2x8x128xf32, #tpu.memory_space<vmem>>, vector<1x8x128xf32>,
      %c1 = arith.constant 1 : index
      %c0_124 = arith.constant 0 : index
      %c0_125 = arith.constant 0 : index
      %437 = vector.load %arg12[%c1, %c0_124, %c0_125] : memref<2x8x128xf32, #tpu.memory_space<vmem>>, vector<1x8x128xf32>
      %438 = vector.shape_cast %437 : vector<1x8x128xf32> to vector<8x128xf32>
      %439 = vector.shape_cast %412 : vector<8x128xf32> to vector<1x8x128xf32>
      tpu.vector_store %arg12[%c1, %c0_124, %c0_125], %439 {strides = array<i32>} : memref<2x8x128xf32, #tpu.memory_space<vmem>>, vector<1x8x128xf32>,
      %c0_126 = arith.constant 0 : index
      %c0_127 = arith.constant 0 : index
      %c0_128 = arith.constant 0 : index
      %440 = vector.load %arg13[%c0_126, %c0_127, %c0_128] : memref<2x8x128xf32, #tpu.memory_space<vmem>>, vector<1x8x128xf32>
      %441 = vector.shape_cast %440 : vector<1x8x128xf32> to vector<8x128xf32>
      %442 = vector.shape_cast %388 : vector<8x128xf32> to vector<1x8x128xf32>
      tpu.vector_store %arg13[%c0_126, %c0_127, %c0_128], %442 {strides = array<i32>} : memref<2x8x128xf32, #tpu.memory_space<vmem>>, vector<1x8x128xf32>,
      %c1_129 = arith.constant 1 : index
      %c0_130 = arith.constant 0 : index
      %c0_131 = arith.constant 0 : index
      %443 = vector.load %arg13[%c1_129, %c0_130, %c0_131] : memref<2x8x128xf32, #tpu.memory_space<vmem>>, vector<1x8x128xf32>
      %444 = vector.shape_cast %443 : vector<1x8x128xf32> to vector<8x128xf32>
      %445 = vector.shape_cast %410 : vector<8x128xf32> to vector<1x8x128xf32>
      tpu.vector_store %arg13[%c1_129, %c0_130, %c0_131], %445 {strides = array<i32>} : memref<2x8x128xf32, #tpu.memory_space<vmem>>, vector<1x8x128xf32>,
    } else {
    }
    return
  }
  func.func @transform_0(%arg0: i32, %arg1: i32) -> (i32, i32, i32) {
    %c0_i32 = arith.constant 0 : i32
    %c0_i32_0 = arith.constant 0 : i32
    return %arg1, %arg0, %c0_i32 : i32, i32, i32
  }
  func.func @transform_1(%arg0: i32, %arg1: i32) -> (i32, i32) {
    %c0_i32 = arith.constant 0 : i32
    %c0_i32_0 = arith.constant 0 : i32
    %c0_i32_1 = arith.constant 0 : i32
    return %c0_i32, %c0_i32_0 : i32, i32
  }
  func.func @transform_2(%arg0: i32, %arg1: i32) -> (i32, i32) {
    %c0_i32 = arith.constant 0 : i32
    %c0_i32_0 = arith.constant 0 : i32
    %c0_i32_1 = arith.constant 0 : i32
    return %c0_i32, %c0_i32_0 : i32, i32
  }
  func.func @transform_3(%arg0: i32, %arg1: i32) -> (i32, i32) {
    %c0_i32 = arith.constant 0 : i32
    %c0_i32_0 = arith.constant 0 : i32
    %c0_i32_1 = arith.constant 0 : i32
    return %c0_i32, %c0_i32_0 : i32, i32
  }
  func.func @transform_4(%arg0: i32, %arg1: i32) -> (i32, i32) {
    %c0_i32 = arith.constant 0 : i32
    %c0_i32_0 = arith.constant 0 : i32
    %c0_i32_1 = arith.constant 0 : i32
    return %c0_i32, %c0_i32_0 : i32, i32
  }
  func.func @transform_5(%arg0: i32, %arg1: i32) -> (i32, i32) {
    %c0_i32 = arith.constant 0 : i32
    %c0_i32_0 = arith.constant 0 : i32
    %c0_i32_1 = arith.constant 0 : i32
    return %c0_i32, %c0_i32_0 : i32, i32
  }
  func.func @transform_6(%arg0: i32, %arg1: i32) -> (i32, i32) {
    %c0_i32 = arith.constant 0 : i32
    %c0_i32_0 = arith.constant 0 : i32
    %c0_i32_1 = arith.constant 0 : i32
    return %c0_i32, %c0_i32_0 : i32, i32
  }
  func.func @transform_7(%arg0: i32, %arg1: i32) -> (i32, i32) {
    %c0_i32 = arith.constant 0 : i32
    %c0_i32_0 = arith.constant 0 : i32
    %c0_i32_1 = arith.constant 0 : i32
    return %c0_i32, %c0_i32_0 : i32, i32
  }
  func.func @transform_8(%arg0: i32, %arg1: i32) -> (i32, i32) {
    %c0_i32 = arith.constant 0 : i32
    %c0_i32_0 = arith.constant 0 : i32
    %c0_i32_1 = arith.constant 0 : i32
    return %c0_i32, %c0_i32_0 : i32, i32
  }
  func.func @transform_9(%arg0: i32, %arg1: i32) -> (i32, i32, i32) {
    %c0_i32 = arith.constant 0 : i32
    %c0_i32_0 = arith.constant 0 : i32
    return %arg1, %arg0, %c0_i32 : i32, i32, i32
  }
  func.func @transform_10(%arg0: i32, %arg1: i32) -> (i32, i32, i32) {
    %c0_i32 = arith.constant 0 : i32
    %c0_i32_0 = arith.constant 0 : i32
    %c0_i32_1 = arith.constant 0 : i32
    return %c0_i32, %arg0, %c0_i32_0 : i32, i32, i32
  }
  func.func @transform_11(%arg0: i32, %arg1: i32) -> (i32, i32, i32) {
    %c0_i32 = arith.constant 0 : i32
    %c0_i32_0 = arith.constant 0 : i32
    %c0_i32_1 = arith.constant 0 : i32
    return %c0_i32, %arg0, %c0_i32_0 : i32, i32, i32
  }
}

</mosaic_0001>

<llo_original>
// kernel: poetry_forward.1
$region0: #{poetry_forward.1}
  #allocation0 [shape = 'u32[]', space=smem, size = 0x4, offset = 0x4, fixed_abs, tag = 'smem constant byte address 0x4 - core index']
  #allocation1 [shape = 'u32[144,128]{1,0:T(1,128)}', space=vmem, size = 0x12000, scoped, tag = 'internal scratch']
  #allocation2 [shape = 'f32[8,128]{1,0:T(8,128)}', space=vmem, size = 0x1000, scoped, tag = 'scratch operand']
  #allocation3 [shape = 'f32[8,128]{1,0:T(8,128)}', space=vmem, size = 0x1000, scoped, tag = 'scratch operand']
  #allocation4 [shape = 'f32[8,128]{1,0:T(8,128)}', space=vmem, size = 0x1000, scoped, tag = 'scratch operand']
  #allocation5 [shape = 'f32[8,128]{1,0:T(8,128)}', space=vmem, size = 0x1000, scoped, tag = 'scratch operand']
  #allocation6 [shape = 'f32[8,8,128]{2,1,0:T(8,128)}', space=vmem, size = 0x8000, scoped, tag = 'scratch operand']
  %s0 = inlined_call_operand.hbm [shape: bf16[8,8,128], index: 0, kind: input, shape index: {}]
  %s1 = inlined_call_operand.hbm [shape: bf16[128,512], index: 1, kind: input, shape index: {}]
  %s2 = inlined_call_operand.hbm [shape: bf16[128,512], index: 2, kind: input, shape index: {}]
  %s3 = inlined_call_operand.hbm [shape: f32[1,512], index: 3, kind: input, shape index: {}]
  %s4 = inlined_call_operand.hbm [shape: bf16[128,512], index: 4, kind: input, shape index: {}]
  %s5 = inlined_call_operand.hbm [shape: bf16[128,512], index: 5, kind: input, shape index: {}]
  %s6 = inlined_call_operand.hbm [shape: f32[1,512], index: 6, kind: input, shape index: {}]
  %s7 = inlined_call_operand.hbm [shape: bf16[128,128], index: 7, kind: input, shape index: {}]
  %s8 = inlined_call_operand.hbm [shape: f32[1,128], index: 8, kind: input, shape index: {}]
  %s9 = inlined_call_operand.hbm [shape: f32[8,8,128], index: 9, kind: output, shape index: {0}]
  %s10 = inlined_call_operand.hbm [shape: f32[2,8,128], index: 10, kind: output, shape index: {1}]
  %s11 = inlined_call_operand.hbm [shape: f32[2,8,128], index: 11, kind: output, shape index: {2}]
  %12 = xla_tuple %s9, %s10, %s11
  %s13 = sld [smem:[#allocation0]]
  $region106: #{poetry_forward.1} parent=0
    _
  %s15 = ssub.s32 1, %s13
  %s16 = scalar_select 0, %s15, %s13
  $region1: #{poetry_forward.1} parent=0
    #allocation7 [shape = 'u8[16384]{0}', space=vmem, size = 0x4000, scoped, tag = 'input window, operand 0, single buffered']
    #allocation8 [shape = 's32[1]{0}', space=sflag, size = 0x4, scoped, tag = 'scoped memory for poetry_forward.1']
    #allocation9 [shape = 's32[1]{0}', space=sflag, size = 0x4, scoped, tag = 'scoped memory for poetry_forward.1']
    #allocation10 [shape = 'u8[131072]{0}', space=vmem, size = 0x20000, scoped, tag = 'input window, operand 1, single buffered']
    #allocation11 [shape = 's32[1]{0}', space=sflag, size = 0x4, scoped, tag = 'scoped memory for poetry_forward.1']
    #allocation12 [shape = 'u8[131072]{0}', space=vmem, size = 0x20000, scoped, tag = 'input window, operand 2, single buffered']
    #allocation13 [shape = 'u8[2048]{0}', space=vmem, size = 0x800, scoped, tag = 'input window, operand 3, single buffered']
    #allocation14 [shape = 's32[1]{0}', space=sflag, size = 0x4, scoped, tag = 'scoped memory for poetry_forward.1']
    #allocation15 [shape = 'u8[131072]{0}', space=vmem, size = 0x20000, scoped, tag = 'input window, operand 4, single buffered']
    #allocation16 [shape = 'u8[131072]{0}', space=vmem, size = 0x20000, scoped, tag = 'input window, operand 5, single buffered']
    #allocation17 [shape = 's32[1]{0}', space=sflag, size = 0x4, scoped, tag = 'scoped memory for poetry_forward.1']
    #allocation18 [shape = 'u8[2048]{0}', space=vmem, size = 0x800, scoped, tag = 'input window, operand 6, single buffered']
    #allocation19 [shape = 'u8[32768]{0}', space=vmem, size = 0x8000, scoped, tag = 'input window, operand 7, single buffered']
    #allocation20 [shape = 's32[1]{0}', space=sflag, size = 0x4, scoped, tag = 'scoped memory for poetry_forward.1']
    #allocation21 [shape = 'u8[512]{0}', space=vmem, size = 0x400, scoped, tag = 'input window, operand 8, single buffered']
    #allocation22 [shape = 'u8[32768]{0}', space=vmem, size = 0x8000, scoped, tag = 'output window, operand 0, single buffered']
    #allocation23 [shape = 'u8[8192]{0}', space=vmem, size = 0x2000, scoped, tag = 'output window, operand 1, single buffered']
    #allocation24 [shape = 's32[1]{0}', space=sflag, size = 0x4, scoped, tag = 'scoped memory for poetry_forward.1']
    #allocation25 [shape = 'u8[8192]{0}', space=vmem, size = 0x2000, scoped, tag = 'output window, operand 2, single buffered']
    %17 = vsyncpa [#allocation8], 0
    %18 = vsyncpa [#allocation11], 0
    %19 = vsyncpa [#allocation14], 0
    %20 = vsyncpa [#allocation17], 0
    %21 = vsyncpa [#allocation20], 0
    %22 = vsyncpa [#allocation9], 0
    %23 = vsyncpa [#allocation24], 0
    // Predicated region
    $region2: #{poetry_forward.1} parent=1 // pred_check
      _
    $region3: #{poetry_forward.1} parent=1 // pred_check_branch
      %25 = sbr.rel (0) target = $region5
    $region4: #{poetry_forward.1} parent=1 // pred_region
      %s27 = ssub.s32 512, 512
      %28 = vsyncadd [#allocation8], %s27
      %s29 = sshll.u32 [#allocation7], 4
      %s30 = int_to_ptr.vmem [resolvable:$true] %s29
      %35 = dma.hbm_to_vmem [thread:$0]  %s0, 512, %s30, [#allocation8], 64, 64, 4
    $region5: #{poetry_forward.1} parent=1 // pred_fallthru
      _
    // Predicated region
    $region6: #{poetry_forward.1} parent=1 // pred_check
      _
    $region7: #{poetry_forward.1} parent=1 // pred_check_branch
      %37 = sbr.rel (0) target = $region9
    $region8: #{poetry_forward.1} parent=1 // pred_region
      %s39 = ssub.s32 4096, 4096
      %40 = vsyncadd [#allocation11], %s39
      %s41 = sshll.u32 [#allocation10], 4
      %s42 = int_to_ptr.vmem [resolvable:$true] %s41
      %47 = dma.hbm_to_vmem [thread:$0]  %s1, 4096, %s42, [#allocation11], 256, 256, 16
    $region9: #{poetry_forward.1} parent=1 // pred_fallthru
      _
    // Predicated region
    $region10: #{poetry_forward.1} parent=1 // pred_check
      _
    $region11: #{poetry_forward.1} parent=1 // pred_check_branch
      %49 = sbr.rel (0) target = $region13
    $region12: #{poetry_forward.1} parent=1 // pred_region
      %s51 = ssub.s32 4096, 4096
      %52 = vsyncadd [#allocation11], %s51
      %s53 = sshll.u32 [#allocation12], 4
      %s54 = int_to_ptr.vmem [resolvable:$true] %s53
      %59 = dma.hbm_to_vmem [thread:$0]  %s2, 4096, %s54, [#allocation11], 256, 256, 16
    $region13: #{poetry_forward.1} parent=1 // pred_fallthru
      _
    // Predicated region
    $region14: #{poetry_forward.1} parent=1 // pred_check
      _
    $region15: #{poetry_forward.1} parent=1 // pred_check_branch
      %61 = sbr.rel (0) target = $region17
    $region16: #{poetry_forward.1} parent=1 // pred_region
      %s63 = ssub.s32 64, 64
      %64 = vsyncadd [#allocation14], %s63
      %s66 = sshll.u32 [#allocation13], 4
      %s67 = int_to_ptr.vmem [resolvable:$true] %s66
      %69 = dma.hbm_to_vmem [thread:$0]  %s3, 64, %s67, [#allocation14]
    $region17: #{poetry_forward.1} parent=1 // pred_fallthru
      _
    // Predicated region
    $region18: #{poetry_forward.1} parent=1 // pred_check
      _
    $region19: #{poetry_forward.1} parent=1 // pred_check_branch
      %71 = sbr.rel (0) target = $region21
    $region20: #{poetry_forward.1} parent=1 // pred_region
      %s73 = ssub.s32 4096, 4096
      %74 = vsyncadd [#allocation14], %s73
      %s75 = sshll.u32 [#allocation15], 4
      %s76 = int_to_ptr.vmem [resolvable:$true] %s75
      %81 = dma.hbm_to_vmem [thread:$0]  %s4, 4096, %s76, [#allocation14], 256, 256, 16
    $region21: #{poetry_forward.1} parent=1 // pred_fallthru
      _
    // Predicated region
    $region22: #{poetry_forward.1} parent=1 // pred_check
      _
    $region23: #{poetry_forward.1} parent=1 // pred_check_branch
      %83 = sbr.rel (0) target = $region25
    $region24: #{poetry_forward.1} parent=1 // pred_region
      %s85 = ssub.s32 4096, 4096
      %86 = vsyncadd [#allocation17], %s85
      %s87 = sshll.u32 [#allocation16], 4
      %s88 = int_to_ptr.vmem [resolvable:$true] %s87
      %93 = dma.hbm_to_vmem [thread:$0]  %s5, 4096, %s88, [#allocation17], 256, 256, 16
    $region25: #{poetry_forward.1} parent=1 // pred_fallthru
      _
    // Predicated region
    $region26: #{poetry_forward.1} parent=1 // pred_check
      _
    $region27: #{poetry_forward.1} parent=1 // pred_check_branch
      %95 = sbr.rel (0) target = $region29
    $region28: #{poetry_forward.1} parent=1 // pred_region
      %s97 = ssub.s32 64, 64
      %98 = vsyncadd [#allocation17], %s97
      %s100 = sshll.u32 [#allocation18], 4
      %s101 = int_to_ptr.vmem [resolvable:$true] %s100
      %103 = dma.hbm_to_vmem [thread:$0]  %s6, 64, %s101, [#allocation17]
    $region29: #{poetry_forward.1} parent=1 // pred_fallthru
      _
    // Predicated region
    $region30: #{poetry_forward.1} parent=1 // pred_check
      _
    $region31: #{poetry_forward.1} parent=1 // pred_check_branch
      %105 = sbr.rel (0) target = $region33
    $region32: #{poetry_forward.1} parent=1 // pred_region
      %s107 = ssub.s32 1024, 1024
      %108 = vsyncadd [#allocation20], %s107
      %s109 = sshll.u32 [#allocation19], 4
      %s110 = int_to_ptr.vmem [resolvable:$true] %s109
      %115 = dma.hbm_to_vmem [thread:$0]  %s7, 1024, %s110, [#allocation20], 64, 64, 4
    $region33: #{poetry_forward.1} parent=1 // pred_fallthru
      _
    // Predicated region
    $region34: #{poetry_forward.1} parent=1 // pred_check
      _
    $region35: #{poetry_forward.1} parent=1 // pred_check_branch
      %117 = sbr.rel (0) target = $region37
    $region36: #{poetry_forward.1} parent=1 // pred_region
      %s119 = ssub.s32 16, 16
      %120 = vsyncadd [#allocation20], %s119
      %s122 = sshll.u32 [#allocation21], 4
      %s123 = int_to_ptr.vmem [resolvable:$true] %s122
      %125 = dma.hbm_to_vmem [thread:$0]  %s8, 16, %s123, [#allocation20]
    $region37: #{poetry_forward.1} parent=1 // pred_fallthru
      _
    // Predicated region
    $region38: #{poetry_forward.1} parent=1 // pred_check
      _
    $region39: #{poetry_forward.1} parent=1 // pred_check_branch
      %127 = sbr.rel (0) target = $region41
    $region40: #{poetry_forward.1} parent=1 // pred_region
      %128 = dma.done [#allocation8], 512
    $region41: #{poetry_forward.1} parent=1 // pred_fallthru
      _
    // Predicated region
    $region42: #{poetry_forward.1} parent=1 // pred_check
      _
    $region43: #{poetry_forward.1} parent=1 // pred_check_branch
      %130 = sbr.rel (0) target = $region45
    $region44: #{poetry_forward.1} parent=1 // pred_region
      %131 = dma.done [#allocation11], 4096
    $region45: #{poetry_forward.1} parent=1 // pred_fallthru
      _
    // Predicated region
    $region46: #{poetry_forward.1} parent=1 // pred_check
      _
    $region47: #{poetry_forward.1} parent=1 // pred_check_branch
      %133 = sbr.rel (0) target = $region49
    $region48: #{poetry_forward.1} parent=1 // pred_region
      %134 = dma.done [#allocation11], 4096
    $region49: #{poetry_forward.1} parent=1 // pred_fallthru
      _
    // Predicated region
    $region50: #{poetry_forward.1} parent=1 // pred_check
      _
    $region51: #{poetry_forward.1} parent=1 // pred_check_branch
      %136 = sbr.rel (0) target = $region53
    $region52: #{poetry_forward.1} parent=1 // pred_region
      %137 = dma.done [#allocation14], 64
    $region53: #{poetry_forward.1} parent=1 // pred_fallthru
      _
    // Predicated region
    $region54: #{poetry_forward.1} parent=1 // pred_check
      _
    $region55: #{poetry_forward.1} parent=1 // pred_check_branch
      %139 = sbr.rel (0) target = $region57
    $region56: #{poetry_forward.1} parent=1 // pred_region
      %140 = dma.done [#allocation14], 4096
    $region57: #{poetry_forward.1} parent=1 // pred_fallthru
      _
    // Predicated region
    $region58: #{poetry_forward.1} parent=1 // pred_check
      _
    $region59: #{poetry_forward.1} parent=1 // pred_check_branch
      %142 = sbr.rel (0) target = $region61
    $region60: #{poetry_forward.1} parent=1 // pred_region
      %143 = dma.done [#allocation17], 4096
    $region61: #{poetry_forward.1} parent=1 // pred_fallthru
      _
    // Predicated region
    $region62: #{poetry_forward.1} parent=1 // pred_check
      _
    $region63: #{poetry_forward.1} parent=1 // pred_check_branch
      %145 = sbr.rel (0) target = $region65
    $region64: #{poetry_forward.1} parent=1 // pred_region
      %146 = dma.done [#allocation17], 64
    $region65: #{poetry_forward.1} parent=1 // pred_fallthru
      _
    // Predicated region
    $region66: #{poetry_forward.1} parent=1 // pred_check
      _
    $region67: #{poetry_forward.1} parent=1 // pred_check_branch
      %148 = sbr.rel (0) target = $region69
    $region68: #{poetry_forward.1} parent=1 // pred_region
      %149 = dma.done [#allocation20], 1024
    $region69: #{poetry_forward.1} parent=1 // pred_fallthru
      _
    // Predicated region
    $region70: #{poetry_forward.1} parent=1 // pred_check
      _
    $region71: #{poetry_forward.1} parent=1 // pred_check_branch
      %151 = sbr.rel (0) target = $region73
    $region72: #{poetry_forward.1} parent=1 // pred_region
      %152 = dma.done [#allocation20], 16
    $region73: #{poetry_forward.1} parent=1 // pred_fallthru
      _
    %p154 = scmp.eq.s32.totalorder 0, 0
    // Predicated region
    $region74: #{poetry_forward.1} parent=1 // pred_check
      %p155 = pneg %p154
    $region75: #{poetry_forward.1} parent=1 // pred_check_branch
      %157 = sbr.rel (%p155) target = $region77
    $region76: #{poetry_forward.1} parent=1 // pred_region
      %158 = vst [vmem:[#allocation2] sm:$0xff] 0.0
      %159 = vst [vmem:[#allocation3] sm:$0xff] 0.0
      %160 = vst [vmem:[#allocation4] sm:$0xff] 0.0
      %161 = vst [vmem:[#allocation5] sm:$0xff] 0.0
    $region77: #{poetry_forward.1} parent=1 // pred_fallthru
      _
    %v162 = vld [vmem:[#allocation10] sm:$0xff]
    %v163 = vld [vmem:[#allocation10 + $0x8] sm:$0xff]
    %v164 = vld [vmem:[#allocation10 + $0x10] sm:$0xff]
    %v165 = vld [vmem:[#allocation10 + $0x18] sm:$0xff]
    %v166 = vld [vmem:[#allocation10 + $0x20] sm:$0xff]
    %v167 = vld [vmem:[#allocation10 + $0x28] sm:$0xff]
    %v168 = vld [vmem:[#allocation10 + $0x30] sm:$0xff]
    %v169 = vld [vmem:[#allocation10 + $0x38] sm:$0xff]
    %v170 = vld [vmem:[#allocation10 + $0x40] sm:$0xff]
    %v171 = vld [vmem:[#allocation10 + $0x48] sm:$0xff]
    %v172 = vld [vmem:[#allocation10 + $0x50] sm:$0xff]
    %v173 = vld [vmem:[#allocation10 + $0x58] sm:$0xff]
    %v174 = vld [vmem:[#allocation10 + $0x60] sm:$0xff]
    %v175 = vld [vmem:[#allocation10 + $0x68] sm:$0xff]
    %v176 = vld [vmem:[#allocation10 + $0x70] sm:$0xff]
    %v177 = vld [vmem:[#allocation10 + $0x78] sm:$0xff]
    %v178 = vld [vmem:[#allocation10 + $0x80] sm:$0xff]
    %v179 = vld [vmem:[#allocation10 + $0x88] sm:$0xff]
    %v180 = vld [vmem:[#allocation10 + $0x90] sm:$0xff]
    %v181 = vld [vmem:[#allocation10 + $0x98] sm:$0xff]
    %v182 = vld [vmem:[#allocation10 + $0xa0] sm:$0xff]
    %v183 = vld [vmem:[#allocation10 + $0xa8] sm:$0xff]
    %v184 = vld [vmem:[#allocation10 + $0xb0] sm:$0xff]
    %v185 = vld [vmem:[#allocation10 + $0xb8] sm:$0xff]
    %v186 = vld [vmem:[#allocation10 + $0xc0] sm:$0xff]
    %v187 = vld [vmem:[#allocation10 + $0xc8] sm:$0xff]
    %v188 = vld [vmem:[#allocation10 + $0xd0] sm:$0xff]
    %v189 = vld [vmem:[#allocation10 + $0xd8] sm:$0xff]
    %v190 = vld [vmem:[#allocation10 + $0xe0] sm:$0xff]
    %v191 = vld [vmem:[#allocation10 + $0xe8] sm:$0xff]
    %v192 = vld [vmem:[#allocation10 + $0xf0] sm:$0xff]
    %v193 = vld [vmem:[#allocation10 + $0xf8] sm:$0xff]
    %v194 = vld [vmem:[#allocation12] sm:$0xff]
    %v195 = vld [vmem:[#allocation12 + $0x8] sm:$0xff]
    %v196 = vld [vmem:[#allocation12 + $0x10] sm:$0xff]
    %v197 = vld [vmem:[#allocation12 + $0x18] sm:$0xff]
    %v198 = vld [vmem:[#allocation12 + $0x20] sm:$0xff]
    %v199 = vld [vmem:[#allocation12 + $0x28] sm:$0xff]
    %v200 = vld [vmem:[#allocation12 + $0x30] sm:$0xff]
    %v201 = vld [vmem:[#allocation12 + $0x38] sm:$0xff]
    %v202 = vld [vmem:[#allocation12 + $0x40] sm:$0xff]
    %v203 = vld [vmem:[#allocation12 + $0x48] sm:$0xff]
    %v204 = vld [vmem:[#allocation12 + $0x50] sm:$0xff]
    %v205 = vld [vmem:[#allocation12 + $0x58] sm:$0xff]
    %v206 = vld [vmem:[#allocation12 + $0x60] sm:$0xff]
    %v207 = vld [vmem:[#allocation12 + $0x68] sm:$0xff]
    %v208 = vld [vmem:[#allocation12 + $0x70] sm:$0xff]
    %v209 = vld [vmem:[#allocation12 + $0x78] sm:$0xff]
    %v210 = vld [vmem:[#allocation12 + $0x80] sm:$0xff]
    %v211 = vld [vmem:[#allocation12 + $0x88] sm:$0xff]
    %v212 = vld [vmem:[#allocation12 + $0x90] sm:$0xff]
    %v213 = vld [vmem:[#allocation12 + $0x98] sm:$0xff]
    %v214 = vld [vmem:[#allocation12 + $0xa0] sm:$0xff]
    %v215 = vld [vmem:[#allocation12 + $0xa8] sm:$0xff]
    %v216 = vld [vmem:[#allocation12 + $0xb0] sm:$0xff]
    %v217 = vld [vmem:[#allocation12 + $0xb8] sm:$0xff]
    %v218 = vld [vmem:[#allocation12 + $0xc0] sm:$0xff]
    %v219 = vld [vmem:[#allocation12 + $0xc8] sm:$0xff]
    %v220 = vld [vmem:[#allocation12 + $0xd0] sm:$0xff]
    %v221 = vld [vmem:[#allocation12 + $0xd8] sm:$0xff]
    %v222 = vld [vmem:[#allocation12 + $0xe0] sm:$0xff]
    %v223 = vld [vmem:[#allocation12 + $0xe8] sm:$0xff]
    %v224 = vld [vmem:[#allocation12 + $0xf0] sm:$0xff]
    %v225 = vld [vmem:[#allocation12 + $0xf8] sm:$0xff]
    %v226 = vld [vmem:[#allocation15] sm:$0xff]
    %v227 = vld [vmem:[#allocation15 + $0x8] sm:$0xff]
    %v228 = vld [vmem:[#allocation15 + $0x10] sm:$0xff]
    %v229 = vld [vmem:[#allocation15 + $0x18] sm:$0xff]
    %v230 = vld [vmem:[#allocation15 + $0x20] sm:$0xff]
    %v231 = vld [vmem:[#allocation15 + $0x28] sm:$0xff]
    %v232 = vld [vmem:[#allocation15 + $0x30] sm:$0xff]
    %v233 = vld [vmem:[#allocation15 + $0x38] sm:$0xff]
    %v234 = vld [vmem:[#allocation15 + $0x40] sm:$0xff]
    %v235 = vld [vmem:[#allocation15 + $0x48] sm:$0xff]
    %v236 = vld [vmem:[#allocation15 + $0x50] sm:$0xff]
    %v237 = vld [vmem:[#allocation15 + $0x58] sm:$0xff]
    %v238 = vld [vmem:[#allocation15 + $0x60] sm:$0xff]
    %v239 = vld [vmem:[#allocation15 + $0x68] sm:$0xff]
    %v240 = vld [vmem:[#allocation15 + $0x70] sm:$0xff]
    %v241 = vld [vmem:[#allocation15 + $0x78] sm:$0xff]
    %v242 = vld [vmem:[#allocation15 + $0x80] sm:$0xff]
    %v243 = vld [vmem:[#allocation15 + $0x88] sm:$0xff]
    %v244 = vld [vmem:[#allocation15 + $0x90] sm:$0xff]
    %v245 = vld [vmem:[#allocation15 + $0x98] sm:$0xff]
    %v246 = vld [vmem:[#allocation15 + $0xa0] sm:$0xff]
    %v247 = vld [vmem:[#allocation15 + $0xa8] sm:$0xff]
    %v248 = vld [vmem:[#allocation15 + $0xb0] sm:$0xff]
    %v249 = vld [vmem:[#allocation15 + $0xb8] sm:$0xff]
    %v250 = vld [vmem:[#allocation15 + $0xc0] sm:$0xff]
    %v251 = vld [vmem:[#allocation15 + $0xc8] sm:$0xff]
    %v252 = vld [vmem:[#allocation15 + $0xd0] sm:$0xff]
    %v253 = vld [vmem:[#allocation15 + $0xd8] sm:$0xff]
    %v254 = vld [vmem:[#allocation15 + $0xe0] sm:$0xff]
    %v255 = vld [vmem:[#allocation15 + $0xe8] sm:$0xff]
    %v256 = vld [vmem:[#allocation15 + $0xf0] sm:$0xff]
    %v257 = vld [vmem:[#allocation15 + $0xf8] sm:$0xff]
    %v258 = vld [vmem:[#allocation16] sm:$0xff]
    %v259 = vld [vmem:[#allocation16 + $0x8] sm:$0xff]
    %v260 = vld [vmem:[#allocation16 + $0x10] sm:$0xff]
    %v261 = vld [vmem:[#allocation16 + $0x18] sm:$0xff]
    %v262 = vld [vmem:[#allocation16 + $0x20] sm:$0xff]
    %v263 = vld [vmem:[#allocation16 + $0x28] sm:$0xff]
    %v264 = vld [vmem:[#allocation16 + $0x30] sm:$0xff]
    %v265 = vld [vmem:[#allocation16 + $0x38] sm:$0xff]
    %v266 = vld [vmem:[#allocation16 + $0x40] sm:$0xff]
    %v267 = vld [vmem:[#allocation16 + $0x48] sm:$0xff]
    %v268 = vld [vmem:[#allocation16 + $0x50] sm:$0xff]
    %v269 = vld [vmem:[#allocation16 + $0x58] sm:$0xff]
    %v270 = vld [vmem:[#allocation16 + $0x60] sm:$0xff]
    %v271 = vld [vmem:[#allocation16 + $0x68] sm:$0xff]
    %v272 = vld [vmem:[#allocation16 + $0x70] sm:$0xff]
    %v273 = vld [vmem:[#allocation16 + $0x78] sm:$0xff]
    %v274 = vld [vmem:[#allocation16 + $0x80] sm:$0xff]
    %v275 = vld [vmem:[#allocation16 + $0x88] sm:$0xff]
    %v276 = vld [vmem:[#allocation16 + $0x90] sm:$0xff]
    %v277 = vld [vmem:[#allocation16 + $0x98] sm:$0xff]
    %v278 = vld [vmem:[#allocation16 + $0xa0] sm:$0xff]
    %v279 = vld [vmem:[#allocation16 + $0xa8] sm:$0xff]
    %v280 = vld [vmem:[#allocation16 + $0xb0] sm:$0xff]
    %v281 = vld [vmem:[#allocation16 + $0xb8] sm:$0xff]
    %v282 = vld [vmem:[#allocation16 + $0xc0] sm:$0xff]
    %v283 = vld [vmem:[#allocation16 + $0xc8] sm:$0xff]
    %v284 = vld [vmem:[#allocation16 + $0xd0] sm:$0xff]
    %v285 = vld [vmem:[#allocation16 + $0xd8] sm:$0xff]
    %v286 = vld [vmem:[#allocation16 + $0xe0] sm:$0xff]
    %v287 = vld [vmem:[#allocation16 + $0xe8] sm:$0xff]
    %v288 = vld [vmem:[#allocation16 + $0xf0] sm:$0xff]
    %v289 = vld [vmem:[#allocation16 + $0xf8] sm:$0xff]
    %v290 = vld [vmem:[#allocation13] sm:$0xf]
    %v292 = vlaneseq
    %v293 = vshrl.u32 %v292, 7
    %v294 = vsub.s32 0, %v293
    %v295 = vrot.slane %v290, %v294
    %v296 = vlaneseq
    %v297 = vshrl.u32 %v296, 7
    %v298 = vsub.s32 1, %v297
    %v299 = vrot.slane %v290, %v298
    %v300 = vlaneseq
    %v301 = vshrl.u32 %v300, 7
    %v302 = vsub.s32 2, %v301
    %v303 = vrot.slane %v290, %v302
    %v304 = vlaneseq
    %v305 = vshrl.u32 %v304, 7
    %v306 = vsub.s32 3, %v305
    %v307 = vrot.slane %v290, %v306
    %v312 = vld [vmem:[#allocation18] sm:$0xf]
    %v314 = vlaneseq
    %v315 = vshrl.u32 %v314, 7
    %v316 = vsub.s32 0, %v315
    %v317 = vrot.slane %v312, %v316
    %v318 = vlaneseq
    %v319 = vshrl.u32 %v318, 7
    %v320 = vsub.s32 1, %v319
    %v321 = vrot.slane %v312, %v320
    %v322 = vlaneseq
    %v323 = vshrl.u32 %v322, 7
    %v324 = vsub.s32 2, %v323
    %v325 = vrot.slane %v312, %v324
    %v326 = vlaneseq
    %v327 = vshrl.u32 %v326, 7
    %v328 = vsub.s32 3, %v327
    %v329 = vrot.slane %v312, %v328
    %v334 = vld [vmem:[#allocation2] sm:$0xff]
    %v335 = vld [vmem:[#allocation3] sm:$0xff]
    %v336 = vld [vmem:[#allocation4] sm:$0xff]
    %v337 = vld [vmem:[#allocation5] sm:$0xff]
    %v338 = vld [vmem:[#allocation7] sm:$0xf]
    %v339 = vpack.c.bf16 %v334, %v334
    %v372 = vunpack.c.l.b16 %v194
    %v373 = vunpack.c.h.b16 %v194
    %v374 = vunpack.c.l.b16 %v195
    %v375 = vunpack.c.h.b16 %v195
    %v376 = vunpack.c.l.b16 %v196
    %v377 = vunpack.c.h.b16 %v196
    %v378 = vunpack.c.l.b16 %v197
    %v379 = vunpack.c.h.b16 %v197
    %v380 = vunpack.c.l.b16 %v198
    %v381 = vunpack.c.h.b16 %v198
    %v382 = vunpack.c.l.b16 %v199
    %v383 = vunpack.c.h.b16 %v199
    %v384 = vunpack.c.l.b16 %v200
    %v385 = vunpack.c.h.b16 %v200
    %v386 = vunpack.c.l.b16 %v201
    %v387 = vunpack.c.h.b16 %v201
    %v388 = vunpack.c.l.b16 %v202
    %v389 = vunpack.c.h.b16 %v202
    %v390 = vunpack.c.l.b16 %v203
    %v391 = vunpack.c.h.b16 %v203
    %v392 = vunpack.c.l.b16 %v204
    %v393 = vunpack.c.h.b16 %v204
    %v394 = vunpack.c.l.b16 %v205
    %v395 = vunpack.c.h.b16 %v205
    %v396 = vunpack.c.l.b16 %v206
    %v397 = vunpack.c.h.b16 %v206
    %v398 = vunpack.c.l.b16 %v207
    %v399 = vunpack.c.h.b16 %v207
    %v400 = vunpack.c.l.b16 %v208
    %v401 = vunpack.c.h.b16 %v208
    %v402 = vunpack.c.l.b16 %v209
    %v403 = vunpack.c.h.b16 %v209
    %v404 = vunpack.c.l.b16 %v210
    %v405 = vunpack.c.h.b16 %v210
    %v406 = vunpack.c.l.b16 %v211
    %v407 = vunpack.c.h.b16 %v211
    %v408 = vunpack.c.l.b16 %v212
    %v409 = vunpack.c.h.b16 %v212
    %v410 = vunpack.c.l.b16 %v213
    %v411 = vunpack.c.h.b16 %v213
    %v412 = vunpack.c.l.b16 %v214
    %v413 = vunpack.c.h.b16 %v214
    %v414 = vunpack.c.l.b16 %v215
    %v415 = vunpack.c.h.b16 %v215
    %v416 = vunpack.c.l.b16 %v216
    %v417 = vunpack.c.h.b16 %v216
    %v418 = vunpack.c.l.b16 %v217
    %v419 = vunpack.c.h.b16 %v217
    %v420 = vunpack.c.l.b16 %v218
    %v421 = vunpack.c.h.b16 %v218
    %v422 = vunpack.c.l.b16 %v219
    %v423 = vunpack.c.h.b16 %v219
    %v424 = vunpack.c.l.b16 %v220
    %v425 = vunpack.c.h.b16 %v220
    %v426 = vunpack.c.l.b16 %v221
    %v427 = vunpack.c.h.b16 %v221
    %v428 = vunpack.c.l.b16 %v222
    %v429 = vunpack.c.h.b16 %v222
    %v430 = vunpack.c.l.b16 %v223
    %v431 = vunpack.c.h.b16 %v223
    %v432 = vunpack.c.l.b16 %v224
    %v433 = vunpack.c.h.b16 %v224
    %v434 = vunpack.c.l.b16 %v225
    %v435 = vunpack.c.h.b16 %v225
    %v436 = vpack.c.b16 %v376, %v372
    %v437 = vpack.c.b16 %v377, %v373
    %v438 = vpack.c.b16 %v378, %v374
    %v439 = vpack.c.b16 %v379, %v375
    %v440 = vpack.c.b16 %v384, %v380
    %v441 = vpack.c.b16 %v385, %v381
    %v442 = vpack.c.b16 %v386, %v382
    %v443 = vpack.c.b16 %v387, %v383
    %v444 = vpack.c.b16 %v392, %v388
    %v445 = vpack.c.b16 %v393, %v389
    %v446 = vpack.c.b16 %v394, %v390
    %v447 = vpack.c.b16 %v395, %v391
    %v448 = vpack.c.b16 %v400, %v396
    %v449 = vpack.c.b16 %v401, %v397
    %v450 = vpack.c.b16 %v402, %v398
    %v451 = vpack.c.b16 %v403, %v399
    %v452 = vpack.c.b16 %v408, %v404
    %v453 = vpack.c.b16 %v409, %v405
    %v454 = vpack.c.b16 %v410, %v406
    %v455 = vpack.c.b16 %v411, %v407
    %v456 = vpack.c.b16 %v416, %v412
    %v457 = vpack.c.b16 %v417, %v413
    %v458 = vpack.c.b16 %v418, %v414
    %v459 = vpack.c.b16 %v419, %v415
    %v460 = vpack.c.b16 %v424, %v420
    %v461 = vpack.c.b16 %v425, %v421
    %v462 = vpack.c.b16 %v426, %v422
    %v463 = vpack.c.b16 %v427, %v423
    %v464 = vpack.c.b16 %v432, %v428
    %v465 = vpack.c.b16 %v433, %v429
    %v466 = vpack.c.b16 %v434, %v430
    %v467 = vpack.c.b16 %v435, %v431
    %500 = vmatprep.subr.bf16.mxu0 %v437
    %501 = vmatpush1.bf16.msra.mxu0 %v436
    %502 = vmatprep.subr.bf16.mxu0 %v441
    %503 = vmatpush1.bf16.msra.mxu0 %v440
    %504 = vmatprep.subr.bf16.mxu0 %v445
    %505 = vmatpush1.bf16.msra.mxu0 %v444
    %506 = vmatprep.subr.bf16.mxu0 %v449
    %507 = vmatpush1.bf16.msra.mxu0 %v448
    %508 = vmatprep.subr.bf16.mxu0 %v453
    %509 = vmatpush1.bf16.msra.mxu0 %v452
    %510 = vmatprep.subr.bf16.mxu0 %v457
    %511 = vmatpush1.bf16.msra.mxu0 %v456
    %512 = vmatprep.subr.bf16.mxu0 %v461
    %513 = vmatpush1.bf16.msra.mxu0 %v460
    %514 = vmatprep.subr.bf16.mxu0 %v465
    %515 = vmatpush1.bf16.msra.mxu0 %v464
    %516 = vmatprep.subr.bf16.mxu0 0
    %517 = vmatpush1.bf16.msra.mxu0 0
    %518 = vmatprep.subr.bf16.mxu0 0
    %519 = vmatpush1.bf16.msra.mxu0 0
    %520 = vmatprep.subr.bf16.mxu0 0
    %521 = vmatpush1.bf16.msra.mxu0 0
    %522 = vmatprep.subr.bf16.mxu0 0
    %523 = vmatpush1.bf16.msra.mxu0 0
    %524 = vmatprep.subr.bf16.mxu0 0
    %525 = vmatpush1.bf16.msra.mxu0 0
    %526 = vmatprep.subr.bf16.mxu0 0
    %527 = vmatpush1.bf16.msra.mxu0 0
    %528 = vmatprep.subr.bf16.mxu0 0
    %529 = vmatpush1.bf16.msra.mxu0 0
    %530 = vmatprep.subr.bf16.mxu0 0
    %531 = vmatpush1.bf16.msra.mxu0 0
    %532 = vmatprep.mubr.bf16.mxu0 0
    %533 = vmatmul.mubr.bf16.gmra.mrb[0].mxu0 %v339
    %v534 = vpop.f32.mrb[0].mxu0
    %v535 = vadd.f32 0.0, %v534
    %v536 = vpop.f32.mrb[0].mxu0
    %v537 = vadd.f32 0.0, %v536
    %v538 = vpop.f32.mrb[0].mxu0
    %v539 = vpop.f32.mrb[0].mxu0
    %540 = vdwg.mxu0
    %541 = vmatprep.subr.bf16.mxu0 %v439
    %542 = vmatpush1.bf16.msra.mxu0 %v438
    %543 = vmatprep.subr.bf16.mxu0 %v443
    %544 = vmatpush1.bf16.msra.mxu0 %v442
    %545 = vmatprep.subr.bf16.mxu0 %v447
    %546 = vmatpush1.bf16.msra.mxu0 %v446
    %547 = vmatprep.subr.bf16.mxu0 %v451
    %548 = vmatpush1.bf16.msra.mxu0 %v450
    %549 = vmatprep.subr.bf16.mxu0 %v455
    %550 = vmatpush1.bf16.msra.mxu0 %v454
    %551 = vmatprep.subr.bf16.mxu0 %v459
    %552 = vmatpush1.bf16.msra.mxu0 %v458
    %553 = vmatprep.subr.bf16.mxu0 %v463
    %554 = vmatpush1.bf16.msra.mxu0 %v462
    %555 = vmatprep.subr.bf16.mxu0 %v467
    %556 = vmatpush1.bf16.msra.mxu0 %v466
    %557 = vmatprep.subr.bf16.mxu0 0
    %558 = vmatpush1.bf16.msra.mxu0 0
    %559 = vmatprep.subr.bf16.mxu0 0
    %560 = vmatpush1.bf16.msra.mxu0 0
    %561 = vmatprep.subr.bf16.mxu0 0
    %562 = vmatpush1.bf16.msra.mxu0 0
    %563 = vmatprep.subr.bf16.mxu0 0
    %564 = vmatpush1.bf16.msra.mxu0 0
    %565 = vmatprep.subr.bf16.mxu0 0
    %566 = vmatpush1.bf16.msra.mxu0 0
    %567 = vmatprep.subr.bf16.mxu0 0
    %568 = vmatpush1.bf16.msra.mxu0 0
    %569 = vmatprep.subr.bf16.mxu0 0
    %570 = vmatpush1.bf16.msra.mxu0 0
    %571 = vmatprep.subr.bf16.mxu0 0
    %572 = vmatpush1.bf16.msra.mxu0 0
    %573 = vmatprep.mubr.bf16.mxu0 0
    %574 = vmatmul.mubr.bf16.gmra.mrb[0].mxu0 %v339
    %v575 = vpop.f32.mrb[0].mxu0
    %v576 = vadd.f32 0.0, %v575
    %v577 = vpop.f32.mrb[0].mxu0
    %v578 = vadd.f32 0.0, %v577
    %v579 = vpop.f32.mrb[0].mxu0
    %v580 = vpop.f32.mrb[0].mxu0
    %581 = vdwg.mxu0
    %v614 = vunpack.c.l.b16 %v162
    %v615 = vunpack.c.h.b16 %v162
    %v616 = vunpack.c.l.b16 %v163
    %v617 = vunpack.c.h.b16 %v163
    %v618 = vunpack.c.l.b16 %v164
    %v619 = vunpack.c.h.b16 %v164
    %v620 = vunpack.c.l.b16 %v165
    %v621 = vunpack.c.h.b16 %v165
    %v622 = vunpack.c.l.b16 %v166
    %v623 = vunpack.c.h.b16 %v166
    %v624 = vunpack.c.l.b16 %v167
    %v625 = vunpack.c.h.b16 %v167
    %v626 = vunpack.c.l.b16 %v168
    %v627 = vunpack.c.h.b16 %v168
    %v628 = vunpack.c.l.b16 %v169
    %v629 = vunpack.c.h.b16 %v169
    %v630 = vunpack.c.l.b16 %v170
    %v631 = vunpack.c.h.b16 %v170
    %v632 = vunpack.c.l.b16 %v171
    %v633 = vunpack.c.h.b16 %v171
    %v634 = vunpack.c.l.b16 %v172
    %v635 = vunpack.c.h.b16 %v172
    %v636 = vunpack.c.l.b16 %v173
    %v637 = vunpack.c.h.b16 %v173
    %v638 = vunpack.c.l.b16 %v174
    %v639 = vunpack.c.h.b16 %v174
    %v640 = vunpack.c.l.b16 %v175
    %v641 = vunpack.c.h.b16 %v175
    %v642 = vunpack.c.l.b16 %v176
    %v643 = vunpack.c.h.b16 %v176
    %v644 = vunpack.c.l.b16 %v177
    %v645 = vunpack.c.h.b16 %v177
    %v646 = vunpack.c.l.b16 %v178
    %v647 = vunpack.c.h.b16 %v178
    %v648 = vunpack.c.l.b16 %v179
    %v649 = vunpack.c.h.b16 %v179
    %v650 = vunpack.c.l.b16 %v180
    %v651 = vunpack.c.h.b16 %v180
    %v652 = vunpack.c.l.b16 %v181
    %v653 = vunpack.c.h.b16 %v181
    %v654 = vunpack.c.l.b16 %v182
    %v655 = vunpack.c.h.b16 %v182
    %v656 = vunpack.c.l.b16 %v183
    %v657 = vunpack.c.h.b16 %v183
    %v658 = vunpack.c.l.b16 %v184
    %v659 = vunpack.c.h.b16 %v184
    %v660 = vunpack.c.l.b16 %v185
    %v661 = vunpack.c.h.b16 %v185
    %v662 = vunpack.c.l.b16 %v186
    %v663 = vunpack.c.h.b16 %v186
    %v664 = vunpack.c.l.b16 %v187
    %v665 = vunpack.c.h.b16 %v187
    %v666 = vunpack.c.l.b16 %v188
    %v667 = vunpack.c.h.b16 %v188
    %v668 = vunpack.c.l.b16 %v189
    %v669 = vunpack.c.h.b16 %v189
    %v670 = vunpack.c.l.b16 %v190
    %v671 = vunpack.c.h.b16 %v190
    %v672 = vunpack.c.l.b16 %v191
    %v673 = vunpack.c.h.b16 %v191
    %v674 = vunpack.c.l.b16 %v192
    %v675 = vunpack.c.h.b16 %v192
    %v676 = vunpack.c.l.b16 %v193
    %v677 = vunpack.c.h.b16 %v193
    %v678 = vpack.c.b16 %v618, %v614
    %v679 = vpack.c.b16 %v619, %v615
    %v680 = vpack.c.b16 %v620, %v616
    %v681 = vpack.c.b16 %v621, %v617
    %v682 = vpack.c.b16 %v626, %v622
    %v683 = vpack.c.b16 %v627, %v623
    %v684 = vpack.c.b16 %v628, %v624
    %v685 = vpack.c.b16 %v629, %v625
    %v686 = vpack.c.b16 %v634, %v630
    %v687 = vpack.c.b16 %v635, %v631
    %v688 = vpack.c.b16 %v636, %v632
    %v689 = vpack.c.b16 %v637, %v633
    %v690 = vpack.c.b16 %v642, %v638
    %v691 = vpack.c.b16 %v643, %v639
    %v692 = vpack.c.b16 %v644, %v640
    %v693 = vpack.c.b16 %v645, %v641
    %v694 = vpack.c.b16 %v650, %v646
    %v695 = vpack.c.b16 %v651, %v647
    %v696 = vpack.c.b16 %v652, %v648
    %v697 = vpack.c.b16 %v653, %v649
    %v698 = vpack.c.b16 %v658, %v654
    %v699 = vpack.c.b16 %v659, %v655
    %v700 = vpack.c.b16 %v660, %v656
    %v701 = vpack.c.b16 %v661, %v657
    %v702 = vpack.c.b16 %v666, %v662
    %v703 = vpack.c.b16 %v667, %v663
    %v704 = vpack.c.b16 %v668, %v664
    %v705 = vpack.c.b16 %v669, %v665
    %v706 = vpack.c.b16 %v674, %v670
    %v707 = vpack.c.b16 %v675, %v671
    %v708 = vpack.c.b16 %v676, %v672
    %v709 = vpack.c.b16 %v677, %v673
    %742 = vmatprep.subr.bf16.mxu0 %v679
    %743 = vmatpush1.bf16.msra.mxu0 %v678
    %744 = vmatprep.subr.bf16.mxu0 %v683
    %745 = vmatpush1.bf16.msra.mxu0 %v682
    %746 = vmatprep.subr.bf16.mxu0 %v687
    %747 = vmatpush1.bf16.msra.mxu0 %v686
    %748 = vmatprep.subr.bf16.mxu0 %v691
    %749 = vmatpush1.bf16.msra.mxu0 %v690
    %750 = vmatprep.subr.bf16.mxu0 %v695
    %751 = vmatpush1.bf16.msra.mxu0 %v694
    %752 = vmatprep.subr.bf16.mxu0 %v699
    %753 = vmatpush1.bf16.msra.mxu0 %v698
    %754 = vmatprep.subr.bf16.mxu0 %v703
    %755 = vmatpush1.bf16.msra.mxu0 %v702
    %756 = vmatprep.subr.bf16.mxu0 %v707
    %757 = vmatpush1.bf16.msra.mxu0 %v706
    %758 = vmatprep.subr.bf16.mxu0 0
    %759 = vmatpush1.bf16.msra.mxu0 0
    %760 = vmatprep.subr.bf16.mxu0 0
    %761 = vmatpush1.bf16.msra.mxu0 0
    %762 = vmatprep.subr.bf16.mxu0 0
    %763 = vmatpush1.bf16.msra.mxu0 0
    %764 = vmatprep.subr.bf16.mxu0 0
    %765 = vmatpush1.bf16.msra.mxu0 0
    %766 = vmatprep.subr.bf16.mxu0 0
    %767 = vmatpush1.bf16.msra.mxu0 0
    %768 = vmatprep.subr.bf16.mxu0 0
    %769 = vmatpush1.bf16.msra.mxu0 0
    %770 = vmatprep.subr.bf16.mxu0 0
    %771 = vmatpush1.bf16.msra.mxu0 0
    %772 = vmatprep.subr.bf16.mxu0 0
    %773 = vmatpush1.bf16.msra.mxu0 0
    %774 = vmatprep.mubr.bf16.mxu0 0
    %775 = vmatmul.mubr.bf16.gmra.mrb[0].mxu0 %v338
    %v776 = vpop.f32.mrb[0].mxu0
    %v777 = vadd.f32 %v535, %v776
    %v778 = vpop.f32.mrb[0].mxu0
    %v779 = vadd.f32 %v537, %v778
    %v780 = vpop.f32.mrb[0].mxu0
    %v781 = vpop.f32.mrb[0].mxu0
    %782 = vdwg.mxu0
    %783 = vmatprep.subr.bf16.mxu0 %v681
    %784 = vmatpush1.bf16.msra.mxu0 %v680
    %785 = vmatprep.subr.bf16.mxu0 %v685
    %786 = vmatpush1.bf16.msra.mxu0 %v684
    %787 = vmatprep.subr.bf16.mxu0 %v689
    %788 = vmatpush1.bf16.msra.mxu0 %v688
    %789 = vmatprep.subr.bf16.mxu0 %v693
    %790 = vmatpush1.bf16.msra.mxu0 %v692
    %791 = vmatprep.subr.bf16.mxu0 %v697
    %792 = vmatpush1.bf16.msra.mxu0 %v696
    %793 = vmatprep.subr.bf16.mxu0 %v701
    %794 = vmatpush1.bf16.msra.mxu0 %v700
    %795 = vmatprep.subr.bf16.mxu0 %v705
    %796 = vmatpush1.bf16.msra.mxu0 %v704
    %797 = vmatprep.subr.bf16.mxu0 %v709
    %798 = vmatpush1.bf16.msra.mxu0 %v708
    %799 = vmatprep.subr.bf16.mxu0 0
    %800 = vmatpush1.bf16.msra.mxu0 0
    %801 = vmatprep.subr.bf16.mxu0 0
    %802 = vmatpush1.bf16.msra.mxu0 0
    %803 = vmatprep.subr.bf16.mxu0 0
    %804 = vmatpush1.bf16.msra.mxu0 0
    %805 = vmatprep.subr.bf16.mxu0 0
    %806 = vmatpush1.bf16.msra.mxu0 0
    %807 = vmatprep.subr.bf16.mxu0 0
    %808 = vmatpush1.bf16.msra.mxu0 0
    %809 = vmatprep.subr.bf16.mxu0 0
    %810 = vmatpush1.bf16.msra.mxu0 0
    %811 = vmatprep.subr.bf16.mxu0 0
    %812 = vmatpush1.bf16.msra.mxu0 0
    %813 = vmatprep.subr.bf16.mxu0 0
    %814 = vmatpush1.bf16.msra.mxu0 0
    %815 = vmatprep.mubr.bf16.mxu0 0
    %816 = vmatmul.mubr.bf16.gmra.mrb[0].mxu0 %v338
    %v817 = vpop.f32.mrb[0].mxu0
    %v818 = vadd.f32 %v576, %v817
    %v819 = vpop.f32.mrb[0].mxu0
    %v820 = vadd.f32 %v578, %v819
    %v821 = vpop.f32.mrb[0].mxu0
    %v822 = vpop.f32.mrb[0].mxu0
    %823 = vdwg.mxu0
    %v824 = vadd.f32 %v777, %v295
    %v825 = vadd.f32 %v779, %v299
    %v826 = vadd.f32 %v818, %v303
    %v827 = vadd.f32 %v820, %v307
    %v828 = vxor.u32 %v824, 2147483648
    %v829 = vxor.u32 %v825, 2147483648
    %v830 = vxor.u32 %v826, 2147483648
    %v831 = vmul.f32 %v828, 1.442695
    %v832 = vpow.pop %v831
    %v833 = vmul.f32 %v829, 1.442695
    %v834 = vpow.pop %v833
    %v835 = vmul.f32 %v830, 1.442695
    %v836 = vpow.pop %v835
    %v837 = vadd.f32 %v832, 1.0
    %v838 = vadd.f32 %v834, 1.0
    %v839 = vadd.f32 %v836, 1.0
    %v840 = vrcp.pop %v837
    %v841 = vmul.f32 1.0, %v840
    %v842 = vrcp.pop %v838
    %v843 = vmul.f32 1.0, %v842
    %v844 = vrcp.pop %v839
    %v845 = vmul.f32 1.0, %v844
    %v846 = vtanh.pop %v827
    %v847 = vmul.f32 %v843, %v335
    %v848 = vmul.f32 %v841, %v846
    %v849 = vadd.f32 %v847, %v848
    %v850 = vtanh.pop %v849
    %v851 = vmul.f32 %v845, %v850
    %v852 = vpack.c.bf16 %v851, %v851
    %v853 = vpack.c.bf16 %v336, %v336
    %v886 = vunpack.c.l.b16 %v258
    %v887 = vunpack.c.h.b16 %v258
    %v888 = vunpack.c.l.b16 %v259
    %v889 = vunpack.c.h.b16 %v259
    %v890 = vunpack.c.l.b16 %v260
    %v891 = vunpack.c.h.b16 %v260
    %v892 = vunpack.c.l.b16 %v261
    %v893 = vunpack.c.h.b16 %v261
    %v894 = vunpack.c.l.b16 %v262
    %v895 = vunpack.c.h.b16 %v262
    %v896 = vunpack.c.l.b16 %v263
    %v897 = vunpack.c.h.b16 %v263
    %v898 = vunpack.c.l.b16 %v264
    %v899 = vunpack.c.h.b16 %v264
    %v900 = vunpack.c.l.b16 %v265
    %v901 = vunpack.c.h.b16 %v265
    %v902 = vunpack.c.l.b16 %v266
    %v903 = vunpack.c.h.b16 %v266
    %v904 = vunpack.c.l.b16 %v267
    %v905 = vunpack.c.h.b16 %v267
    %v906 = vunpack.c.l.b16 %v268
    %v907 = vunpack.c.h.b16 %v268
    %v908 = vunpack.c.l.b16 %v269
    %v909 = vunpack.c.h.b16 %v269
    %v910 = vunpack.c.l.b16 %v270
    %v911 = vunpack.c.h.b16 %v270
    %v912 = vunpack.c.l.b16 %v271
    %v913 = vunpack.c.h.b16 %v271
    %v914 = vunpack.c.l.b16 %v272
    %v915 = vunpack.c.h.b16 %v272
    %v916 = vunpack.c.l.b16 %v273
    %v917 = vunpack.c.h.b16 %v273
    %v918 = vunpack.c.l.b16 %v274
    %v919 = vunpack.c.h.b16 %v274
    %v920 = vunpack.c.l.b16 %v275
    %v921 = vunpack.c.h.b16 %v275
    %v922 = vunpack.c.l.b16 %v276
    %v923 = vunpack.c.h.b16 %v276
    %v924 = vunpack.c.l.b16 %v277
    %v925 = vunpack.c.h.b16 %v277
    %v926 = vunpack.c.l.b16 %v278
    %v927 = vunpack.c.h.b16 %v278
    %v928 = vunpack.c.l.b16 %v279
    %v929 = vunpack.c.h.b16 %v279
    %v930 = vunpack.c.l.b16 %v280
    %v931 = vunpack.c.h.b16 %v280
    %v932 = vunpack.c.l.b16 %v281
    %v933 = vunpack.c.h.b16 %v281
    %v934 = vunpack.c.l.b16 %v282
    %v935 = vunpack.c.h.b16 %v282
    %v936 = vunpack.c.l.b16 %v283
    %v937 = vunpack.c.h.b16 %v283
    %v938 = vunpack.c.l.b16 %v284
    %v939 = vunpack.c.h.b16 %v284
    %v940 = vunpack.c.l.b16 %v285
    %v941 = vunpack.c.h.b16 %v285
    %v942 = vunpack.c.l.b16 %v286
    %v943 = vunpack.c.h.b16 %v286
    %v944 = vunpack.c.l.b16 %v287
    %v945 = vunpack.c.h.b16 %v287
    %v946 = vunpack.c.l.b16 %v288
    %v947 = vunpack.c.h.b16 %v288
    %v948 = vunpack.c.l.b16 %v289
    %v949 = vunpack.c.h.b16 %v289
    %v950 = vpack.c.b16 %v890, %v886
    %v951 = vpack.c.b16 %v891, %v887
    %v952 = vpack.c.b16 %v892, %v888
    %v953 = vpack.c.b16 %v893, %v889
    %v954 = vpack.c.b16 %v898, %v894
    %v955 = vpack.c.b16 %v899, %v895
    %v956 = vpack.c.b16 %v900, %v896
    %v957 = vpack.c.b16 %v901, %v897
    %v958 = vpack.c.b16 %v906, %v902
    %v959 = vpack.c.b16 %v907, %v903
    %v960 = vpack.c.b16 %v908, %v904
    %v961 = vpack.c.b16 %v909, %v905
    %v962 = vpack.c.b16 %v914, %v910
    %v963 = vpack.c.b16 %v915, %v911
    %v964 = vpack.c.b16 %v916, %v912
    %v965 = vpack.c.b16 %v917, %v913
    %v966 = vpack.c.b16 %v922, %v918
    %v967 = vpack.c.b16 %v923, %v919
    %v968 = vpack.c.b16 %v924, %v920
    %v969 = vpack.c.b16 %v925, %v921
    %v970 = vpack.c.b16 %v930, %v926
    %v971 = vpack.c.b16 %v931, %v927
    %v972 = vpack.c.b16 %v932, %v928
    %v973 = vpack.c.b16 %v933, %v929
    %v974 = vpack.c.b16 %v938, %v934
    %v975 = vpack.c.b16 %v939, %v935
    %v976 = vpack.c.b16 %v940, %v936
    %v977 = vpack.c.b16 %v941, %v937
    %v978 = vpack.c.b16 %v946, %v942
    %v979 = vpack.c.b16 %v947, %v943
    %v980 = vpack.c.b16 %v948, %v944
    %v981 = vpack.c.b16 %v949, %v945
    %1014 = vmatprep.subr.bf16.mxu0 %v951
    %1015 = vmatpush1.bf16.msra.mxu0 %v950
    %1016 = vmatprep.subr.bf16.mxu0 %v955
    %1017 = vmatpush1.bf16.msra.mxu0 %v954
    %1018 = vmatprep.subr.bf16.mxu0 %v959
    %1019 = vmatpush1.bf16.msra.mxu0 %v958
    %1020 = vmatprep.subr.bf16.mxu0 %v963
    %1021 = vmatpush1.bf16.msra.mxu0 %v962
    %1022 = vmatprep.subr.bf16.mxu0 %v967
    %1023 = vmatpush1.bf16.msra.mxu0 %v966
    %1024 = vmatprep.subr.bf16.mxu0 %v971
    %1025 = vmatpush1.bf16.msra.mxu0 %v970
    %1026 = vmatprep.subr.bf16.mxu0 %v975
    %1027 = vmatpush1.bf16.msra.mxu0 %v974
    %1028 = vmatprep.subr.bf16.mxu0 %v979
    %1029 = vmatpush1.bf16.msra.mxu0 %v978
    %1030 = vmatprep.subr.bf16.mxu0 0
    %1031 = vmatpush1.bf16.msra.mxu0 0
    %1032 = vmatprep.subr.bf16.mxu0 0
    %1033 = vmatpush1.bf16.msra.mxu0 0
    %1034 = vmatprep.subr.bf16.mxu0 0
    %1035 = vmatpush1.bf16.msra.mxu0 0
    %1036 = vmatprep.subr.bf16.mxu0 0
    %1037 = vmatpush1.bf16.msra.mxu0 0
    %1038 = vmatprep.subr.bf16.mxu0 0
    %1039 = vmatpush1.bf16.msra.mxu0 0
    %1040 = vmatprep.subr.bf16.mxu0 0
    %1041 = vmatpush1.bf16.msra.mxu0 0
    %1042 = vmatprep.subr.bf16.mxu0 0
    %1043 = vmatpush1.bf16.msra.mxu0 0
    %1044 = vmatprep.subr.bf16.mxu0 0
    %1045 = vmatpush1.bf16.msra.mxu0 0
    %1046 = vmatprep.mubr.bf16.mxu0 0
    %1047 = vmatmul.mubr.bf16.gmra.mrb[0].mxu0 %v853
    %v1048 = vpop.f32.mrb[0].mxu0
    %v1049 = vadd.f32 0.0, %v1048
    %v1050 = vpop.f32.mrb[0].mxu0
    %v1051 = vadd.f32 0.0, %v1050
    %v1052 = vpop.f32.mrb[0].mxu0
    %v1053 = vpop.f32.mrb[0].mxu0
    %1054 = vdwg.mxu0
    %1055 = vmatprep.subr.bf16.mxu0 %v953
    %1056 = vmatpush1.bf16.msra.mxu0 %v952
    %1057 = vmatprep.subr.bf16.mxu0 %v957
    %1058 = vmatpush1.bf16.msra.mxu0 %v956
    %1059 = vmatprep.subr.bf16.mxu0 %v961
    %1060 = vmatpush1.bf16.msra.mxu0 %v960
    %1061 = vmatprep.subr.bf16.mxu0 %v965
    %1062 = vmatpush1.bf16.msra.mxu0 %v964
    %1063 = vmatprep.subr.bf16.mxu0 %v969
    %1064 = vmatpush1.bf16.msra.mxu0 %v968
    %1065 = vmatprep.subr.bf16.mxu0 %v973
    %1066 = vmatpush1.bf16.msra.mxu0 %v972
    %1067 = vmatprep.subr.bf16.mxu0 %v977
    %1068 = vmatpush1.bf16.msra.mxu0 %v976
    %1069 = vmatprep.subr.bf16.mxu0 %v981
    %1070 = vmatpush1.bf16.msra.mxu0 %v980
    %1071 = vmatprep.subr.bf16.mxu0 0
    %1072 = vmatpush1.bf16.msra.mxu0 0
    %1073 = vmatprep.subr.bf16.mxu0 0
    %1074 = vmatpush1.bf16.msra.mxu0 0
    %1075 = vmatprep.subr.bf16.mxu0 0
    %1076 = vmatpush1.bf16.msra.mxu0 0
    %1077 = vmatprep.subr.bf16.mxu0 0
    %1078 = vmatpush1.bf16.msra.mxu0 0
    %1079 = vmatprep.subr.bf16.mxu0 0
    %1080 = vmatpush1.bf16.msra.mxu0 0
    %1081 = vmatprep.subr.bf16.mxu0 0
    %1082 = vmatpush1.bf16.msra.mxu0 0
    %1083 = vmatprep.subr.bf16.mxu0 0
    %1084 = vmatpush1.bf16.msra.mxu0 0
    %1085 = vmatprep.subr.bf16.mxu0 0
    %1086 = vmatpush1.bf16.msra.mxu0 0
    %1087 = vmatprep.mubr.bf16.mxu0 0
    %1088 = vmatmul.mubr.bf16.gmra.mrb[0].mxu0 %v853
    %v1089 = vpop.f32.mrb[0].mxu0
    %v1090 = vadd.f32 0.0, %v1089
    %v1091 = vpop.f32.mrb[0].mxu0
    %v1092 = vadd.f32 0.0, %v1091
    %v1093 = vpop.f32.mrb[0].mxu0
    %v1094 = vpop.f32.mrb[0].mxu0
    %1095 = vdwg.mxu0
    %v1128 = vunpack.c.l.b16 %v226
    %v1129 = vunpack.c.h.b16 %v226
    %v1130 = vunpack.c.l.b16 %v227
    %v1131 = vunpack.c.h.b16 %v227
    %v1132 = vunpack.c.l.b16 %v228
    %v1133 = vunpack.c.h.b16 %v228
    %v1134 = vunpack.c.l.b16 %v229
    %v1135 = vunpack.c.h.b16 %v229
    %v1136 = vunpack.c.l.b16 %v230
    %v1137 = vunpack.c.h.b16 %v230
    %v1138 = vunpack.c.l.b16 %v231
    %v1139 = vunpack.c.h.b16 %v231
    %v1140 = vunpack.c.l.b16 %v232
    %v1141 = vunpack.c.h.b16 %v232
    %v1142 = vunpack.c.l.b16 %v233
    %v1143 = vunpack.c.h.b16 %v233
    %v1144 = vunpack.c.l.b16 %v234
    %v1145 = vunpack.c.h.b16 %v234
    %v1146 = vunpack.c.l.b16 %v235
    %v1147 = vunpack.c.h.b16 %v235
    %v1148 = vunpack.c.l.b16 %v236
    %v1149 = vunpack.c.h.b16 %v236
    %v1150 = vunpack.c.l.b16 %v237
    %v1151 = vunpack.c.h.b16 %v237
    %v1152 = vunpack.c.l.b16 %v238
    %v1153 = vunpack.c.h.b16 %v238
    %v1154 = vunpack.c.l.b16 %v239
    %v1155 = vunpack.c.h.b16 %v239
    %v1156 = vunpack.c.l.b16 %v240
    %v1157 = vunpack.c.h.b16 %v240
    %v1158 = vunpack.c.l.b16 %v241
    %v1159 = vunpack.c.h.b16 %v241
    %v1160 = vunpack.c.l.b16 %v242
    %v1161 = vunpack.c.h.b16 %v242
    %v1162 = vunpack.c.l.b16 %v243
    %v1163 = vunpack.c.h.b16 %v243
    %v1164 = vunpack.c.l.b16 %v244
    %v1165 = vunpack.c.h.b16 %v244
    %v1166 = vunpack.c.l.b16 %v245
    %v1167 = vunpack.c.h.b16 %v245
    %v1168 = vunpack.c.l.b16 %v246
    %v1169 = vunpack.c.h.b16 %v246
    %v1170 = vunpack.c.l.b16 %v247
    %v1171 = vunpack.c.h.b16 %v247
    %v1172 = vunpack.c.l.b16 %v248
    %v1173 = vunpack.c.h.b16 %v248
    %v1174 = vunpack.c.l.b16 %v249
    %v1175 = vunpack.c.h.b16 %v249
    %v1176 = vunpack.c.l.b16 %v250
    %v1177 = vunpack.c.h.b16 %v250
    %v1178 = vunpack.c.l.b16 %v251
    %v1179 = vunpack.c.h.b16 %v251
    %v1180 = vunpack.c.l.b16 %v252
    %v1181 = vunpack.c.h.b16 %v252
    %v1182 = vunpack.c.l.b16 %v253
    %v1183 = vunpack.c.h.b16 %v253
    %v1184 = vunpack.c.l.b16 %v254
    %v1185 = vunpack.c.h.b16 %v254
    %v1186 = vunpack.c.l.b16 %v255
    %v1187 = vunpack.c.h.b16 %v255
    %v1188 = vunpack.c.l.b16 %v256
    %v1189 = vunpack.c.h.b16 %v256
    %v1190 = vunpack.c.l.b16 %v257
    %v1191 = vunpack.c.h.b16 %v257
    %v1192 = vpack.c.b16 %v1132, %v1128
    %v1193 = vpack.c.b16 %v1133, %v1129
    %v1194 = vpack.c.b16 %v1134, %v1130
    %v1195 = vpack.c.b16 %v1135, %v1131
    %v1196 = vpack.c.b16 %v1140, %v1136
    %v1197 = vpack.c.b16 %v1141, %v1137
    %v1198 = vpack.c.b16 %v1142, %v1138
    %v1199 = vpack.c.b16 %v1143, %v1139
    %v1200 = vpack.c.b16 %v1148, %v1144
    %v1201 = vpack.c.b16 %v1149, %v1145
    %v1202 = vpack.c.b16 %v1150, %v1146
    %v1203 = vpack.c.b16 %v1151, %v1147
    %v1204 = vpack.c.b16 %v1156, %v1152
    %v1205 = vpack.c.b16 %v1157, %v1153
    %v1206 = vpack.c.b16 %v1158, %v1154
    %v1207 = vpack.c.b16 %v1159, %v1155
    %v1208 = vpack.c.b16 %v1164, %v1160
    %v1209 = vpack.c.b16 %v1165, %v1161
    %v1210 = vpack.c.b16 %v1166, %v1162
    %v1211 = vpack.c.b16 %v1167, %v1163
    %v1212 = vpack.c.b16 %v1172, %v1168
    %v1213 = vpack.c.b16 %v1173, %v1169
    %v1214 = vpack.c.b16 %v1174, %v1170
    %v1215 = vpack.c.b16 %v1175, %v1171
    %v1216 = vpack.c.b16 %v1180, %v1176
    %v1217 = vpack.c.b16 %v1181, %v1177
    %v1218 = vpack.c.b16 %v1182, %v1178
    %v1219 = vpack.c.b16 %v1183, %v1179
    %v1220 = vpack.c.b16 %v1188, %v1184
    %v1221 = vpack.c.b16 %v1189, %v1185
    %v1222 = vpack.c.b16 %v1190, %v1186
    %v1223 = vpack.c.b16 %v1191, %v1187
    %1256 = vmatprep.subr.bf16.mxu0 %v1193
    %1257 = vmatpush1.bf16.msra.mxu0 %v1192
    %1258 = vmatprep.subr.bf16.mxu0 %v1197
    %1259 = vmatpush1.bf16.msra.mxu0 %v1196
    %1260 = vmatprep.subr.bf16.mxu0 %v1201
    %1261 = vmatpush1.bf16.msra.mxu0 %v1200
    %1262 = vmatprep.subr.bf16.mxu0 %v1205
    %1263 = vmatpush1.bf16.msra.mxu0 %v1204
    %1264 = vmatprep.subr.bf16.mxu0 %v1209
    %1265 = vmatpush1.bf16.msra.mxu0 %v1208
    %1266 = vmatprep.subr.bf16.mxu0 %v1213
    %1267 = vmatpush1.bf16.msra.mxu0 %v1212
    %1268 = vmatprep.subr.bf16.mxu0 %v1217
    %1269 = vmatpush1.bf16.msra.mxu0 %v1216
    %1270 = vmatprep.subr.bf16.mxu0 %v1221
    %1271 = vmatpush1.bf16.msra.mxu0 %v1220
    %1272 = vmatprep.subr.bf16.mxu0 0
    %1273 = vmatpush1.bf16.msra.mxu0 0
    %1274 = vmatprep.subr.bf16.mxu0 0
    %1275 = vmatpush1.bf16.msra.mxu0 0
    %1276 = vmatprep.subr.bf16.mxu0 0
    %1277 = vmatpush1.bf16.msra.mxu0 0
    %1278 = vmatprep.subr.bf16.mxu0 0
    %1279 = vmatpush1.bf16.msra.mxu0 0
    %1280 = vmatprep.subr.bf16.mxu0 0
    %1281 = vmatpush1.bf16.msra.mxu0 0
    %1282 = vmatprep.subr.bf16.mxu0 0
    %1283 = vmatpush1.bf16.msra.mxu0 0
    %1284 = vmatprep.subr.bf16.mxu0 0
    %1285 = vmatpush1.bf16.msra.mxu0 0
    %1286 = vmatprep.subr.bf16.mxu0 0
    %1287 = vmatpush1.bf16.msra.mxu0 0
    %1288 = vmatprep.mubr.bf16.mxu0 0
    %1289 = vmatmul.mubr.bf16.gmra.mrb[0].mxu0 %v852
    %v1290 = vpop.f32.mrb[0].mxu0
    %v1291 = vadd.f32 %v1049, %v1290
    %v1292 = vpop.f32.mrb[0].mxu0
    %v1293 = vadd.f32 %v1051, %v1292
    %v1294 = vpop.f32.mrb[0].mxu0
    %v1295 = vpop.f32.mrb[0].mxu0
    %1296 = vdwg.mxu0
    %1297 = vmatprep.subr.bf16.mxu0 %v1195
    %1298 = vmatpush1.bf16.msra.mxu0 %v1194
    %1299 = vmatprep.subr.bf16.mxu0 %v1199
    %1300 = vmatpush1.bf16.msra.mxu0 %v1198
    %1301 = vmatprep.subr.bf16.mxu0 %v1203
    %1302 = vmatpush1.bf16.msra.mxu0 %v1202
    %1303 = vmatprep.subr.bf16.mxu0 %v1207
    %1304 = vmatpush1.bf16.msra.mxu0 %v1206
    %1305 = vmatprep.subr.bf16.mxu0 %v1211
    %1306 = vmatpush1.bf16.msra.mxu0 %v1210
    %1307 = vmatprep.subr.bf16.mxu0 %v1215
    %1308 = vmatpush1.bf16.msra.mxu0 %v1214
    %1309 = vmatprep.subr.bf16.mxu0 %v1219
    %1310 = vmatpush1.bf16.msra.mxu0 %v1218
    %1311 = vmatprep.subr.bf16.mxu0 %v1223
    %1312 = vmatpush1.bf16.msra.mxu0 %v1222
    %1313 = vmatprep.subr.bf16.mxu0 0
    %1314 = vmatpush1.bf16.msra.mxu0 0
    %1315 = vmatprep.subr.bf16.mxu0 0
    %1316 = vmatpush1.bf16.msra.mxu0 0
    %1317 = vmatprep.subr.bf16.mxu0 0
    %1318 = vmatpush1.bf16.msra.mxu0 0
    %1319 = vmatprep.subr.bf16.mxu0 0
    %1320 = vmatpush1.bf16.msra.mxu0 0
    %1321 = vmatprep.subr.bf16.mxu0 0
    %1322 = vmatpush1.bf16.msra.mxu0 0
    %1323 = vmatprep.subr.bf16.mxu0 0
    %1324 = vmatpush1.bf16.msra.mxu0 0
    %1325 = vmatprep.subr.bf16.mxu0 0
    %1326 = vmatpush1.bf16.msra.mxu0 0
    %1327 = vmatprep.subr.bf16.mxu0 0
    %1328 = vmatpush1.bf16.msra.mxu0 0
    %1329 = vmatprep.mubr.bf16.mxu0 0
    %1330 = vmatmul.mubr.bf16.gmra.mrb[0].mxu0 %v852
    %v1331 = vpop.f32.mrb[0].mxu0
    %v1332 = vadd.f32 %v1090, %v1331
    %v1333 = vpop.f32.mrb[0].mxu0
    %v1334 = vadd.f32 %v1092, %v1333
    %v1335 = vpop.f32.mrb[0].mxu0
    %v1336 = vpop.f32.mrb[0].mxu0
    %1337 = vdwg.mxu0
    %v1338 = vadd.f32 %v1291, %v317
    %v1339 = vadd.f32 %v1293, %v321
    %v1340 = vadd.f32 %v1332, %v325
    %v1341 = vadd.f32 %v1334, %v329
    %v1342 = vxor.u32 %v1338, 2147483648
    %v1343 = vxor.u32 %v1339, 2147483648
    %v1344 = vxor.u32 %v1340, 2147483648
    %v1345 = vmul.f32 %v1342, 1.442695
    %v1346 = vpow.pop %v1345
    %v1347 = vmul.f32 %v1343, 1.442695
    %v1348 = vpow.pop %v1347
    %v1349 = vmul.f32 %v1344, 1.442695
    %v1350 = vpow.pop %v1349
    %v1351 = vadd.f32 %v1346, 1.0
    %v1352 = vadd.f32 %v1348, 1.0
    %v1353 = vadd.f32 %v1350, 1.0
    %v1354 = vrcp.pop %v1351
    %v1355 = vmul.f32 1.0, %v1354
    %v1356 = vrcp.pop %v1352
    %v1357 = vmul.f32 1.0, %v1356
    %v1358 = vrcp.pop %v1353
    %v1359 = vmul.f32 1.0, %v1358
    %v1360 = vtanh.pop %v1341
    %v1361 = vmul.f32 %v1357, %v337
    %v1362 = vmul.f32 %v1355, %v1360
    %v1363 = vadd.f32 %v1361, %v1362
    %v1364 = vtanh.pop %v1363
    %v1365 = vmul.f32 %v1359, %v1364
    %1366 = vst [vmem:[#allocation6] sm:$0xff] %v1365
    %s1367 = scalar_lea.vmem [#allocation7], 4
    %v1368 = vld [vmem:[%s1367] sm:$0xf]
    %1369 = vmatprep.subr.bf16.mxu0 %v437
    %1370 = vmatpush1.bf16.msra.mxu0 %v436
    %1371 = vmatprep.subr.bf16.mxu0 %v441
    %1372 = vmatpush1.bf16.msra.mxu0 %v440
    %1373 = vmatprep.subr.bf16.mxu0 %v445
    %1374 = vmatpush1.bf16.msra.mxu0 %v444
    %1375 = vmatprep.subr.bf16.mxu0 %v449
    %1376 = vmatpush1.bf16.msra.mxu0 %v448
    %1377 = vmatprep.subr.bf16.mxu0 %v453
    %1378 = vmatpush1.bf16.msra.mxu0 %v452
    %1379 = vmatprep.subr.bf16.mxu0 %v457
    %1380 = vmatpush1.bf16.msra.mxu0 %v456
    %1381 = vmatprep.subr.bf16.mxu0 %v461
    %1382 = vmatpush1.bf16.msra.mxu0 %v460
    %1383 = vmatprep.subr.bf16.mxu0 %v465
    %1384 = vmatpush1.bf16.msra.mxu0 %v464
    %1385 = vmatprep.subr.bf16.mxu0 0
    %1386 = vmatpush1.bf16.msra.mxu0 0
    %1387 = vmatprep.subr.bf16.mxu0 0
    %1388 = vmatpush1.bf16.msra.mxu0 0
    %1389 = vmatprep.subr.bf16.mxu0 0
    %1390 = vmatpush1.bf16.msra.mxu0 0
    %1391 = vmatprep.subr.bf16.mxu0 0
    %1392 = vmatpush1.bf16.msra.mxu0 0
    %1393 = vmatprep.subr.bf16.mxu0 0
    %1394 = vmatpush1.bf16.msra.mxu0 0
    %1395 = vmatprep.subr.bf16.mxu0 0
    %1396 = vmatpush1.bf16.msra.mxu0 0
    %1397 = vmatprep.subr.bf16.mxu0 0
    %1398 = vmatpush1.bf16.msra.mxu0 0
    %1399 = vmatprep.subr.bf16.mxu0 0
    %1400 = vmatpush1.bf16.msra.mxu0 0
    %1401 = vmatprep.mubr.bf16.mxu0 0
    %1402 = vmatmul.mubr.bf16.gmra.mrb[0].mxu0 %v852
    %v1403 = vpop.f32.mrb[0].mxu0
    %v1404 = vadd.f32 0.0, %v1403
    %v1405 = vpop.f32.mrb[0].mxu0
    %v1406 = vadd.f32 0.0, %v1405
    %v1407 = vpop.f32.mrb[0].mxu0
    %v1408 = vpop.f32.mrb[0].mxu0
    %1409 = vdwg.mxu0
    %1410 = vmatprep.subr.bf16.mxu0 %v439
    %1411 = vmatpush1.bf16.msra.mxu0 %v438
    %1412 = vmatprep.subr.bf16.mxu0 %v443
    %1413 = vmatpush1.bf16.msra.mxu0 %v442
    %1414 = vmatprep.subr.bf16.mxu0 %v447
    %1415 = vmatpush1.bf16.msra.mxu0 %v446
    %1416 = vmatprep.subr.bf16.mxu0 %v451
    %1417 = vmatpush1.bf16.msra.mxu0 %v450
    %1418 = vmatprep.subr.bf16.mxu0 %v455
    %1419 = vmatpush1.bf16.msra.mxu0 %v454
    %1420 = vmatprep.subr.bf16.mxu0 %v459
    %1421 = vmatpush1.bf16.msra.mxu0 %v458
    %1422 = vmatprep.subr.bf16.mxu0 %v463
    %1423 = vmatpush1.bf16.msra.mxu0 %v462
    %1424 = vmatprep.subr.bf16.mxu0 %v467
    %1425 = vmatpush1.bf16.msra.mxu0 %v466
    %1426 = vmatprep.subr.bf16.mxu0 0
    %1427 = vmatpush1.bf16.msra.mxu0 0
    %1428 = vmatprep.subr.bf16.mxu0 0
    %1429 = vmatpush1.bf16.msra.mxu0 0
    %1430 = vmatprep.subr.bf16.mxu0 0
    %1431 = vmatpush1.bf16.msra.mxu0 0
    %1432 = vmatprep.subr.bf16.mxu0 0
    %1433 = vmatpush1.bf16.msra.mxu0 0
    %1434 = vmatprep.subr.bf16.mxu0 0
    %1435 = vmatpush1.bf16.msra.mxu0 0
    %1436 = vmatprep.subr.bf16.mxu0 0
    %1437 = vmatpush1.bf16.msra.mxu0 0
    %1438 = vmatprep.subr.bf16.mxu0 0
    %1439 = vmatpush1.bf16.msra.mxu0 0
    %1440 = vmatprep.subr.bf16.mxu0 0
    %1441 = vmatpush1.bf16.msra.mxu0 0
    %1442 = vmatprep.mubr.bf16.mxu0 0
    %1443 = vmatmul.mubr.bf16.gmra.mrb[0].mxu0 %v852
    %v1444 = vpop.f32.mrb[0].mxu0
    %v1445 = vadd.f32 0.0, %v1444
    %v1446 = vpop.f32.mrb[0].mxu0
    %v1447 = vadd.f32 0.0, %v1446
    %v1448 = vpop.f32.mrb[0].mxu0
    %v1449 = vpop.f32.mrb[0].mxu0
    %1450 = vdwg.mxu0
    %1451 = vmatprep.subr.bf16.mxu0 %v679
    %1452 = vmatpush1.bf16.msra.mxu0 %v678
    %1453 = vmatprep.subr.bf16.mxu0 %v683
    %1454 = vmatpush1.bf16.msra.mxu0 %v682
    %1455 = vmatprep.subr.bf16.mxu0 %v687
    %1456 = vmatpush1.bf16.msra.mxu0 %v686
    %1457 = vmatprep.subr.bf16.mxu0 %v691
    %1458 = vmatpush1.bf16.msra.mxu0 %v690
    %1459 = vmatprep.subr.bf16.mxu0 %v695
    %1460 = vmatpush1.bf16.msra.mxu0 %v694
    %1461 = vmatprep.subr.bf16.mxu0 %v699
    %1462 = vmatpush1.bf16.msra.mxu0 %v698
    %1463 = vmatprep.subr.bf16.mxu0 %v703
    %1464 = vmatpush1.bf16.msra.mxu0 %v702
    %1465 = vmatprep.subr.bf16.mxu0 %v707
    %1466 = vmatpush1.bf16.msra.mxu0 %v706
    %1467 = vmatprep.subr.bf16.mxu0 0
    %1468 = vmatpush1.bf16.msra.mxu0 0
    %1469 = vmatprep.subr.bf16.mxu0 0
    %1470 = vmatpush1.bf16.msra.mxu0 0
    %1471 = vmatprep.subr.bf16.mxu0 0
    %1472 = vmatpush1.bf16.msra.mxu0 0
    %1473 = vmatprep.subr.bf16.mxu0 0
    %1474 = vmatpush1.bf16.msra.mxu0 0
    %1475 = vmatprep.subr.bf16.mxu0 0
    %1476 = vmatpush1.bf16.msra.mxu0 0
    %1477 = vmatprep.subr.bf16.mxu0 0
    %1478 = vmatpush1.bf16.msra.mxu0 0
    %1479 = vmatprep.subr.bf16.mxu0 0
    %1480 = vmatpush1.bf16.msra.mxu0 0
    %1481 = vmatprep.subr.bf16.mxu0 0
    %1482 = vmatpush1.bf16.msra.mxu0 0
    %1483 = vmatprep.mubr.bf16.mxu0 0
    %1484 = vmatmul.mubr.bf16.gmra.mrb[0].mxu0 %v1368
    %v1485 = vpop.f32.mrb[0].mxu0
    %v1486 = vadd.f32 %v1404, %v1485
    %v1487 = vpop.f32.mrb[0].mxu0
    %v1488 = vadd.f32 %v1406, %v1487
    %v1489 = vpop.f32.mrb[0].mxu0
    %v1490 = vpop.f32.mrb[0].mxu0
    %1491 = vdwg.mxu0
    %1492 = vmatprep.subr.bf16.mxu0 %v681
    %1493 = vmatpush1.bf16.msra.mxu0 %v680
    %1494 = vmatprep.subr.bf16.mxu0 %v685
    %1495 = vmatpush1.bf16.msra.mxu0 %v684
    %1496 = vmatprep.subr.bf16.mxu0 %v689
    %1497 = vmatpush1.bf16.msra.mxu0 %v688
    %1498 = vmatprep.subr.bf16.mxu0 %v693
    %1499 = vmatpush1.bf16.msra.mxu0 %v692
    %1500 = vmatprep.subr.bf16.mxu0 %v697
    %1501 = vmatpush1.bf16.msra.mxu0 %v696
    %1502 = vmatprep.subr.bf16.mxu0 %v701
    %1503 = vmatpush1.bf16.msra.mxu0 %v700
    %1504 = vmatprep.subr.bf16.mxu0 %v705
    %1505 = vmatpush1.bf16.msra.mxu0 %v704
    %1506 = vmatprep.subr.bf16.mxu0 %v709
    %1507 = vmatpush1.bf16.msra.mxu0 %v708
    %1508 = vmatprep.subr.bf16.mxu0 0
    %1509 = vmatpush1.bf16.msra.mxu0 0
    %1510 = vmatprep.subr.bf16.mxu0 0
    %1511 = vmatpush1.bf16.msra.mxu0 0
    %1512 = vmatprep.subr.bf16.mxu0 0
    %1513 = vmatpush1.bf16.msra.mxu0 0
    %1514 = vmatprep.subr.bf16.mxu0 0
    %1515 = vmatpush1.bf16.msra.mxu0 0
    %1516 = vmatprep.subr.bf16.mxu0 0
    %1517 = vmatpush1.bf16.msra.mxu0 0
    %1518 = vmatprep.subr.bf16.mxu0 0
    %1519 = vmatpush1.bf16.msra.mxu0 0
    %1520 = vmatprep.subr.bf16.mxu0 0
    %1521 = vmatpush1.bf16.msra.mxu0 0
    %1522 = vmatprep.subr.bf16.mxu0 0
    %1523 = vmatpush1.bf16.msra.mxu0 0
    %1524 = vmatprep.mubr.bf16.mxu0 0
    %1525 = vmatmul.mubr.bf16.gmra.mrb[0].mxu0 %v1368
    %v1526 = vpop.f32.mrb[0].mxu0
    %v1527 = vadd.f32 %v1445, %v1526
    %v1528 = vpop.f32.mrb[0].mxu0
    %v1529 = vadd.f32 %v1447, %v1528
    %v1530 = vpop.f32.mrb[0].mxu0
    %v1531 = vpop.f32.mrb[0].mxu0
    %1532 = vdwg.mxu0
    %v1533 = vadd.f32 %v1486, %v295
    %v1534 = vadd.f32 %v1488, %v299
    %v1535 = vadd.f32 %v1527, %v303
    %v1536 = vadd.f32 %v1529, %v307
    %v1537 = vxor.u32 %v1533, 2147483648
    %v1538 = vxor.u32 %v1534, 2147483648
    %v1539 = vxor.u32 %v1535, 2147483648
    %v1540 = vmul.f32 %v1537, 1.442695
    %v1541 = vpow.pop %v1540
    %v1542 = vmul.f32 %v1538, 1.442695
    %v1543 = vpow.pop %v1542
    %v1544 = vmul.f32 %v1539, 1.442695
    %v1545 = vpow.pop %v1544
    %v1546 = vadd.f32 %v1541, 1.0
    %v1547 = vadd.f32 %v1543, 1.0
    %v1548 = vadd.f32 %v1545, 1.0
    %v1549 = vrcp.pop %v1546
    %v1550 = vmul.f32 1.0, %v1549
    %v1551 = vrcp.pop %v1547
    %v1552 = vmul.f32 1.0, %v1551
    %v1553 = vrcp.pop %v1548
    %v1554 = vmul.f32 1.0, %v1553
    %v1555 = vtanh.pop %v1536
    %v1556 = vmul.f32 %v1552, %v849
    %v1557 = vmul.f32 %v1550, %v1555
    %v1558 = vadd.f32 %v1556, %v1557
    %v1559 = vtanh.pop %v1558
    %v1560 = vmul.f32 %v1554, %v1559
    %v1561 = vpack.c.bf16 %v1560, %v1560
    %v1562 = vpack.c.bf16 %v1365, %v1365
    %1563 = vmatprep.subr.bf16.mxu0 %v951
    %1564 = vmatpush1.bf16.msra.mxu0 %v950
    %1565 = vmatprep.subr.bf16.mxu0 %v955
    %1566 = vmatpush1.bf16.msra.mxu0 %v954
    %1567 = vmatprep.subr.bf16.mxu0 %v959
    %1568 = vmatpush1.bf16.msra.mxu0 %v958
    %1569 = vmatprep.subr.bf16.mxu0 %v963
    %1570 = vmatpush1.bf16.msra.mxu0 %v962
    %1571 = vmatprep.subr.bf16.mxu0 %v967
    %1572 = vmatpush1.bf16.msra.mxu0 %v966
    %1573 = vmatprep.subr.bf16.mxu0 %v971
    %1574 = vmatpush1.bf16.msra.mxu0 %v970
    %1575 = vmatprep.subr.bf16.mxu0 %v975
    %1576 = vmatpush1.bf16.msra.mxu0 %v974
    %1577 = vmatprep.subr.bf16.mxu0 %v979
    %1578 = vmatpush1.bf16.msra.mxu0 %v978
    %1579 = vmatprep.subr.bf16.mxu0 0
    %1580 = vmatpush1.bf16.msra.mxu0 0
    %1581 = vmatprep.subr.bf16.mxu0 0
    %1582 = vmatpush1.bf16.msra.mxu0 0
    %1583 = vmatprep.subr.bf16.mxu0 0
    %1584 = vmatpush1.bf16.msra.mxu0 0
    %1585 = vmatprep.subr.bf16.mxu0 0
    %1586 = vmatpush1.bf16.msra.mxu0 0
    %1587 = vmatprep.subr.bf16.mxu0 0
    %1588 = vmatpush1.bf16.msra.mxu0 0
    %1589 = vmatprep.subr.bf16.mxu0 0
    %1590 = vmatpush1.bf16.msra.mxu0 0
    %1591 = vmatprep.subr.bf16.mxu0 0
    %1592 = vmatpush1.bf16.msra.mxu0 0
    %1593 = vmatprep.subr.bf16.mxu0 0
    %1594 = vmatpush1.bf16.msra.mxu0 0
    %1595 = vmatprep.mubr.bf16.mxu0 0
    %1596 = vmatmul.mubr.bf16.gmra.mrb[0].mxu0 %v1562
    %v1597 = vpop.f32.mrb[0].mxu0
    %v1598 = vadd.f32 0.0, %v1597
    %v1599 = vpop.f32.mrb[0].mxu0
    %v1600 = vadd.f32 0.0, %v1599
    %v1601 = vpop.f32.mrb[0].mxu0
    %v1602 = vpop.f32.mrb[0].mxu0
    %1603 = vdwg.mxu0
    %1604 = vmatprep.subr.bf16.mxu0 %v953
    %1605 = vmatpush1.bf16.msra.mxu0 %v952
    %1606 = vmatprep.subr.bf16.mxu0 %v957
    %1607 = vmatpush1.bf16.msra.mxu0 %v956
    %1608 = vmatprep.subr.bf16.mxu0 %v961
    %1609 = vmatpush1.bf16.msra.mxu0 %v960
    %1610 = vmatprep.subr.bf16.mxu0 %v965
    %1611 = vmatpush1.bf16.msra.mxu0 %v964
    %1612 = vmatprep.subr.bf16.mxu0 %v969
    %1613 = vmatpush1.bf16.msra.mxu0 %v968
    %1614 = vmatprep.subr.bf16.mxu0 %v973
    %1615 = vmatpush1.bf16.msra.mxu0 %v972
    %1616 = vmatprep.subr.bf16.mxu0 %v977
    %1617 = vmatpush1.bf16.msra.mxu0 %v976
    %1618 = vmatprep.subr.bf16.mxu0 %v981
    %1619 = vmatpush1.bf16.msra.mxu0 %v980
    %1620 = vmatprep.subr.bf16.mxu0 0
    %1621 = vmatpush1.bf16.msra.mxu0 0
    %1622 = vmatprep.subr.bf16.mxu0 0
    %1623 = vmatpush1.bf16.msra.mxu0 0
    %1624 = vmatprep.subr.bf16.mxu0 0
    %1625 = vmatpush1.bf16.msra.mxu0 0
    %1626 = vmatprep.subr.bf16.mxu0 0
    %1627 = vmatpush1.bf16.msra.mxu0 0
    %1628 = vmatprep.subr.bf16.mxu0 0
    %1629 = vmatpush1.bf16.msra.mxu0 0
    %1630 = vmatprep.subr.bf16.mxu0 0
    %1631 = vmatpush1.bf16.msra.mxu0 0
    %1632 = vmatprep.subr.bf16.mxu0 0
    %1633 = vmatpush1.bf16.msra.mxu0 0
    %1634 = vmatprep.subr.bf16.mxu0 0
    %1635 = vmatpush1.bf16.msra.mxu0 0
    %1636 = vmatprep.mubr.bf16.mxu0 0
    %1637 = vmatmul.mubr.bf16.gmra.mrb[0].mxu0 %v1562
    %v1638 = vpop.f32.mrb[0].mxu0
    %v1639 = vadd.f32 0.0, %v1638
    %v1640 = vpop.f32.mrb[0].mxu0
    %v1641 = vadd.f32 0.0, %v1640
    %v1642 = vpop.f32.mrb[0].mxu0
    %v1643 = vpop.f32.mrb[0].mxu0
    %1644 = vdwg.mxu0
    %1645 = vmatprep.subr.bf16.mxu0 %v1193
    %1646 = vmatpush1.bf16.msra.mxu0 %v1192
    %1647 = vmatprep.subr.bf16.mxu0 %v1197
    %1648 = vmatpush1.bf16.msra.mxu0 %v1196
    %1649 = vmatprep.subr.bf16.mxu0 %v1201
    %1650 = vmatpush1.bf16.msra.mxu0 %v1200
    %1651 = vmatprep.subr.bf16.mxu0 %v1205
    %1652 = vmatpush1.bf16.msra.mxu0 %v1204
    %1653 = vmatprep.subr.bf16.mxu0 %v1209
    %1654 = vmatpush1.bf16.msra.mxu0 %v1208
    %1655 = vmatprep.subr.bf16.mxu0 %v1213
    %1656 = vmatpush1.bf16.msra.mxu0 %v1212
    %1657 = vmatprep.subr.bf16.mxu0 %v1217
    %1658 = vmatpush1.bf16.msra.mxu0 %v1216
    %1659 = vmatprep.subr.bf16.mxu0 %v1221
    %1660 = vmatpush1.bf16.msra.mxu0 %v1220
    %1661 = vmatprep.subr.bf16.mxu0 0
    %1662 = vmatpush1.bf16.msra.mxu0 0
    %1663 = vmatprep.subr.bf16.mxu0 0
    %1664 = vmatpush1.bf16.msra.mxu0 0
    %1665 = vmatprep.subr.bf16.mxu0 0
    %1666 = vmatpush1.bf16.msra.mxu0 0
    %1667 = vmatprep.subr.bf16.mxu0 0
    %1668 = vmatpush1.bf16.msra.mxu0 0
    %1669 = vmatprep.subr.bf16.mxu0 0
    %1670 = vmatpush1.bf16.msra.mxu0 0
    %1671 = vmatprep.subr.bf16.mxu0 0
    %1672 = vmatpush1.bf16.msra.mxu0 0
    %1673 = vmatprep.subr.bf16.mxu0 0
    %1674 = vmatpush1.bf16.msra.mxu0 0
    %1675 = vmatprep.subr.bf16.mxu0 0
    %1676 = vmatpush1.bf16.msra.mxu0 0
    %1677 = vmatprep.mubr.bf16.mxu0 0
    %1678 = vmatmul.mubr.bf16.gmra.mrb[0].mxu0 %v1561
    %v1679 = vpop.f32.mrb[0].mxu0
    %v1680 = vadd.f32 %v1598, %v1679
    %v1681 = vpop.f32.mrb[0].mxu0
    %v1682 = vadd.f32 %v1600, %v1681
    %v1683 = vpop.f32.mrb[0].mxu0
    %v1684 = vpop.f32.mrb[0].mxu0
    %1685 = vdwg.mxu0
    %1686 = vmatprep.subr.bf16.mxu0 %v1195
    %1687 = vmatpush1.bf16.msra.mxu0 %v1194
    %1688 = vmatprep.subr.bf16.mxu0 %v1199
    %1689 = vmatpush1.bf16.msra.mxu0 %v1198
    %1690 = vmatprep.subr.bf16.mxu0 %v1203
    %1691 = vmatpush1.bf16.msra.mxu0 %v1202
    %1692 = vmatprep.subr.bf16.mxu0 %v1207
    %1693 = vmatpush1.bf16.msra.mxu0 %v1206
    %1694 = vmatprep.subr.bf16.mxu0 %v1211
    %1695 = vmatpush1.bf16.msra.mxu0 %v1210
    %1696 = vmatprep.subr.bf16.mxu0 %v1215
    %1697 = vmatpush1.bf16.msra.mxu0 %v1214
    %1698 = vmatprep.subr.bf16.mxu0 %v1219
    %1699 = vmatpush1.bf16.msra.mxu0 %v1218
    %1700 = vmatprep.subr.bf16.mxu0 %v1223
    %1701 = vmatpush1.bf16.msra.mxu0 %v1222
    %1702 = vmatprep.subr.bf16.mxu0 0
    %1703 = vmatpush1.bf16.msra.mxu0 0
    %1704 = vmatprep.subr.bf16.mxu0 0
    %1705 = vmatpush1.bf16.msra.mxu0 0
    %1706 = vmatprep.subr.bf16.mxu0 0
    %1707 = vmatpush1.bf16.msra.mxu0 0
    %1708 = vmatprep.subr.bf16.mxu0 0
    %1709 = vmatpush1.bf16.msra.mxu0 0
    %1710 = vmatprep.subr.bf16.mxu0 0
    %1711 = vmatpush1.bf16.msra.mxu0 0
    %1712 = vmatprep.subr.bf16.mxu0 0
    %1713 = vmatpush1.bf16.msra.mxu0 0
    %1714 = vmatprep.subr.bf16.mxu0 0
    %1715 = vmatpush1.bf16.msra.mxu0 0
    %1716 = vmatprep.subr.bf16.mxu0 0
    %1717 = vmatpush1.bf16.msra.mxu0 0
    %1718 = vmatprep.mubr.bf16.mxu0 0
    %1719 = vmatmul.mubr.bf16.gmra.mrb[0].mxu0 %v1561
    %v1720 = vpop.f32.mrb[0].mxu0
    %v1721 = vadd.f32 %v1639, %v1720
    %v1722 = vpop.f32.mrb[0].mxu0
    %v1723 = vadd.f32 %v1641, %v1722
    %v1724 = vpop.f32.mrb[0].mxu0
    %v1725 = vpop.f32.mrb[0].mxu0
    %1726 = vdwg.mxu0
    %v1727 = vadd.f32 %v1680, %v317
    %v1728 = vadd.f32 %v1682, %v321
    %v1729 = vadd.f32 %v1721, %v325
    %v1730 = vadd.f32 %v1723, %v329
    %v1731 = vxor.u32 %v1727, 2147483648
    %v1732 = vxor.u32 %v1728, 2147483648
    %v1733 = vxor.u32 %v1729, 2147483648
    %v1734 = vmul.f32 %v1731, 1.442695
    %v1735 = vpow.pop %v1734
    %v1736 = vmul.f32 %v1732, 1.442695
    %v1737 = vpow.pop %v1736
    %v1738 = vmul.f32 %v1733, 1.442695
    %v1739 = vpow.pop %v1738
    %v1740 = vadd.f32 %v1735, 1.0
    %v1741 = vadd.f32 %v1737, 1.0
    %v1742 = vadd.f32 %v1739, 1.0
    %v1743 = vrcp.pop %v1740
    %v1744 = vmul.f32 1.0, %v1743
    %v1745 = vrcp.pop %v1741
    %v1746 = vmul.f32 1.0, %v1745
    %v1747 = vrcp.pop %v1742
    %v1748 = vmul.f32 1.0, %v1747
    %v1749 = vtanh.pop %v1730
    %v1750 = vmul.f32 %v1746, %v1363
    %v1751 = vmul.f32 %v1744, %v1749
    %v1752 = vadd.f32 %v1750, %v1751
    %v1753 = vtanh.pop %v1752
    %v1754 = vmul.f32 %v1748, %v1753
    %s1755 = scalar_lea.vmem [#allocation6], 8
    %1756 = vst [vmem:[%s1755] sm:$0xff] %v1754
    %s1757 = scalar_lea.vmem [#allocation7], 8
    %v1758 = vld [vmem:[%s1757] sm:$0xf]
    %1759 = vmatprep.subr.bf16.mxu0 %v437
    %1760 = vmatpush1.bf16.msra.mxu0 %v436
    %1761 = vmatprep.subr.bf16.mxu0 %v441
    %1762 = vmatpush1.bf16.msra.mxu0 %v440
    %1763 = vmatprep.subr.bf16.mxu0 %v445
    %1764 = vmatpush1.bf16.msra.mxu0 %v444
    %1765 = vmatprep.subr.bf16.mxu0 %v449
    %1766 = vmatpush1.bf16.msra.mxu0 %v448
    %1767 = vmatprep.subr.bf16.mxu0 %v453
    %1768 = vmatpush1.bf16.msra.mxu0 %v452
    %1769 = vmatprep.subr.bf16.mxu0 %v457
    %1770 = vmatpush1.bf16.msra.mxu0 %v456
    %1771 = vmatprep.subr.bf16.mxu0 %v461
    %1772 = vmatpush1.bf16.msra.mxu0 %v460
    %1773 = vmatprep.subr.bf16.mxu0 %v465
    %1774 = vmatpush1.bf16.msra.mxu0 %v464
    %1775 = vmatprep.subr.bf16.mxu0 0
    %1776 = vmatpush1.bf16.msra.mxu0 0
    %1777 = vmatprep.subr.bf16.mxu0 0
    %1778 = vmatpush1.bf16.msra.mxu0 0
    %1779 = vmatprep.subr.bf16.mxu0 0
    %1780 = vmatpush1.bf16.msra.mxu0 0
    %1781 = vmatprep.subr.bf16.mxu0 0
    %1782 = vmatpush1.bf16.msra.mxu0 0
    %1783 = vmatprep.subr.bf16.mxu0 0
    %1784 = vmatpush1.bf16.msra.mxu0 0
    %1785 = vmatprep.subr.bf16.mxu0 0
    %1786 = vmatpush1.bf16.msra.mxu0 0
    %1787 = vmatprep.subr.bf16.mxu0 0
    %1788 = vmatpush1.bf16.msra.mxu0 0
    %1789 = vmatprep.subr.bf16.mxu0 0
    %1790 = vmatpush1.bf16.msra.mxu0 0
    %1791 = vmatprep.mubr.bf16.mxu0 0
    %1792 = vmatmul.mubr.bf16.gmra.mrb[0].mxu0 %v1561
    %v1793 = vpop.f32.mrb[0].mxu0
    %v1794 = vadd.f32 0.0, %v1793
    %v1795 = vpop.f32.mrb[0].mxu0
    %v1796 = vadd.f32 0.0, %v1795
    %v1797 = vpop.f32.mrb[0].mxu0
    %v1798 = vpop.f32.mrb[0].mxu0
    %1799 = vdwg.mxu0
    %1800 = vmatprep.subr.bf16.mxu0 %v439
    %1801 = vmatpush1.bf16.msra.mxu0 %v438
    %1802 = vmatprep.subr.bf16.mxu0 %v443
    %1803 = vmatpush1.bf16.msra.mxu0 %v442
    %1804 = vmatprep.subr.bf16.mxu0 %v447
    %1805 = vmatpush1.bf16.msra.mxu0 %v446
    %1806 = vmatprep.subr.bf16.mxu0 %v451
    %1807 = vmatpush1.bf16.msra.mxu0 %v450
    %1808 = vmatprep.subr.bf16.mxu0 %v455
    %1809 = vmatpush1.bf16.msra.mxu0 %v454
    %1810 = vmatprep.subr.bf16.mxu0 %v459
    %1811 = vmatpush1.bf16.msra.mxu0 %v458
    %1812 = vmatprep.subr.bf16.mxu0 %v463
    %1813 = vmatpush1.bf16.msra.mxu0 %v462
    %1814 = vmatprep.subr.bf16.mxu0 %v467
    %1815 = vmatpush1.bf16.msra.mxu0 %v466
    %1816 = vmatprep.subr.bf16.mxu0 0
    %1817 = vmatpush1.bf16.msra.mxu0 0
    %1818 = vmatprep.subr.bf16.mxu0 0
    %1819 = vmatpush1.bf16.msra.mxu0 0
    %1820 = vmatprep.subr.bf16.mxu0 0
    %1821 = vmatpush1.bf16.msra.mxu0 0
    %1822 = vmatprep.subr.bf16.mxu0 0
    %1823 = vmatpush1.bf16.msra.mxu0 0
    %1824 = vmatprep.subr.bf16.mxu0 0
    %1825 = vmatpush1.bf16.msra.mxu0 0
    %1826 = vmatprep.subr.bf16.mxu0 0
    %1827 = vmatpush1.bf16.msra.mxu0 0
    %1828 = vmatprep.subr.bf16.mxu0 0
    %1829 = vmatpush1.bf16.msra.mxu0 0
    %1830 = vmatprep.subr.bf16.mxu0 0
    %1831 = vmatpush1.bf16.msra.mxu0 0
    %1832 = vmatprep.mubr.bf16.mxu0 0
    %1833 = vmatmul.mubr.bf16.gmra.mrb[0].mxu0 %v1561
    %v1834 = vpop.f32.mrb[0].mxu0
    %v1835 = vadd.f32 0.0, %v1834
    %v1836 = vpop.f32.mrb[0].mxu0
    %v1837 = vadd.f32 0.0, %v1836
    %v1838 = vpop.f32.mrb[0].mxu0
    %v1839 = vpop.f32.mrb[0].mxu0
    %1840 = vdwg.mxu0
    %1841 = vmatprep.subr.bf16.mxu0 %v679
    %1842 = vmatpush1.bf16.msra.mxu0 %v678
    %1843 = vmatprep.subr.bf16.mxu0 %v683
    %1844 = vmatpush1.bf16.msra.mxu0 %v682
    %1845 = vmatprep.subr.bf16.mxu0 %v687
    %1846 = vmatpush1.bf16.msra.mxu0 %v686
    %1847 = vmatprep.subr.bf16.mxu0 %v691
    %1848 = vmatpush1.bf16.msra.mxu0 %v690
    %1849 = vmatprep.subr.bf16.mxu0 %v695
    %1850 = vmatpush1.bf16.msra.mxu0 %v694
    %1851 = vmatprep.subr.bf16.mxu0 %v699
    %1852 = vmatpush1.bf16.msra.mxu0 %v698
    %1853 = vmatprep.subr.bf16.mxu0 %v703
    %1854 = vmatpush1.bf16.msra.mxu0 %v702
    %1855 = vmatprep.subr.bf16.mxu0 %v707
    %1856 = vmatpush1.bf16.msra.mxu0 %v706
    %1857 = vmatprep.subr.bf16.mxu0 0
    %1858 = vmatpush1.bf16.msra.mxu0 0
    %1859 = vmatprep.subr.bf16.mxu0 0
    %1860 = vmatpush1.bf16.msra.mxu0 0
    %1861 = vmatprep.subr.bf16.mxu0 0
    %1862 = vmatpush1.bf16.msra.mxu0 0
    %1863 = vmatprep.subr.bf16.mxu0 0
    %1864 = vmatpush1.bf16.msra.mxu0 0
    %1865 = vmatprep.subr.bf16.mxu0 0
    %1866 = vmatpush1.bf16.msra.mxu0 0
    %1867 = vmatprep.subr.bf16.mxu0 0
    %1868 = vmatpush1.bf16.msra.mxu0 0
    %1869 = vmatprep.subr.bf16.mxu0 0
    %1870 = vmatpush1.bf16.msra.mxu0 0
    %1871 = vmatprep.subr.bf16.mxu0 0
    %1872 = vmatpush1.bf16.msra.mxu0 0
    %1873 = vmatprep.mubr.bf16.mxu0 0
    %1874 = vmatmul.mubr.bf16.gmra.mrb[0].mxu0 %v1758
    %v1875 = vpop.f32.mrb[0].mxu0
    %v1876 = vadd.f32 %v1794, %v1875
    %v1877 = vpop.f32.mrb[0].mxu0
    %v1878 = vadd.f32 %v1796, %v1877
    %v1879 = vpop.f32.mrb[0].mxu0
    %v1880 = vpop.f32.mrb[0].mxu0
    %1881 = vdwg.mxu0
    %1882 = vmatprep.subr.bf16.mxu0 %v681
    %1883 = vmatpush1.bf16.msra.mxu0 %v680
    %1884 = vmatprep.subr.bf16.mxu0 %v685
    %1885 = vmatpush1.bf16.msra.mxu0 %v684
    %1886 = vmatprep.subr.bf16.mxu0 %v689
    %1887 = vmatpush1.bf16.msra.mxu0 %v688
    %1888 = vmatprep.subr.bf16.mxu0 %v693
    %1889 = vmatpush1.bf16.msra.mxu0 %v692
    %1890 = vmatprep.subr.bf16.mxu0 %v697
    %1891 = vmatpush1.bf16.msra.mxu0 %v696
    %1892 = vmatprep.subr.bf16.mxu0 %v701
    %1893 = vmatpush1.bf16.msra.mxu0 %v700
    %1894 = vmatprep.subr.bf16.mxu0 %v705
    %1895 = vmatpush1.bf16.msra.mxu0 %v704
    %1896 = vmatprep.subr.bf16.mxu0 %v709
    %1897 = vmatpush1.bf16.msra.mxu0 %v708
    %1898 = vmatprep.subr.bf16.mxu0 0
    %1899 = vmatpush1.bf16.msra.mxu0 0
    %1900 = vmatprep.subr.bf16.mxu0 0
    %1901 = vmatpush1.bf16.msra.mxu0 0
    %1902 = vmatprep.subr.bf16.mxu0 0
    %1903 = vmatpush1.bf16.msra.mxu0 0
    %1904 = vmatprep.subr.bf16.mxu0 0
    %1905 = vmatpush1.bf16.msra.mxu0 0
    %1906 = vmatprep.subr.bf16.mxu0 0
    %1907 = vmatpush1.bf16.msra.mxu0 0
    %1908 = vmatprep.subr.bf16.mxu0 0
    %1909 = vmatpush1.bf16.msra.mxu0 0
    %1910 = vmatprep.subr.bf16.mxu0 0
    %1911 = vmatpush1.bf16.msra.mxu0 0
    %1912 = vmatprep.subr.bf16.mxu0 0
    %1913 = vmatpush1.bf16.msra.mxu0 0
    %1914 = vmatprep.mubr.bf16.mxu0 0
    %1915 = vmatmul.mubr.bf16.gmra.mrb[0].mxu0 %v1758
    %v1916 = vpop.f32.mrb[0].mxu0
    %v1917 = vadd.f32 %v1835, %v1916
    %v1918 = vpop.f32.mrb[0].mxu0
    %v1919 = vadd.f32 %v1837, %v1918
    %v1920 = vpop.f32.mrb[0].mxu0
    %v1921 = vpop.f32.mrb[0].mxu0
    %1922 = vdwg.mxu0
    %v1923 = vadd.f32 %v1876, %v295
    %v1924 = vadd.f32 %v1878, %v299
    %v1925 = vadd.f32 %v1917, %v303
    %v1926 = vadd.f32 %v1919, %v307
    %v1927 = vxor.u32 %v1923, 2147483648
    %v1928 = vxor.u32 %v1924, 2147483648
    %v1929 = vxor.u32 %v1925, 2147483648
    %v1930 = vmul.f32 %v1927, 1.442695
    %v1931 = vpow.pop %v1930
    %v1932 = vmul.f32 %v1928, 1.442695
    %v1933 = vpow.pop %v1932
    %v1934 = vmul.f32 %v1929, 1.442695
    %v1935 = vpow.pop %v1934
    %v1936 = vadd.f32 %v1931, 1.0
    %v1937 = vadd.f32 %v1933, 1.0
    %v1938 = vadd.f32 %v1935, 1.0
    %v1939 = vrcp.pop %v1936
    %v1940 = vmul.f32 1.0, %v1939
    %v1941 = vrcp.pop %v1937
    %v1942 = vmul.f32 1.0, %v1941
    %v1943 = vrcp.pop %v1938
    %v1944 = vmul.f32 1.0, %v1943
    %v1945 = vtanh.pop %v1926
    %v1946 = vmul.f32 %v1942, %v1558
    %v1947 = vmul.f32 %v1940, %v1945
    %v1948 = vadd.f32 %v1946, %v1947
    %v1949 = vtanh.pop %v1948
    %v1950 = vmul.f32 %v1944, %v1949
    %v1951 = vpack.c.bf16 %v1950, %v1950
    %v1952 = vpack.c.bf16 %v1754, %v1754
    %1953 = vmatprep.subr.bf16.mxu0 %v951
    %1954 = vmatpush1.bf16.msra.mxu0 %v950
    %1955 = vmatprep.subr.bf16.mxu0 %v955
    %1956 = vmatpush1.bf16.msra.mxu0 %v954
    %1957 = vmatprep.subr.bf16.mxu0 %v959
    %1958 = vmatpush1.bf16.msra.mxu0 %v958
    %1959 = vmatprep.subr.bf16.mxu0 %v963
    %1960 = vmatpush1.bf16.msra.mxu0 %v962
    %1961 = vmatprep.subr.bf16.mxu0 %v967
    %1962 = vmatpush1.bf16.msra.mxu0 %v966
    %1963 = vmatprep.subr.bf16.mxu0 %v971
    %1964 = vmatpush1.bf16.msra.mxu0 %v970
    %1965 = vmatprep.subr.bf16.mxu0 %v975
    %1966 = vmatpush1.bf16.msra.mxu0 %v974
    %1967 = vmatprep.subr.bf16.mxu0 %v979
    %1968 = vmatpush1.bf16.msra.mxu0 %v978
    %1969 = vmatprep.subr.bf16.mxu0 0
    %1970 = vmatpush1.bf16.msra.mxu0 0
    %1971 = vmatprep.subr.bf16.mxu0 0
    %1972 = vmatpush1.bf16.msra.mxu0 0
    %1973 = vmatprep.subr.bf16.mxu0 0
    %1974 = vmatpush1.bf16.msra.mxu0 0
    %1975 = vmatprep.subr.bf16.mxu0 0
    %1976 = vmatpush1.bf16.msra.mxu0 0
    %1977 = vmatprep.subr.bf16.mxu0 0
    %1978 = vmatpush1.bf16.msra.mxu0 0
    %1979 = vmatprep.subr.bf16.mxu0 0
    %1980 = vmatpush1.bf16.msra.mxu0 0
    %1981 = vmatprep.subr.bf16.mxu0 0
    %1982 = vmatpush1.bf16.msra.mxu0 0
    %1983 = vmatprep.subr.bf16.mxu0 0
    %1984 = vmatpush1.bf16.msra.mxu0 0
    %1985 = vmatprep.mubr.bf16.mxu0 0
    %1986 = vmatmul.mubr.bf16.gmra.mrb[0].mxu0 %v1952
    %v1987 = vpop.f32.mrb[0].mxu0
    %v1988 = vadd.f32 0.0, %v1987
    %v1989 = vpop.f32.mrb[0].mxu0
    %v1990 = vadd.f32 0.0, %v1989
    %v1991 = vpop.f32.mrb[0].mxu0
    %v1992 = vpop.f32.mrb[0].mxu0
    %1993 = vdwg.mxu0
    %1994 = vmatprep.subr.bf16.mxu0 %v953
    %1995 = vmatpush1.bf16.msra.mxu0 %v952
    %1996 = vmatprep.subr.bf16.mxu0 %v957
    %1997 = vmatpush1.bf16.msra.mxu0 %v956
    %1998 = vmatprep.subr.bf16.mxu0 %v961
    %1999 = vmatpush1.bf16.msra.mxu0 %v960
    %2000 = vmatprep.subr.bf16.mxu0 %v965
    %2001 = vmatpush1.bf16.msra.mxu0 %v964
    %2002 = vmatprep.subr.bf16.mxu0 %v969
    %2003 = vmatpush1.bf16.msra.mxu0 %v968
    %2004 = vmatprep.subr.bf16.mxu0 %v973
    %2005 = vmatpush1.bf16.msra.mxu0 %v972
    %2006 = vmatprep.subr.bf16.mxu0 %v977
    %2007 = vmatpush1.bf16.msra.mxu0 %v976
    %2008 = vmatprep.subr.bf16.mxu0 %v981
    %2009 = vmatpush1.bf16.msra.mxu0 %v980
    %2010 = vmatprep.subr.bf16.mxu0 0
    %2011 = vmatpush1.bf16.msra.mxu0 0
    %2012 = vmatprep.subr.bf16.mxu0 0
    %2013 = vmatpush1.bf16.msra.mxu0 0
    %2014 = vmatprep.subr.bf16.mxu0 0
    %2015 = vmatpush1.bf16.msra.mxu0 0
    %2016 = vmatprep.subr.bf16.mxu0 0
    %2017 = vmatpush1.bf16.msra.mxu0 0
    %2018 = vmatprep.subr.bf16.mxu0 0
    %2019 = vmatpush1.bf16.msra.mxu0 0
    %2020 = vmatprep.subr.bf16.mxu0 0
    %2021 = vmatpush1.bf16.msra.mxu0 0
    %2022 = vmatprep.subr.bf16.mxu0 0
    %2023 = vmatpush1.bf16.msra.mxu0 0
    %2024 = vmatprep.subr.bf16.mxu0 0
    %2025 = vmatpush1.bf16.msra.mxu0 0
    %2026 = vmatprep.mubr.bf16.mxu0 0
    %2027 = vmatmul.mubr.bf16.gmra.mrb[0].mxu0 %v1952
    %v2028 = vpop.f32.mrb[0].mxu0
    %v2029 = vadd.f32 0.0, %v2028
    %v2030 = vpop.f32.mrb[0].mxu0
    %v2031 = vadd.f32 0.0, %v2030
    %v2032 = vpop.f32.mrb[0].mxu0
    %v2033 = vpop.f32.mrb[0].mxu0
    %2034 = vdwg.mxu0
    %2035 = vmatprep.subr.bf16.mxu0 %v1193
    %2036 = vmatpush1.bf16.msra.mxu0 %v1192
    %2037 = vmatprep.subr.bf16.mxu0 %v1197
    %2038 = vmatpush1.bf16.msra.mxu0 %v1196
    %2039 = vmatprep.subr.bf16.mxu0 %v1201
    %2040 = vmatpush1.bf16.msra.mxu0 %v1200
    %2041 = vmatprep.subr.bf16.mxu0 %v1205
    %2042 = vmatpush1.bf16.msra.mxu0 %v1204
    %2043 = vmatprep.subr.bf16.mxu0 %v1209
    %2044 = vmatpush1.bf16.msra.mxu0 %v1208
    %2045 = vmatprep.subr.bf16.mxu0 %v1213
    %2046 = vmatpush1.bf16.msra.mxu0 %v1212
    %2047 = vmatprep.subr.bf16.mxu0 %v1217
    %2048 = vmatpush1.bf16.msra.mxu0 %v1216
    %2049 = vmatprep.subr.bf16.mxu0 %v1221
    %2050 = vmatpush1.bf16.msra.mxu0 %v1220
    %2051 = vmatprep.subr.bf16.mxu0 0
    %2052 = vmatpush1.bf16.msra.mxu0 0
    %2053 = vmatprep.subr.bf16.mxu0 0
    %2054 = vmatpush1.bf16.msra.mxu0 0
    %2055 = vmatprep.subr.bf16.mxu0 0
    %2056 = vmatpush1.bf16.msra.mxu0 0
    %2057 = vmatprep.subr.bf16.mxu0 0
    %2058 = vmatpush1.bf16.msra.mxu0 0
    %2059 = vmatprep.subr.bf16.mxu0 0
    %2060 = vmatpush1.bf16.msra.mxu0 0
    %2061 = vmatprep.subr.bf16.mxu0 0
    %2062 = vmatpush1.bf16.msra.mxu0 0
    %2063 = vmatprep.subr.bf16.mxu0 0
    %2064 = vmatpush1.bf16.msra.mxu0 0
    %2065 = vmatprep.subr.bf16.mxu0 0
    %2066 = vmatpush1.bf16.msra.mxu0 0
    %2067 = vmatprep.mubr.bf16.mxu0 0
    %2068 = vmatmul.mubr.bf16.gmra.mrb[0].mxu0 %v1951
    %v2069 = vpop.f32.mrb[0].mxu0
    %v2070 = vadd.f32 %v1988, %v2069
    %v2071 = vpop.f32.mrb[0].mxu0
    %v2072 = vadd.f32 %v1990, %v2071
    %v2073 = vpop.f32.mrb[0].mxu0
    %v2074 = vpop.f32.mrb[0].mxu0
    %2075 = vdwg.mxu0
    %2076 = vmatprep.subr.bf16.mxu0 %v1195
    %2077 = vmatpush1.bf16.msra.mxu0 %v1194
    %2078 = vmatprep.subr.bf16.mxu0 %v1199
    %2079 = vmatpush1.bf16.msra.mxu0 %v1198
    %2080 = vmatprep.subr.bf16.mxu0 %v1203
    %2081 = vmatpush1.bf16.msra.mxu0 %v1202
    %2082 = vmatprep.subr.bf16.mxu0 %v1207
    %2083 = vmatpush1.bf16.msra.mxu0 %v1206
    %2084 = vmatprep.subr.bf16.mxu0 %v1211
    %2085 = vmatpush1.bf16.msra.mxu0 %v1210
    %2086 = vmatprep.subr.bf16.mxu0 %v1215
    %2087 = vmatpush1.bf16.msra.mxu0 %v1214
    %2088 = vmatprep.subr.bf16.mxu0 %v1219
    %2089 = vmatpush1.bf16.msra.mxu0 %v1218
    %2090 = vmatprep.subr.bf16.mxu0 %v1223
    %2091 = vmatpush1.bf16.msra.mxu0 %v1222
    %2092 = vmatprep.subr.bf16.mxu0 0
    %2093 = vmatpush1.bf16.msra.mxu0 0
    %2094 = vmatprep.subr.bf16.mxu0 0
    %2095 = vmatpush1.bf16.msra.mxu0 0
    %2096 = vmatprep.subr.bf16.mxu0 0
    %2097 = vmatpush1.bf16.msra.mxu0 0
    %2098 = vmatprep.subr.bf16.mxu0 0
    %2099 = vmatpush1.bf16.msra.mxu0 0
    %2100 = vmatprep.subr.bf16.mxu0 0
    %2101 = vmatpush1.bf16.msra.mxu0 0
    %2102 = vmatprep.subr.bf16.mxu0 0
    %2103 = vmatpush1.bf16.msra.mxu0 0
    %2104 = vmatprep.subr.bf16.mxu0 0
    %2105 = vmatpush1.bf16.msra.mxu0 0
    %2106 = vmatprep.subr.bf16.mxu0 0
    %2107 = vmatpush1.bf16.msra.mxu0 0
    %2108 = vmatprep.mubr.bf16.mxu0 0
    %2109 = vmatmul.mubr.bf16.gmra.mrb[0].mxu0 %v1951
    %v2110 = vpop.f32.mrb[0].mxu0
    %v2111 = vadd.f32 %v2029, %v2110
    %v2112 = vpop.f32.mrb[0].mxu0
    %v2113 = vadd.f32 %v2031, %v2112
    %v2114 = vpop.f32.mrb[0].mxu0
    %v2115 = vpop.f32.mrb[0].mxu0
    %2116 = vdwg.mxu0
    %v2117 = vadd.f32 %v2070, %v317
    %v2118 = vadd.f32 %v2072, %v321
    %v2119 = vadd.f32 %v2111, %v325
    %v2120 = vadd.f32 %v2113, %v329
    %v2121 = vxor.u32 %v2117, 2147483648
    %v2122 = vxor.u32 %v2118, 2147483648
    %v2123 = vxor.u32 %v2119, 2147483648
    %v2124 = vmul.f32 %v2121, 1.442695
    %v2125 = vpow.pop %v2124
    %v2126 = vmul.f32 %v2122, 1.442695
    %v2127 = vpow.pop %v2126
    %v2128 = vmul.f32 %v2123, 1.442695
    %v2129 = vpow.pop %v2128
    %v2130 = vadd.f32 %v2125, 1.0
    %v2131 = vadd.f32 %v2127, 1.0
    %v2132 = vadd.f32 %v2129, 1.0
    %v2133 = vrcp.pop %v2130
    %v2134 = vmul.f32 1.0, %v2133
    %v2135 = vrcp.pop %v2131
    %v2136 = vmul.f32 1.0, %v2135
    %v2137 = vrcp.pop %v2132
    %v2138 = vmul.f32 1.0, %v2137
    %v2139 = vtanh.pop %v2120
    %v2140 = vmul.f32 %v2136, %v1752
    %v2141 = vmul.f32 %v2134, %v2139
    %v2142 = vadd.f32 %v2140, %v2141
    %v2143 = vtanh.pop %v2142
    %v2144 = vmul.f32 %v2138, %v2143
    %s2145 = scalar_lea.vmem [#allocation6], 16
    %2146 = vst [vmem:[%s2145] sm:$0xff] %v2144
    %s2147 = scalar_lea.vmem [#allocation7], 12
    %v2148 = vld [vmem:[%s2147] sm:$0xf]
    %2149 = vmatprep.subr.bf16.mxu0 %v437
    %2150 = vmatpush1.bf16.msra.mxu0 %v436
    %2151 = vmatprep.subr.bf16.mxu0 %v441
    %2152 = vmatpush1.bf16.msra.mxu0 %v440
    %2153 = vmatprep.subr.bf16.mxu0 %v445
    %2154 = vmatpush1.bf16.msra.mxu0 %v444
    %2155 = vmatprep.subr.bf16.mxu0 %v449
    %2156 = vmatpush1.bf16.msra.mxu0 %v448
    %2157 = vmatprep.subr.bf16.mxu0 %v453
    %2158 = vmatpush1.bf16.msra.mxu0 %v452
    %2159 = vmatprep.subr.bf16.mxu0 %v457
    %2160 = vmatpush1.bf16.msra.mxu0 %v456
    %2161 = vmatprep.subr.bf16.mxu0 %v461
    %2162 = vmatpush1.bf16.msra.mxu0 %v460
    %2163 = vmatprep.subr.bf16.mxu0 %v465
    %2164 = vmatpush1.bf16.msra.mxu0 %v464
    %2165 = vmatprep.subr.bf16.mxu0 0
    %2166 = vmatpush1.bf16.msra.mxu0 0
    %2167 = vmatprep.subr.bf16.mxu0 0
    %2168 = vmatpush1.bf16.msra.mxu0 0
    %2169 = vmatprep.subr.bf16.mxu0 0
    %2170 = vmatpush1.bf16.msra.mxu0 0
    %2171 = vmatprep.subr.bf16.mxu0 0
    %2172 = vmatpush1.bf16.msra.mxu0 0
    %2173 = vmatprep.subr.bf16.mxu0 0
    %2174 = vmatpush1.bf16.msra.mxu0 0
    %2175 = vmatprep.subr.bf16.mxu0 0
    %2176 = vmatpush1.bf16.msra.mxu0 0
    %2177 = vmatprep.subr.bf16.mxu0 0
    %2178 = vmatpush1.bf16.msra.mxu0 0
    %2179 = vmatprep.subr.bf16.mxu0 0
    %2180 = vmatpush1.bf16.msra.mxu0 0
    %2181 = vmatprep.mubr.bf16.mxu0 0
    %2182 = vmatmul.mubr.bf16.gmra.mrb[0].mxu0 %v1951
    %v2183 = vpop.f32.mrb[0].mxu0
    %v2184 = vadd.f32 0.0, %v2183
    %v2185 = vpop.f32.mrb[0].mxu0
    %v2186 = vadd.f32 0.0, %v2185
    %v2187 = vpop.f32.mrb[0].mxu0
    %v2188 = vpop.f32.mrb[0].mxu0
    %2189 = vdwg.mxu0
    %2190 = vmatprep.subr.bf16.mxu0 %v439
    %2191 = vmatpush1.bf16.msra.mxu0 %v438
    %2192 = vmatprep.subr.bf16.mxu0 %v443
    %2193 = vmatpush1.bf16.msra.mxu0 %v442
    %2194 = vmatprep.subr.bf16.mxu0 %v447
    %2195 = vmatpush1.bf16.msra.mxu0 %v446
    %2196 = vmatprep.subr.bf16.mxu0 %v451
    %2197 = vmatpush1.bf16.msra.mxu0 %v450
    %2198 = vmatprep.subr.bf16.mxu0 %v455
    %2199 = vmatpush1.bf16.msra.mxu0 %v454
    %2200 = vmatprep.subr.bf16.mxu0 %v459
    %2201 = vmatpush1.bf16.msra.mxu0 %v458
    %2202 = vmatprep.subr.bf16.mxu0 %v463
    %2203 = vmatpush1.bf16.msra.mxu0 %v462
    %2204 = vmatprep.subr.bf16.mxu0 %v467
    %2205 = vmatpush1.bf16.msra.mxu0 %v466
    %2206 = vmatprep.subr.bf16.mxu0 0
    %2207 = vmatpush1.bf16.msra.mxu0 0
    %2208 = vmatprep.subr.bf16.mxu0 0
    %2209 = vmatpush1.bf16.msra.mxu0 0
    %2210 = vmatprep.subr.bf16.mxu0 0
    %2211 = vmatpush1.bf16.msra.mxu0 0
    %2212 = vmatprep.subr.bf16.mxu0 0
    %2213 = vmatpush1.bf16.msra.mxu0 0
    %2214 = vmatprep.subr.bf16.mxu0 0
    %2215 = vmatpush1.bf16.msra.mxu0 0
    %2216 = vmatprep.subr.bf16.mxu0 0
    %2217 = vmatpush1.bf16.msra.mxu0 0
    %2218 = vmatprep.subr.bf16.mxu0 0
    %2219 = vmatpush1.bf16.msra.mxu0 0
    %2220 = vmatprep.subr.bf16.mxu0 0
    %2221 = vmatpush1.bf16.msra.mxu0 0
    %2222 = vmatprep.mubr.bf16.mxu0 0
    %2223 = vmatmul.mubr.bf16.gmra.mrb[0].mxu0 %v1951
    %v2224 = vpop.f32.mrb[0].mxu0
    %v2225 = vadd.f32 0.0, %v2224
    %v2226 = vpop.f32.mrb[0].mxu0
    %v2227 = vadd.f32 0.0, %v2226
    %v2228 = vpop.f32.mrb[0].mxu0
    %v2229 = vpop.f32.mrb[0].mxu0
    %2230 = vdwg.mxu0
    %2231 = vmatprep.subr.bf16.mxu0 %v679
    %2232 = vmatpush1.bf16.msra.mxu0 %v678
    %2233 = vmatprep.subr.bf16.mxu0 %v683
    %2234 = vmatpush1.bf16.msra.mxu0 %v682
    %2235 = vmatprep.subr.bf16.mxu0 %v687
    %2236 = vmatpush1.bf16.msra.mxu0 %v686
    %2237 = vmatprep.subr.bf16.mxu0 %v691
    %2238 = vmatpush1.bf16.msra.mxu0 %v690
    %2239 = vmatprep.subr.bf16.mxu0 %v695
    %2240 = vmatpush1.bf16.msra.mxu0 %v694
    %2241 = vmatprep.subr.bf16.mxu0 %v699
    %2242 = vmatpush1.bf16.msra.mxu0 %v698
    %2243 = vmatprep.subr.bf16.mxu0 %v703
    %2244 = vmatpush1.bf16.msra.mxu0 %v702
    %2245 = vmatprep.subr.bf16.mxu0 %v707
    %2246 = vmatpush1.bf16.msra.mxu0 %v706
    %2247 = vmatprep.subr.bf16.mxu0 0
    %2248 = vmatpush1.bf16.msra.mxu0 0
    %2249 = vmatprep.subr.bf16.mxu0 0
    %2250 = vmatpush1.bf16.msra.mxu0 0
    %2251 = vmatprep.subr.bf16.mxu0 0
    %2252 = vmatpush1.bf16.msra.mxu0 0
    %2253 = vmatprep.subr.bf16.mxu0 0
    %2254 = vmatpush1.bf16.msra.mxu0 0
    %2255 = vmatprep.subr.bf16.mxu0 0
    %2256 = vmatpush1.bf16.msra.mxu0 0
    %2257 = vmatprep.subr.bf16.mxu0 0
    %2258 = vmatpush1.bf16.msra.mxu0 0
    %2259 = vmatprep.subr.bf16.mxu0 0
    %2260 = vmatpush1.bf16.msra.mxu0 0
    %2261 = vmatprep.subr.bf16.mxu0 0
    %2262 = vmatpush1.bf16.msra.mxu0 0
    %2263 = vmatprep.mubr.bf16.mxu0 0
    %2264 = vmatmul.mubr.bf16.gmra.mrb[0].mxu0 %v2148
    %v2265 = vpop.f32.mrb[0].mxu0
    %v2266 = vadd.f32 %v2184, %v2265
    %v2267 = vpop.f32.mrb[0].mxu0
    %v2268 = vadd.f32 %v2186, %v2267
    %v2269 = vpop.f32.mrb[0].mxu0
    %v2270 = vpop.f32.mrb[0].mxu0
    %2271 = vdwg.mxu0
    %2272 = vmatprep.subr.bf16.mxu0 %v681
    %2273 = vmatpush1.bf16.msra.mxu0 %v680
    %2274 = vmatprep.subr.bf16.mxu0 %v685
    %2275 = vmatpush1.bf16.msra.mxu0 %v684
    %2276 = vmatprep.subr.bf16.mxu0 %v689
    %2277 = vmatpush1.bf16.msra.mxu0 %v688
    %2278 = vmatprep.subr.bf16.mxu0 %v693
    %2279 = vmatpush1.bf16.msra.mxu0 %v692
    %2280 = vmatprep.subr.bf16.mxu0 %v697
    %2281 = vmatpush1.bf16.msra.mxu0 %v696
    %2282 = vmatprep.subr.bf16.mxu0 %v701
    %2283 = vmatpush1.bf16.msra.mxu0 %v700
    %2284 = vmatprep.subr.bf16.mxu0 %v705
    %2285 = vmatpush1.bf16.msra.mxu0 %v704
    %2286 = vmatprep.subr.bf16.mxu0 %v709
    %2287 = vmatpush1.bf16.msra.mxu0 %v708
    %2288 = vmatprep.subr.bf16.mxu0 0
    %2289 = vmatpush1.bf16.msra.mxu0 0
    %2290 = vmatprep.subr.bf16.mxu0 0
    %2291 = vmatpush1.bf16.msra.mxu0 0
    %2292 = vmatprep.subr.bf16.mxu0 0
    %2293 = vmatpush1.bf16.msra.mxu0 0
    %2294 = vmatprep.subr.bf16.mxu0 0
    %2295 = vmatpush1.bf16.msra.mxu0 0
    %2296 = vmatprep.subr.bf16.mxu0 0
    %2297 = vmatpush1.bf16.msra.mxu0 0
    %2298 = vmatprep.subr.bf16.mxu0 0
    %2299 = vmatpush1.bf16.msra.mxu0 0
    %2300 = vmatprep.subr.bf16.mxu0 0
    %2301 = vmatpush1.bf16.msra.mxu0 0
    %2302 = vmatprep.subr.bf16.mxu0 0
    %2303 = vmatpush1.bf16.msra.mxu0 0
    %2304 = vmatprep.mubr.bf16.mxu0 0
    %2305 = vmatmul.mubr.bf16.gmra.mrb[0].mxu0 %v2148
    %v2306 = vpop.f32.mrb[0].mxu0
    %v2307 = vadd.f32 %v2225, %v2306
    %v2308 = vpop.f32.mrb[0].mxu0
    %v2309 = vadd.f32 %v2227, %v2308
    %v2310 = vpop.f32.mrb[0].mxu0
    %v2311 = vpop.f32.mrb[0].mxu0
    %2312 = vdwg.mxu0
    %v2313 = vadd.f32 %v2266, %v295
    %v2314 = vadd.f32 %v2268, %v299
    %v2315 = vadd.f32 %v2307, %v303
    %v2316 = vadd.f32 %v2309, %v307
    %v2317 = vxor.u32 %v2313, 2147483648
    %v2318 = vxor.u32 %v2314, 2147483648
    %v2319 = vxor.u32 %v2315, 2147483648
    %v2320 = vmul.f32 %v2317, 1.442695
    %v2321 = vpow.pop %v2320
    %v2322 = vmul.f32 %v2318, 1.442695
    %v2323 = vpow.pop %v2322
    %v2324 = vmul.f32 %v2319, 1.442695
    %v2325 = vpow.pop %v2324
    %v2326 = vadd.f32 %v2321, 1.0
    %v2327 = vadd.f32 %v2323, 1.0
    %v2328 = vadd.f32 %v2325, 1.0
    %v2329 = vrcp.pop %v2326
    %v2330 = vmul.f32 1.0, %v2329
    %v2331 = vrcp.pop %v2327
    %v2332 = vmul.f32 1.0, %v2331
    %v2333 = vrcp.pop %v2328
    %v2334 = vmul.f32 1.0, %v2333
    %v2335 = vtanh.pop %v2316
    %v2336 = vmul.f32 %v2332, %v1948
    %v2337 = vmul.f32 %v2330, %v2335
    %v2338 = vadd.f32 %v2336, %v2337
    %v2339 = vtanh.pop %v2338
    %v2340 = vmul.f32 %v2334, %v2339
    %v2341 = vpack.c.bf16 %v2340, %v2340
    %v2342 = vpack.c.bf16 %v2144, %v2144
    %2343 = vmatprep.subr.bf16.mxu0 %v951
    %2344 = vmatpush1.bf16.msra.mxu0 %v950
    %2345 = vmatprep.subr.bf16.mxu0 %v955
    %2346 = vmatpush1.bf16.msra.mxu0 %v954
    %2347 = vmatprep.subr.bf16.mxu0 %v959
    %2348 = vmatpush1.bf16.msra.mxu0 %v958
    %2349 = vmatprep.subr.bf16.mxu0 %v963
    %2350 = vmatpush1.bf16.msra.mxu0 %v962
    %2351 = vmatprep.subr.bf16.mxu0 %v967
    %2352 = vmatpush1.bf16.msra.mxu0 %v966
    %2353 = vmatprep.subr.bf16.mxu0 %v971
    %2354 = vmatpush1.bf16.msra.mxu0 %v970
    %2355 = vmatprep.subr.bf16.mxu0 %v975
    %2356 = vmatpush1.bf16.msra.mxu0 %v974
    %2357 = vmatprep.subr.bf16.mxu0 %v979
    %2358 = vmatpush1.bf16.msra.mxu0 %v978
    %2359 = vmatprep.subr.bf16.mxu0 0
    %2360 = vmatpush1.bf16.msra.mxu0 0
    %2361 = vmatprep.subr.bf16.mxu0 0
    %2362 = vmatpush1.bf16.msra.mxu0 0
    %2363 = vmatprep.subr.bf16.mxu0 0
    %2364 = vmatpush1.bf16.msra.mxu0 0
    %2365 = vmatprep.subr.bf16.mxu0 0
    %2366 = vmatpush1.bf16.msra.mxu0 0
    %2367 = vmatprep.subr.bf16.mxu0 0
    %2368 = vmatpush1.bf16.msra.mxu0 0
    %2369 = vmatprep.subr.bf16.mxu0 0
    %2370 = vmatpush1.bf16.msra.mxu0 0
    %2371 = vmatprep.subr.bf16.mxu0 0
    %2372 = vmatpush1.bf16.msra.mxu0 0
    %2373 = vmatprep.subr.bf16.mxu0 0
    %2374 = vmatpush1.bf16.msra.mxu0 0
    %2375 = vmatprep.mubr.bf16.mxu0 0
    %2376 = vmatmul.mubr.bf16.gmra.mrb[0].mxu0 %v2342
    %v2377 = vpop.f32.mrb[0].mxu0
    %v2378 = vadd.f32 0.0, %v2377
    %v2379 = vpop.f32.mrb[0].mxu0
    %v2380 = vadd.f32 0.0, %v2379
    %v2381 = vpop.f32.mrb[0].mxu0
    %v2382 = vpop.f32.mrb[0].mxu0
    %2383 = vdwg.mxu0
    %2384 = vmatprep.subr.bf16.mxu0 %v953
    %2385 = vmatpush1.bf16.msra.mxu0 %v952
    %2386 = vmatprep.subr.bf16.mxu0 %v957
    %2387 = vmatpush1.bf16.msra.mxu0 %v956
    %2388 = vmatprep.subr.bf16.mxu0 %v961
    %2389 = vmatpush1.bf16.msra.mxu0 %v960
    %2390 = vmatprep.subr.bf16.mxu0 %v965
    %2391 = vmatpush1.bf16.msra.mxu0 %v964
    %2392 = vmatprep.subr.bf16.mxu0 %v969
    %2393 = vmatpush1.bf16.msra.mxu0 %v968
    %2394 = vmatprep.subr.bf16.mxu0 %v973
    %2395 = vmatpush1.bf16.msra.mxu0 %v972
    %2396 = vmatprep.subr.bf16.mxu0 %v977
    %2397 = vmatpush1.bf16.msra.mxu0 %v976
    %2398 = vmatprep.subr.bf16.mxu0 %v981
    %2399 = vmatpush1.bf16.msra.mxu0 %v980
    %2400 = vmatprep.subr.bf16.mxu0 0
    %2401 = vmatpush1.bf16.msra.mxu0 0
    %2402 = vmatprep.subr.bf16.mxu0 0
    %2403 = vmatpush1.bf16.msra.mxu0 0
    %2404 = vmatprep.subr.bf16.mxu0 0
    %2405 = vmatpush1.bf16.msra.mxu0 0
    %2406 = vmatprep.subr.bf16.mxu0 0
    %2407 = vmatpush1.bf16.msra.mxu0 0
    %2408 = vmatprep.subr.bf16.mxu0 0
    %2409 = vmatpush1.bf16.msra.mxu0 0
    %2410 = vmatprep.subr.bf16.mxu0 0
    %2411 = vmatpush1.bf16.msra.mxu0 0
    %2412 = vmatprep.subr.bf16.mxu0 0
    %2413 = vmatpush1.bf16.msra.mxu0 0
    %2414 = vmatprep.subr.bf16.mxu0 0
    %2415 = vmatpush1.bf16.msra.mxu0 0
    %2416 = vmatprep.mubr.bf16.mxu0 0
    %2417 = vmatmul.mubr.bf16.gmra.mrb[0].mxu0 %v2342
    %v2418 = vpop.f32.mrb[0].mxu0
    %v2419 = vadd.f32 0.0, %v2418
    %v2420 = vpop.f32.mrb[0].mxu0
    %v2421 = vadd.f32 0.0, %v2420
    %v2422 = vpop.f32.mrb[0].mxu0
    %v2423 = vpop.f32.mrb[0].mxu0
    %2424 = vdwg.mxu0
    %2425 = vmatprep.subr.bf16.mxu0 %v1193
    %2426 = vmatpush1.bf16.msra.mxu0 %v1192
    %2427 = vmatprep.subr.bf16.mxu0 %v1197
    %2428 = vmatpush1.bf16.msra.mxu0 %v1196
    %2429 = vmatprep.subr.bf16.mxu0 %v1201
    %2430 = vmatpush1.bf16.msra.mxu0 %v1200
    %2431 = vmatprep.subr.bf16.mxu0 %v1205
    %2432 = vmatpush1.bf16.msra.mxu0 %v1204
    %2433 = vmatprep.subr.bf16.mxu0 %v1209
    %2434 = vmatpush1.bf16.msra.mxu0 %v1208
    %2435 = vmatprep.subr.bf16.mxu0 %v1213
    %2436 = vmatpush1.bf16.msra.mxu0 %v1212
    %2437 = vmatprep.subr.bf16.mxu0 %v1217
    %2438 = vmatpush1.bf16.msra.mxu0 %v1216
    %2439 = vmatprep.subr.bf16.mxu0 %v1221
    %2440 = vmatpush1.bf16.msra.mxu0 %v1220
    %2441 = vmatprep.subr.bf16.mxu0 0
    %2442 = vmatpush1.bf16.msra.mxu0 0
    %2443 = vmatprep.subr.bf16.mxu0 0
    %2444 = vmatpush1.bf16.msra.mxu0 0
    %2445 = vmatprep.subr.bf16.mxu0 0
    %2446 = vmatpush1.bf16.msra.mxu0 0
    %2447 = vmatprep.subr.bf16.mxu0 0
    %2448 = vmatpush1.bf16.msra.mxu0 0
    %2449 = vmatprep.subr.bf16.mxu0 0
    %2450 = vmatpush1.bf16.msra.mxu0 0
    %2451 = vmatprep.subr.bf16.mxu0 0
    %2452 = vmatpush1.bf16.msra.mxu0 0
    %2453 = vmatprep.subr.bf16.mxu0 0
    %2454 = vmatpush1.bf16.msra.mxu0 0
    %2455 = vmatprep.subr.bf16.mxu0 0
    %2456 = vmatpush1.bf16.msra.mxu0 0
    %2457 = vmatprep.mubr.bf16.mxu0 0
    %2458 = vmatmul.mubr.bf16.gmra.mrb[0].mxu0 %v2341
    %v2459 = vpop.f32.mrb[0].mxu0
    %v2460 = vadd.f32 %v2378, %v2459
    %v2461 = vpop.f32.mrb[0].mxu0
    %v2462 = vadd.f32 %v2380, %v2461
    %v2463 = vpop.f32.mrb[0].mxu0
    %v2464 = vpop.f32.mrb[0].mxu0
    %2465 = vdwg.mxu0
    %2466 = vmatprep.subr.bf16.mxu0 %v1195
    %2467 = vmatpush1.bf16.msra.mxu0 %v1194
    %2468 = vmatprep.subr.bf16.mxu0 %v1199
    %2469 = vmatpush1.bf16.msra.mxu0 %v1198
    %2470 = vmatprep.subr.bf16.mxu0 %v1203
    %2471 = vmatpush1.bf16.msra.mxu0 %v1202
    %2472 = vmatprep.subr.bf16.mxu0 %v1207
    %2473 = vmatpush1.bf16.msra.mxu0 %v1206
    %2474 = vmatprep.subr.bf16.mxu0 %v1211
    %2475 = vmatpush1.bf16.msra.mxu0 %v1210
    %2476 = vmatprep.subr.bf16.mxu0 %v1215
    %2477 = vmatpush1.bf16.msra.mxu0 %v1214
    %2478 = vmatprep.subr.bf16.mxu0 %v1219
    %2479 = vmatpush1.bf16.msra.mxu0 %v1218
    %2480 = vmatprep.subr.bf16.mxu0 %v1223
    %2481 = vmatpush1.bf16.msra.mxu0 %v1222
    %2482 = vmatprep.subr.bf16.mxu0 0
    %2483 = vmatpush1.bf16.msra.mxu0 0
    %2484 = vmatprep.subr.bf16.mxu0 0
    %2485 = vmatpush1.bf16.msra.mxu0 0
    %2486 = vmatprep.subr.bf16.mxu0 0
    %2487 = vmatpush1.bf16.msra.mxu0 0
    %2488 = vmatprep.subr.bf16.mxu0 0
    %2489 = vmatpush1.bf16.msra.mxu0 0
    %2490 = vmatprep.subr.bf16.mxu0 0
    %2491 = vmatpush1.bf16.msra.mxu0 0
    %2492 = vmatprep.subr.bf16.mxu0 0
    %2493 = vmatpush1.bf16.msra.mxu0 0
    %2494 = vmatprep.subr.bf16.mxu0 0
    %2495 = vmatpush1.bf16.msra.mxu0 0
    %2496 = vmatprep.subr.bf16.mxu0 0
    %2497 = vmatpush1.bf16.msra.mxu0 0
    %2498 = vmatprep.mubr.bf16.mxu0 0
    %2499 = vmatmul.mubr.bf16.gmra.mrb[0].mxu0 %v2341
    %v2500 = vpop.f32.mrb[0].mxu0
    %v2501 = vadd.f32 %v2419, %v2500
    %v2502 = vpop.f32.mrb[0].mxu0
    %v2503 = vadd.f32 %v2421, %v2502
    %v2504 = vpop.f32.mrb[0].mxu0
    %v2505 = vpop.f32.mrb[0].mxu0
    %2506 = vdwg.mxu0
    %v2507 = vadd.f32 %v2460, %v317
    %v2508 = vadd.f32 %v2462, %v321
    %v2509 = vadd.f32 %v2501, %v325
    %v2510 = vadd.f32 %v2503, %v329
    %v2511 = vxor.u32 %v2507, 2147483648
    %v2512 = vxor.u32 %v2508, 2147483648
    %v2513 = vxor.u32 %v2509, 2147483648
    %v2514 = vmul.f32 %v2511, 1.442695
    %v2515 = vpow.pop %v2514
    %v2516 = vmul.f32 %v2512, 1.442695
    %v2517 = vpow.pop %v2516
    %v2518 = vmul.f32 %v2513, 1.442695
    %v2519 = vpow.pop %v2518
    %v2520 = vadd.f32 %v2515, 1.0
    %v2521 = vadd.f32 %v2517, 1.0
    %v2522 = vadd.f32 %v2519, 1.0
    %v2523 = vrcp.pop %v2520
    %v2524 = vmul.f32 1.0, %v2523
    %v2525 = vrcp.pop %v2521
    %v2526 = vmul.f32 1.0, %v2525
    %v2527 = vrcp.pop %v2522
    %v2528 = vmul.f32 1.0, %v2527
    %v2529 = vtanh.pop %v2510
    %v2530 = vmul.f32 %v2526, %v2142
    %v2531 = vmul.f32 %v2524, %v2529
    %v2532 = vadd.f32 %v2530, %v2531
    %v2533 = vtanh.pop %v2532
    %v2534 = vmul.f32 %v2528, %v2533
    %s2535 = scalar_lea.vmem [#allocation6], 24
    %2536 = vst [vmem:[%s2535] sm:$0xff] %v2534
    %s2537 = scalar_lea.vmem [#allocation7], 16
    %v2538 = vld [vmem:[%s2537] sm:$0xf]
    %2539 = vmatprep.subr.bf16.mxu0 %v437
    %2540 = vmatpush1.bf16.msra.mxu0 %v436
    %2541 = vmatprep.subr.bf16.mxu0 %v441
    %2542 = vmatpush1.bf16.msra.mxu0 %v440
    %2543 = vmatprep.subr.bf16.mxu0 %v445
    %2544 = vmatpush1.bf16.msra.mxu0 %v444
    %2545 = vmatprep.subr.bf16.mxu0 %v449
    %2546 = vmatpush1.bf16.msra.mxu0 %v448
    %2547 = vmatprep.subr.bf16.mxu0 %v453
    %2548 = vmatpush1.bf16.msra.mxu0 %v452
    %2549 = vmatprep.subr.bf16.mxu0 %v457
    %2550 = vmatpush1.bf16.msra.mxu0 %v456
    %2551 = vmatprep.subr.bf16.mxu0 %v461
    %2552 = vmatpush1.bf16.msra.mxu0 %v460
    %2553 = vmatprep.subr.bf16.mxu0 %v465
    %2554 = vmatpush1.bf16.msra.mxu0 %v464
    %2555 = vmatprep.subr.bf16.mxu0 0
    %2556 = vmatpush1.bf16.msra.mxu0 0
    %2557 = vmatprep.subr.bf16.mxu0 0
    %2558 = vmatpush1.bf16.msra.mxu0 0
    %2559 = vmatprep.subr.bf16.mxu0 0
    %2560 = vmatpush1.bf16.msra.mxu0 0
    %2561 = vmatprep.subr.bf16.mxu0 0
    %2562 = vmatpush1.bf16.msra.mxu0 0
    %2563 = vmatprep.subr.bf16.mxu0 0
    %2564 = vmatpush1.bf16.msra.mxu0 0
    %2565 = vmatprep.subr.bf16.mxu0 0
    %2566 = vmatpush1.bf16.msra.mxu0 0
    %2567 = vmatprep.subr.bf16.mxu0 0
    %2568 = vmatpush1.bf16.msra.mxu0 0
    %2569 = vmatprep.subr.bf16.mxu0 0
    %2570 = vmatpush1.bf16.msra.mxu0 0
    %2571 = vmatprep.mubr.bf16.mxu0 0
    %2572 = vmatmul.mubr.bf16.gmra.mrb[0].mxu0 %v2341
    %v2573 = vpop.f32.mrb[0].mxu0
    %v2574 = vadd.f32 0.0, %v2573
    %v2575 = vpop.f32.mrb[0].mxu0
    %v2576 = vadd.f32 0.0, %v2575
    %v2577 = vpop.f32.mrb[0].mxu0
    %v2578 = vpop.f32.mrb[0].mxu0
    %2579 = vdwg.mxu0
    %2580 = vmatprep.subr.bf16.mxu0 %v439
    %2581 = vmatpush1.bf16.msra.mxu0 %v438
    %2582 = vmatprep.subr.bf16.mxu0 %v443
    %2583 = vmatpush1.bf16.msra.mxu0 %v442
    %2584 = vmatprep.subr.bf16.mxu0 %v447
    %2585 = vmatpush1.bf16.msra.mxu0 %v446
    %2586 = vmatprep.subr.bf16.mxu0 %v451
    %2587 = vmatpush1.bf16.msra.mxu0 %v450
    %2588 = vmatprep.subr.bf16.mxu0 %v455
    %2589 = vmatpush1.bf16.msra.mxu0 %v454
    %2590 = vmatprep.subr.bf16.mxu0 %v459
    %2591 = vmatpush1.bf16.msra.mxu0 %v458
    %2592 = vmatprep.subr.bf16.mxu0 %v463
    %2593 = vmatpush1.bf16.msra.mxu0 %v462
    %2594 = vmatprep.subr.bf16.mxu0 %v467
    %2595 = vmatpush1.bf16.msra.mxu0 %v466
    %2596 = vmatprep.subr.bf16.mxu0 0
    %2597 = vmatpush1.bf16.msra.mxu0 0
    %2598 = vmatprep.subr.bf16.mxu0 0
    %2599 = vmatpush1.bf16.msra.mxu0 0
    %2600 = vmatprep.subr.bf16.mxu0 0
    %2601 = vmatpush1.bf16.msra.mxu0 0
    %2602 = vmatprep.subr.bf16.mxu0 0
    %2603 = vmatpush1.bf16.msra.mxu0 0
    %2604 = vmatprep.subr.bf16.mxu0 0
    %2605 = vmatpush1.bf16.msra.mxu0 0
    %2606 = vmatprep.subr.bf16.mxu0 0
    %2607 = vmatpush1.bf16.msra.mxu0 0
    %2608 = vmatprep.subr.bf16.mxu0 0
    %2609 = vmatpush1.bf16.msra.mxu0 0
    %2610 = vmatprep.subr.bf16.mxu0 0
    %2611 = vmatpush1.bf16.msra.mxu0 0
    %2612 = vmatprep.mubr.bf16.mxu0 0
    %2613 = vmatmul.mubr.bf16.gmra.mrb[0].mxu0 %v2341
    %v2614 = vpop.f32.mrb[0].mxu0
    %v2615 = vadd.f32 0.0, %v2614
    %v2616 = vpop.f32.mrb[0].mxu0
    %v2617 = vadd.f32 0.0, %v2616
    %v2618 = vpop.f32.mrb[0].mxu0
    %v2619 = vpop.f32.mrb[0].mxu0
    %2620 = vdwg.mxu0
    %2621 = vmatprep.subr.bf16.mxu0 %v679
    %2622 = vmatpush1.bf16.msra.mxu0 %v678
    %2623 = vmatprep.subr.bf16.mxu0 %v683
    %2624 = vmatpush1.bf16.msra.mxu0 %v682
    %2625 = vmatprep.subr.bf16.mxu0 %v687
    %2626 = vmatpush1.bf16.msra.mxu0 %v686
    %2627 = vmatprep.subr.bf16.mxu0 %v691
    %2628 = vmatpush1.bf16.msra.mxu0 %v690
    %2629 = vmatprep.subr.bf16.mxu0 %v695
    %2630 = vmatpush1.bf16.msra.mxu0 %v694
    %2631 = vmatprep.subr.bf16.mxu0 %v699
    %2632 = vmatpush1.bf16.msra.mxu0 %v698
    %2633 = vmatprep.subr.bf16.mxu0 %v703
    %2634 = vmatpush1.bf16.msra.mxu0 %v702
    %2635 = vmatprep.subr.bf16.mxu0 %v707
    %2636 = vmatpush1.bf16.msra.mxu0 %v706
    %2637 = vmatprep.subr.bf16.mxu0 0
    %2638 = vmatpush1.bf16.msra.mxu0 0
    %2639 = vmatprep.subr.bf16.mxu0 0
    %2640 = vmatpush1.bf16.msra.mxu0 0
    %2641 = vmatprep.subr.bf16.mxu0 0
    %2642 = vmatpush1.bf16.msra.mxu0 0
    %2643 = vmatprep.subr.bf16.mxu0 0
    %2644 = vmatpush1.bf16.msra.mxu0 0
    %2645 = vmatprep.subr.bf16.mxu0 0
    %2646 = vmatpush1.bf16.msra.mxu0 0
    %2647 = vmatprep.subr.bf16.mxu0 0
    %2648 = vmatpush1.bf16.msra.mxu0 0
    %2649 = vmatprep.subr.bf16.mxu0 0
    %2650 = vmatpush1.bf16.msra.mxu0 0
    %2651 = vmatprep.subr.bf16.mxu0 0
    %2652 = vmatpush1.bf16.msra.mxu0 0
    %2653 = vmatprep.mubr.bf16.mxu0 0
    %2654 = vmatmul.mubr.bf16.gmra.mrb[0].mxu0 %v2538
    %v2655 = vpop.f32.mrb[0].mxu0
    %v2656 = vadd.f32 %v2574, %v2655
    %v2657 = vpop.f32.mrb[0].mxu0
    %v2658 = vadd.f32 %v2576, %v2657
    %v2659 = vpop.f32.mrb[0].mxu0
    %v2660 = vpop.f32.mrb[0].mxu0
    %2661 = vdwg.mxu0
    %2662 = vmatprep.subr.bf16.mxu0 %v681
    %2663 = vmatpush1.bf16.msra.mxu0 %v680
    %2664 = vmatprep.subr.bf16.mxu0 %v685
    %2665 = vmatpush1.bf16.msra.mxu0 %v684
    %2666 = vmatprep.subr.bf16.mxu0 %v689
    %2667 = vmatpush1.bf16.msra.mxu0 %v688
    %2668 = vmatprep.subr.bf16.mxu0 %v693
    %2669 = vmatpush1.bf16.msra.mxu0 %v692
    %2670 = vmatprep.subr.bf16.mxu0 %v697
    %2671 = vmatpush1.bf16.msra.mxu0 %v696
    %2672 = vmatprep.subr.bf16.mxu0 %v701
    %2673 = vmatpush1.bf16.msra.mxu0 %v700
    %2674 = vmatprep.subr.bf16.mxu0 %v705
    %2675 = vmatpush1.bf16.msra.mxu0 %v704
    %2676 = vmatprep.subr.bf16.mxu0 %v709
    %2677 = vmatpush1.bf16.msra.mxu0 %v708
    %2678 = vmatprep.subr.bf16.mxu0 0
    %2679 = vmatpush1.bf16.msra.mxu0 0
    %2680 = vmatprep.subr.bf16.mxu0 0
    %2681 = vmatpush1.bf16.msra.mxu0 0
    %2682 = vmatprep.subr.bf16.mxu0 0
    %2683 = vmatpush1.bf16.msra.mxu0 0
    %2684 = vmatprep.subr.bf16.mxu0 0
    %2685 = vmatpush1.bf16.msra.mxu0 0
    %2686 = vmatprep.subr.bf16.mxu0 0
    %2687 = vmatpush1.bf16.msra.mxu0 0
    %2688 = vmatprep.subr.bf16.mxu0 0
    %2689 = vmatpush1.bf16.msra.mxu0 0
    %2690 = vmatprep.subr.bf16.mxu0 0
    %2691 = vmatpush1.bf16.msra.mxu0 0
    %2692 = vmatprep.subr.bf16.mxu0 0
    %2693 = vmatpush1.bf16.msra.mxu0 0
    %2694 = vmatprep.mubr.bf16.mxu0 0
    %2695 = vmatmul.mubr.bf16.gmra.mrb[0].mxu0 %v2538
    %v2696 = vpop.f32.mrb[0].mxu0
    %v2697 = vadd.f32 %v2615, %v2696
    %v2698 = vpop.f32.mrb[0].mxu0
    %v2699 = vadd.f32 %v2617, %v2698
    %v2700 = vpop.f32.mrb[0].mxu0
    %v2701 = vpop.f32.mrb[0].mxu0
    %2702 = vdwg.mxu0
    %v2703 = vadd.f32 %v2656, %v295
    %v2704 = vadd.f32 %v2658, %v299
    %v2705 = vadd.f32 %v2697, %v303
    %v2706 = vadd.f32 %v2699, %v307
    %v2707 = vxor.u32 %v2703, 2147483648
    %v2708 = vxor.u32 %v2704, 2147483648
    %v2709 = vxor.u32 %v2705, 2147483648
    %v2710 = vmul.f32 %v2707, 1.442695
    %v2711 = vpow.pop %v2710
    %v2712 = vmul.f32 %v2708, 1.442695
    %v2713 = vpow.pop %v2712
    %v2714 = vmul.f32 %v2709, 1.442695
    %v2715 = vpow.pop %v2714
    %v2716 = vadd.f32 %v2711, 1.0
    %v2717 = vadd.f32 %v2713, 1.0
    %v2718 = vadd.f32 %v2715, 1.0
    %v2719 = vrcp.pop %v2716
    %v2720 = vmul.f32 1.0, %v2719
    %v2721 = vrcp.pop %v2717
    %v2722 = vmul.f32 1.0, %v2721
    %v2723 = vrcp.pop %v2718
    %v2724 = vmul.f32 1.0, %v2723
    %v2725 = vtanh.pop %v2706
    %v2726 = vmul.f32 %v2722, %v2338
    %v2727 = vmul.f32 %v2720, %v2725
    %v2728 = vadd.f32 %v2726, %v2727
    %v2729 = vtanh.pop %v2728
    %v2730 = vmul.f32 %v2724, %v2729
    %v2731 = vpack.c.bf16 %v2730, %v2730
    %v2732 = vpack.c.bf16 %v2534, %v2534
    %2733 = vmatprep.subr.bf16.mxu0 %v951
    %2734 = vmatpush1.bf16.msra.mxu0 %v950
    %2735 = vmatprep.subr.bf16.mxu0 %v955
    %2736 = vmatpush1.bf16.msra.mxu0 %v954
    %2737 = vmatprep.subr.bf16.mxu0 %v959
    %2738 = vmatpush1.bf16.msra.mxu0 %v958
    %2739 = vmatprep.subr.bf16.mxu0 %v963
    %2740 = vmatpush1.bf16.msra.mxu0 %v962
    %2741 = vmatprep.subr.bf16.mxu0 %v967
    %2742 = vmatpush1.bf16.msra.mxu0 %v966
    %2743 = vmatprep.subr.bf16.mxu0 %v971
    %2744 = vmatpush1.bf16.msra.mxu0 %v970
    %2745 = vmatprep.subr.bf16.mxu0 %v975
    %2746 = vmatpush1.bf16.msra.mxu0 %v974
    %2747 = vmatprep.subr.bf16.mxu0 %v979
    %2748 = vmatpush1.bf16.msra.mxu0 %v978
    %2749 = vmatprep.subr.bf16.mxu0 0
    %2750 = vmatpush1.bf16.msra.mxu0 0
    %2751 = vmatprep.subr.bf16.mxu0 0
    %2752 = vmatpush1.bf16.msra.mxu0 0
    %2753 = vmatprep.subr.bf16.mxu0 0
    %2754 = vmatpush1.bf16.msra.mxu0 0
    %2755 = vmatprep.subr.bf16.mxu0 0
    %2756 = vmatpush1.bf16.msra.mxu0 0
    %2757 = vmatprep.subr.bf16.mxu0 0
    %2758 = vmatpush1.bf16.msra.mxu0 0
    %2759 = vmatprep.subr.bf16.mxu0 0
    %2760 = vmatpush1.bf16.msra.mxu0 0
    %2761 = vmatprep.subr.bf16.mxu0 0
    %2762 = vmatpush1.bf16.msra.mxu0 0
    %2763 = vmatprep.subr.bf16.mxu0 0
    %2764 = vmatpush1.bf16.msra.mxu0 0
    %2765 = vmatprep.mubr.bf16.mxu0 0
    %2766 = vmatmul.mubr.bf16.gmra.mrb[0].mxu0 %v2732
    %v2767 = vpop.f32.mrb[0].mxu0
    %v2768 = vadd.f32 0.0, %v2767
    %v2769 = vpop.f32.mrb[0].mxu0
    %v2770 = vadd.f32 0.0, %v2769
    %v2771 = vpop.f32.mrb[0].mxu0
    %v2772 = vpop.f32.mrb[0].mxu0
    %2773 = vdwg.mxu0
    %2774 = vmatprep.subr.bf16.mxu0 %v953
    %2775 = vmatpush1.bf16.msra.mxu0 %v952
    %2776 = vmatprep.subr.bf16.mxu0 %v957
    %2777 = vmatpush1.bf16.msra.mxu0 %v956
    %2778 = vmatprep.subr.bf16.mxu0 %v961
    %2779 = vmatpush1.bf16.msra.mxu0 %v960
    %2780 = vmatprep.subr.bf16.mxu0 %v965
    %2781 = vmatpush1.bf16.msra.mxu0 %v964
    %2782 = vmatprep.subr.bf16.mxu0 %v969
    %2783 = vmatpush1.bf16.msra.mxu0 %v968
    %2784 = vmatprep.subr.bf16.mxu0 %v973
    %2785 = vmatpush1.bf16.msra.mxu0 %v972
    %2786 = vmatprep.subr.bf16.mxu0 %v977
    %2787 = vmatpush1.bf16.msra.mxu0 %v976
    %2788 = vmatprep.subr.bf16.mxu0 %v981
    %2789 = vmatpush1.bf16.msra.mxu0 %v980
    %2790 = vmatprep.subr.bf16.mxu0 0
    %2791 = vmatpush1.bf16.msra.mxu0 0
    %2792 = vmatprep.subr.bf16.mxu0 0
    %2793 = vmatpush1.bf16.msra.mxu0 0
    %2794 = vmatprep.subr.bf16.mxu0 0
    %2795 = vmatpush1.bf16.msra.mxu0 0
    %2796 = vmatprep.subr.bf16.mxu0 0
    %2797 = vmatpush1.bf16.msra.mxu0 0
    %2798 = vmatprep.subr.bf16.mxu0 0
    %2799 = vmatpush1.bf16.msra.mxu0 0
    %2800 = vmatprep.subr.bf16.mxu0 0
    %2801 = vmatpush1.bf16.msra.mxu0 0
    %2802 = vmatprep.subr.bf16.mxu0 0
    %2803 = vmatpush1.bf16.msra.mxu0 0
    %2804 = vmatprep.subr.bf16.mxu0 0
    %2805 = vmatpush1.bf16.msra.mxu0 0
    %2806 = vmatprep.mubr.bf16.mxu0 0
    %2807 = vmatmul.mubr.bf16.gmra.mrb[0].mxu0 %v2732
    %v2808 = vpop.f32.mrb[0].mxu0
    %v2809 = vadd.f32 0.0, %v2808
    %v2810 = vpop.f32.mrb[0].mxu0
    %v2811 = vadd.f32 0.0, %v2810
    %v2812 = vpop.f32.mrb[0].mxu0
    %v2813 = vpop.f32.mrb[0].mxu0
    %2814 = vdwg.mxu0
    %2815 = vmatprep.subr.bf16.mxu0 %v1193
    %2816 = vmatpush1.bf16.msra.mxu0 %v1192
    %2817 = vmatprep.subr.bf16.mxu0 %v1197
    %2818 = vmatpush1.bf16.msra.mxu0 %v1196
    %2819 = vmatprep.subr.bf16.mxu0 %v1201
    %2820 = vmatpush1.bf16.msra.mxu0 %v1200
    %2821 = vmatprep.subr.bf16.mxu0 %v1205
    %2822 = vmatpush1.bf16.msra.mxu0 %v1204
    %2823 = vmatprep.subr.bf16.mxu0 %v1209
    %2824 = vmatpush1.bf16.msra.mxu0 %v1208
    %2825 = vmatprep.subr.bf16.mxu0 %v1213
    %2826 = vmatpush1.bf16.msra.mxu0 %v1212
    %2827 = vmatprep.subr.bf16.mxu0 %v1217
    %2828 = vmatpush1.bf16.msra.mxu0 %v1216
    %2829 = vmatprep.subr.bf16.mxu0 %v1221
    %2830 = vmatpush1.bf16.msra.mxu0 %v1220
    %2831 = vmatprep.subr.bf16.mxu0 0
    %2832 = vmatpush1.bf16.msra.mxu0 0
    %2833 = vmatprep.subr.bf16.mxu0 0
    %2834 = vmatpush1.bf16.msra.mxu0 0
    %2835 = vmatprep.subr.bf16.mxu0 0
    %2836 = vmatpush1.bf16.msra.mxu0 0
    %2837 = vmatprep.subr.bf16.mxu0 0
    %2838 = vmatpush1.bf16.msra.mxu0 0
    %2839 = vmatprep.subr.bf16.mxu0 0
    %2840 = vmatpush1.bf16.msra.mxu0 0
    %2841 = vmatprep.subr.bf16.mxu0 0
    %2842 = vmatpush1.bf16.msra.mxu0 0
    %2843 = vmatprep.subr.bf16.mxu0 0
    %2844 = vmatpush1.bf16.msra.mxu0 0
    %2845 = vmatprep.subr.bf16.mxu0 0
    %2846 = vmatpush1.bf16.msra.mxu0 0
    %2847 = vmatprep.mubr.bf16.mxu0 0
    %2848 = vmatmul.mubr.bf16.gmra.mrb[0].mxu0 %v2731
    %v2849 = vpop.f32.mrb[0].mxu0
    %v2850 = vadd.f32 %v2768, %v2849
    %v2851 = vpop.f32.mrb[0].mxu0
    %v2852 = vadd.f32 %v2770, %v2851
    %v2853 = vpop.f32.mrb[0].mxu0
    %v2854 = vpop.f32.mrb[0].mxu0
    %2855 = vdwg.mxu0
    %2856 = vmatprep.subr.bf16.mxu0 %v1195
    %2857 = vmatpush1.bf16.msra.mxu0 %v1194
    %2858 = vmatprep.subr.bf16.mxu0 %v1199
    %2859 = vmatpush1.bf16.msra.mxu0 %v1198
    %2860 = vmatprep.subr.bf16.mxu0 %v1203
    %2861 = vmatpush1.bf16.msra.mxu0 %v1202
    %2862 = vmatprep.subr.bf16.mxu0 %v1207
    %2863 = vmatpush1.bf16.msra.mxu0 %v1206
    %2864 = vmatprep.subr.bf16.mxu0 %v1211
    %2865 = vmatpush1.bf16.msra.mxu0 %v1210
    %2866 = vmatprep.subr.bf16.mxu0 %v1215
    %2867 = vmatpush1.bf16.msra.mxu0 %v1214
    %2868 = vmatprep.subr.bf16.mxu0 %v1219
    %2869 = vmatpush1.bf16.msra.mxu0 %v1218
    %2870 = vmatprep.subr.bf16.mxu0 %v1223
    %2871 = vmatpush1.bf16.msra.mxu0 %v1222
    %2872 = vmatprep.subr.bf16.mxu0 0
    %2873 = vmatpush1.bf16.msra.mxu0 0
    %2874 = vmatprep.subr.bf16.mxu0 0
    %2875 = vmatpush1.bf16.msra.mxu0 0
    %2876 = vmatprep.subr.bf16.mxu0 0
    %2877 = vmatpush1.bf16.msra.mxu0 0
    %2878 = vmatprep.subr.bf16.mxu0 0
    %2879 = vmatpush1.bf16.msra.mxu0 0
    %2880 = vmatprep.subr.bf16.mxu0 0
    %2881 = vmatpush1.bf16.msra.mxu0 0
    %2882 = vmatprep.subr.bf16.mxu0 0
    %2883 = vmatpush1.bf16.msra.mxu0 0
    %2884 = vmatprep.subr.bf16.mxu0 0
    %2885 = vmatpush1.bf16.msra.mxu0 0
    %2886 = vmatprep.subr.bf16.mxu0 0
    %2887 = vmatpush1.bf16.msra.mxu0 0
    %2888 = vmatprep.mubr.bf16.mxu0 0
    %2889 = vmatmul.mubr.bf16.gmra.mrb[0].mxu0 %v2731
    %v2890 = vpop.f32.mrb[0].mxu0
    %v2891 = vadd.f32 %v2809, %v2890
    %v2892 = vpop.f32.mrb[0].mxu0
    %v2893 = vadd.f32 %v2811, %v2892
    %v2894 = vpop.f32.mrb[0].mxu0
    %v2895 = vpop.f32.mrb[0].mxu0
    %2896 = vdwg.mxu0
    %v2897 = vadd.f32 %v2850, %v317
    %v2898 = vadd.f32 %v2852, %v321
    %v2899 = vadd.f32 %v2891, %v325
    %v2900 = vadd.f32 %v2893, %v329
    %v2901 = vxor.u32 %v2897, 2147483648
    %v2902 = vxor.u32 %v2898, 2147483648
    %v2903 = vxor.u32 %v2899, 2147483648
    %v2904 = vmul.f32 %v2901, 1.442695
    %v2905 = vpow.pop %v2904
    %v2906 = vmul.f32 %v2902, 1.442695
    %v2907 = vpow.pop %v2906
    %v2908 = vmul.f32 %v2903, 1.442695
    %v2909 = vpow.pop %v2908
    %v2910 = vadd.f32 %v2905, 1.0
    %v2911 = vadd.f32 %v2907, 1.0
    %v2912 = vadd.f32 %v2909, 1.0
    %v2913 = vrcp.pop %v2910
    %v2914 = vmul.f32 1.0, %v2913
    %v2915 = vrcp.pop %v2911
    %v2916 = vmul.f32 1.0, %v2915
    %v2917 = vrcp.pop %v2912
    %v2918 = vmul.f32 1.0, %v2917
    %v2919 = vtanh.pop %v2900
    %v2920 = vmul.f32 %v2916, %v2532
    %v2921 = vmul.f32 %v2914, %v2919
    %v2922 = vadd.f32 %v2920, %v2921
    %v2923 = vtanh.pop %v2922
    %v2924 = vmul.f32 %v2918, %v2923
    %s2925 = scalar_lea.vmem [#allocation6], 32
    %2926 = vst [vmem:[%s2925] sm:$0xff] %v2924
    %s2927 = scalar_lea.vmem [#allocation7], 20
    %v2928 = vld [vmem:[%s2927] sm:$0xf]
    %2929 = vmatprep.subr.bf16.mxu0 %v437
    %2930 = vmatpush1.bf16.msra.mxu0 %v436
    %2931 = vmatprep.subr.bf16.mxu0 %v441
    %2932 = vmatpush1.bf16.msra.mxu0 %v440
    %2933 = vmatprep.subr.bf16.mxu0 %v445
    %2934 = vmatpush1.bf16.msra.mxu0 %v444
    %2935 = vmatprep.subr.bf16.mxu0 %v449
    %2936 = vmatpush1.bf16.msra.mxu0 %v448
    %2937 = vmatprep.subr.bf16.mxu0 %v453
    %2938 = vmatpush1.bf16.msra.mxu0 %v452
    %2939 = vmatprep.subr.bf16.mxu0 %v457
    %2940 = vmatpush1.bf16.msra.mxu0 %v456
    %2941 = vmatprep.subr.bf16.mxu0 %v461
    %2942 = vmatpush1.bf16.msra.mxu0 %v460
    %2943 = vmatprep.subr.bf16.mxu0 %v465
    %2944 = vmatpush1.bf16.msra.mxu0 %v464
    %2945 = vmatprep.subr.bf16.mxu0 0
    %2946 = vmatpush1.bf16.msra.mxu0 0
    %2947 = vmatprep.subr.bf16.mxu0 0
    %2948 = vmatpush1.bf16.msra.mxu0 0
    %2949 = vmatprep.subr.bf16.mxu0 0
    %2950 = vmatpush1.bf16.msra.mxu0 0
    %2951 = vmatprep.subr.bf16.mxu0 0
    %2952 = vmatpush1.bf16.msra.mxu0 0
    %2953 = vmatprep.subr.bf16.mxu0 0
    %2954 = vmatpush1.bf16.msra.mxu0 0
    %2955 = vmatprep.subr.bf16.mxu0 0
    %2956 = vmatpush1.bf16.msra.mxu0 0
    %2957 = vmatprep.subr.bf16.mxu0 0
    %2958 = vmatpush1.bf16.msra.mxu0 0
    %2959 = vmatprep.subr.bf16.mxu0 0
    %2960 = vmatpush1.bf16.msra.mxu0 0
    %2961 = vmatprep.mubr.bf16.mxu0 0
    %2962 = vmatmul.mubr.bf16.gmra.mrb[0].mxu0 %v2731
    %v2963 = vpop.f32.mrb[0].mxu0
    %v2964 = vadd.f32 0.0, %v2963
    %v2965 = vpop.f32.mrb[0].mxu0
    %v2966 = vadd.f32 0.0, %v2965
    %v2967 = vpop.f32.mrb[0].mxu0
    %v2968 = vpop.f32.mrb[0].mxu0
    %2969 = vdwg.mxu0
    %2970 = vmatprep.subr.bf16.mxu0 %v439
    %2971 = vmatpush1.bf16.msra.mxu0 %v438
    %2972 = vmatprep.subr.bf16.mxu0 %v443
    %2973 = vmatpush1.bf16.msra.mxu0 %v442
    %2974 = vmatprep.subr.bf16.mxu0 %v447
    %2975 = vmatpush1.bf16.msra.mxu0 %v446
    %2976 = vmatprep.subr.bf16.mxu0 %v451
    %2977 = vmatpush1.bf16.msra.mxu0 %v450
    %2978 = vmatprep.subr.bf16.mxu0 %v455
    %2979 = vmatpush1.bf16.msra.mxu0 %v454
    %2980 = vmatprep.subr.bf16.mxu0 %v459
    %2981 = vmatpush1.bf16.msra.mxu0 %v458
    %2982 = vmatprep.subr.bf16.mxu0 %v463
    %2983 = vmatpush1.bf16.msra.mxu0 %v462
    %2984 = vmatprep.subr.bf16.mxu0 %v467
    %2985 = vmatpush1.bf16.msra.mxu0 %v466
    %2986 = vmatprep.subr.bf16.mxu0 0
    %2987 = vmatpush1.bf16.msra.mxu0 0
    %2988 = vmatprep.subr.bf16.mxu0 0
    %2989 = vmatpush1.bf16.msra.mxu0 0
    %2990 = vmatprep.subr.bf16.mxu0 0
    %2991 = vmatpush1.bf16.msra.mxu0 0
    %2992 = vmatprep.subr.bf16.mxu0 0
    %2993 = vmatpush1.bf16.msra.mxu0 0
    %2994 = vmatprep.subr.bf16.mxu0 0
    %2995 = vmatpush1.bf16.msra.mxu0 0
    %2996 = vmatprep.subr.bf16.mxu0 0
    %2997 = vmatpush1.bf16.msra.mxu0 0
    %2998 = vmatprep.subr.bf16.mxu0 0
    %2999 = vmatpush1.bf16.msra.mxu0 0
    %3000 = vmatprep.subr.bf16.mxu0 0
    %3001 = vmatpush1.bf16.msra.mxu0 0
    %3002 = vmatprep.mubr.bf16.mxu0 0
    %3003 = vmatmul.mubr.bf16.gmra.mrb[0].mxu0 %v2731
    %v3004 = vpop.f32.mrb[0].mxu0
    %v3005 = vadd.f32 0.0, %v3004
    %v3006 = vpop.f32.mrb[0].mxu0
    %v3007 = vadd.f32 0.0, %v3006
    %v3008 = vpop.f32.mrb[0].mxu0
    %v3009 = vpop.f32.mrb[0].mxu0
    %3010 = vdwg.mxu0
    %3011 = vmatprep.subr.bf16.mxu0 %v679
    %3012 = vmatpush1.bf16.msra.mxu0 %v678
    %3013 = vmatprep.subr.bf16.mxu0 %v683
    %3014 = vmatpush1.bf16.msra.mxu0 %v682
    %3015 = vmatprep.subr.bf16.mxu0 %v687
    %3016 = vmatpush1.bf16.msra.mxu0 %v686
    %3017 = vmatprep.subr.bf16.mxu0 %v691
    %3018 = vmatpush1.bf16.msra.mxu0 %v690
    %3019 = vmatprep.subr.bf16.mxu0 %v695
    %3020 = vmatpush1.bf16.msra.mxu0 %v694
    %3021 = vmatprep.subr.bf16.mxu0 %v699
    %3022 = vmatpush1.bf16.msra.mxu0 %v698
    %3023 = vmatprep.subr.bf16.mxu0 %v703
    %3024 = vmatpush1.bf16.msra.mxu0 %v702
    %3025 = vmatprep.subr.bf16.mxu0 %v707
    %3026 = vmatpush1.bf16.msra.mxu0 %v706
    %3027 = vmatprep.subr.bf16.mxu0 0
    %3028 = vmatpush1.bf16.msra.mxu0 0
    %3029 = vmatprep.subr.bf16.mxu0 0
    %3030 = vmatpush1.bf16.msra.mxu0 0
    %3031 = vmatprep.subr.bf16.mxu0 0
    %3032 = vmatpush1.bf16.msra.mxu0 0
    %3033 = vmatprep.subr.bf16.mxu0 0
    %3034 = vmatpush1.bf16.msra.mxu0 0
    %3035 = vmatprep.subr.bf16.mxu0 0
    %3036 = vmatpush1.bf16.msra.mxu0 0
    %3037 = vmatprep.subr.bf16.mxu0 0
    %3038 = vmatpush1.bf16.msra.mxu0 0
    %3039 = vmatprep.subr.bf16.mxu0 0
    %3040 = vmatpush1.bf16.msra.mxu0 0
    %3041 = vmatprep.subr.bf16.mxu0 0
    %3042 = vmatpush1.bf16.msra.mxu0 0
    %3043 = vmatprep.mubr.bf16.mxu0 0
    %3044 = vmatmul.mubr.bf16.gmra.mrb[0].mxu0 %v2928
    %v3045 = vpop.f32.mrb[0].mxu0
    %v3046 = vadd.f32 %v2964, %v3045
    %v3047 = vpop.f32.mrb[0].mxu0
    %v3048 = vadd.f32 %v2966, %v3047
    %v3049 = vpop.f32.mrb[0].mxu0
    %v3050 = vpop.f32.mrb[0].mxu0
    %3051 = vdwg.mxu0
    %3052 = vmatprep.subr.bf16.mxu0 %v681
    %3053 = vmatpush1.bf16.msra.mxu0 %v680
    %3054 = vmatprep.subr.bf16.mxu0 %v685
    %3055 = vmatpush1.bf16.msra.mxu0 %v684
    %3056 = vmatprep.subr.bf16.mxu0 %v689
    %3057 = vmatpush1.bf16.msra.mxu0 %v688
    %3058 = vmatprep.subr.bf16.mxu0 %v693
    %3059 = vmatpush1.bf16.msra.mxu0 %v692
    %3060 = vmatprep.subr.bf16.mxu0 %v697
    %3061 = vmatpush1.bf16.msra.mxu0 %v696
    %3062 = vmatprep.subr.bf16.mxu0 %v701
    %3063 = vmatpush1.bf16.msra.mxu0 %v700
    %3064 = vmatprep.subr.bf16.mxu0 %v705
    %3065 = vmatpush1.bf16.msra.mxu0 %v704
    %3066 = vmatprep.subr.bf16.mxu0 %v709
    %3067 = vmatpush1.bf16.msra.mxu0 %v708
    %3068 = vmatprep.subr.bf16.mxu0 0
    %3069 = vmatpush1.bf16.msra.mxu0 0
    %3070 = vmatprep.subr.bf16.mxu0 0
    %3071 = vmatpush1.bf16.msra.mxu0 0
    %3072 = vmatprep.subr.bf16.mxu0 0
    %3073 = vmatpush1.bf16.msra.mxu0 0
    %3074 = vmatprep.subr.bf16.mxu0 0
    %3075 = vmatpush1.bf16.msra.mxu0 0
    %3076 = vmatprep.subr.bf16.mxu0 0
    %3077 = vmatpush1.bf16.msra.mxu0 0
    %3078 = vmatprep.subr.bf16.mxu0 0
    %3079 = vmatpush1.bf16.msra.mxu0 0
    %3080 = vmatprep.subr.bf16.mxu0 0
    %3081 = vmatpush1.bf16.msra.mxu0 0
    %3082 = vmatprep.subr.bf16.mxu0 0
    %3083 = vmatpush1.bf16.msra.mxu0 0
    %3084 = vmatprep.mubr.bf16.mxu0 0
    %3085 = vmatmul.mubr.bf16.gmra.mrb[0].mxu0 %v2928
    %v3086 = vpop.f32.mrb[0].mxu0
    %v3087 = vadd.f32 %v3005, %v3086
    %v3088 = vpop.f32.mrb[0].mxu0
    %v3089 = vadd.f32 %v3007, %v3088
    %v3090 = vpop.f32.mrb[0].mxu0
    %v3091 = vpop.f32.mrb[0].mxu0
    %3092 = vdwg.mxu0
    %v3093 = vadd.f32 %v3046, %v295
    %v3094 = vadd.f32 %v3048, %v299
    %v3095 = vadd.f32 %v3087, %v303
    %v3096 = vadd.f32 %v3089, %v307
    %v3097 = vxor.u32 %v3093, 2147483648
    %v3098 = vxor.u32 %v3094, 2147483648
    %v3099 = vxor.u32 %v3095, 2147483648
    %v3100 = vmul.f32 %v3097, 1.442695
    %v3101 = vpow.pop %v3100
    %v3102 = vmul.f32 %v3098, 1.442695
    %v3103 = vpow.pop %v3102
    %v3104 = vmul.f32 %v3099, 1.442695
    %v3105 = vpow.pop %v3104
    %v3106 = vadd.f32 %v3101, 1.0
    %v3107 = vadd.f32 %v3103, 1.0
    %v3108 = vadd.f32 %v3105, 1.0
    %v3109 = vrcp.pop %v3106
    %v3110 = vmul.f32 1.0, %v3109
    %v3111 = vrcp.pop %v3107
    %v3112 = vmul.f32 1.0, %v3111
    %v3113 = vrcp.pop %v3108
    %v3114 = vmul.f32 1.0, %v3113
    %v3115 = vtanh.pop %v3096
    %v3116 = vmul.f32 %v3112, %v2728
    %v3117 = vmul.f32 %v3110, %v3115
    %v3118 = vadd.f32 %v3116, %v3117
    %v3119 = vtanh.pop %v3118
    %v3120 = vmul.f32 %v3114, %v3119
    %v3121 = vpack.c.bf16 %v3120, %v3120
    %v3122 = vpack.c.bf16 %v2924, %v2924
    %3123 = vmatprep.subr.bf16.mxu0 %v951
    %3124 = vmatpush1.bf16.msra.mxu0 %v950
    %3125 = vmatprep.subr.bf16.mxu0 %v955
    %3126 = vmatpush1.bf16.msra.mxu0 %v954
    %3127 = vmatprep.subr.bf16.mxu0 %v959
    %3128 = vmatpush1.bf16.msra.mxu0 %v958
    %3129 = vmatprep.subr.bf16.mxu0 %v963
    %3130 = vmatpush1.bf16.msra.mxu0 %v962
    %3131 = vmatprep.subr.bf16.mxu0 %v967
    %3132 = vmatpush1.bf16.msra.mxu0 %v966
    %3133 = vmatprep.subr.bf16.mxu0 %v971
    %3134 = vmatpush1.bf16.msra.mxu0 %v970
    %3135 = vmatprep.subr.bf16.mxu0 %v975
    %3136 = vmatpush1.bf16.msra.mxu0 %v974
    %3137 = vmatprep.subr.bf16.mxu0 %v979
    %3138 = vmatpush1.bf16.msra.mxu0 %v978
    %3139 = vmatprep.subr.bf16.mxu0 0
    %3140 = vmatpush1.bf16.msra.mxu0 0
    %3141 = vmatprep.subr.bf16.mxu0 0
    %3142 = vmatpush1.bf16.msra.mxu0 0
    %3143 = vmatprep.subr.bf16.mxu0 0
    %3144 = vmatpush1.bf16.msra.mxu0 0
    %3145 = vmatprep.subr.bf16.mxu0 0
    %3146 = vmatpush1.bf16.msra.mxu0 0
    %3147 = vmatprep.subr.bf16.mxu0 0
    %3148 = vmatpush1.bf16.msra.mxu0 0
    %3149 = vmatprep.subr.bf16.mxu0 0
    %3150 = vmatpush1.bf16.msra.mxu0 0
    %3151 = vmatprep.subr.bf16.mxu0 0
    %3152 = vmatpush1.bf16.msra.mxu0 0
    %3153 = vmatprep.subr.bf16.mxu0 0
    %3154 = vmatpush1.bf16.msra.mxu0 0
    %3155 = vmatprep.mubr.bf16.mxu0 0
    %3156 = vmatmul.mubr.bf16.gmra.mrb[0].mxu0 %v3122
    %v3157 = vpop.f32.mrb[0].mxu0
    %v3158 = vadd.f32 0.0, %v3157
    %v3159 = vpop.f32.mrb[0].mxu0
    %v3160 = vadd.f32 0.0, %v3159
    %v3161 = vpop.f32.mrb[0].mxu0
    %v3162 = vpop.f32.mrb[0].mxu0
    %3163 = vdwg.mxu0
    %3164 = vmatprep.subr.bf16.mxu0 %v953
    %3165 = vmatpush1.bf16.msra.mxu0 %v952
    %3166 = vmatprep.subr.bf16.mxu0 %v957
    %3167 = vmatpush1.bf16.msra.mxu0 %v956
    %3168 = vmatprep.subr.bf16.mxu0 %v961
    %3169 = vmatpush1.bf16.msra.mxu0 %v960
    %3170 = vmatprep.subr.bf16.mxu0 %v965
    %3171 = vmatpush1.bf16.msra.mxu0 %v964
    %3172 = vmatprep.subr.bf16.mxu0 %v969
    %3173 = vmatpush1.bf16.msra.mxu0 %v968
    %3174 = vmatprep.subr.bf16.mxu0 %v973
    %3175 = vmatpush1.bf16.msra.mxu0 %v972
    %3176 = vmatprep.subr.bf16.mxu0 %v977
    %3177 = vmatpush1.bf16.msra.mxu0 %v976
    %3178 = vmatprep.subr.bf16.mxu0 %v981
    %3179 = vmatpush1.bf16.msra.mxu0 %v980
    %3180 = vmatprep.subr.bf16.mxu0 0
    %3181 = vmatpush1.bf16.msra.mxu0 0
    %3182 = vmatprep.subr.bf16.mxu0 0
    %3183 = vmatpush1.bf16.msra.mxu0 0
    %3184 = vmatprep.subr.bf16.mxu0 0
    %3185 = vmatpush1.bf16.msra.mxu0 0
    %3186 = vmatprep.subr.bf16.mxu0 0
    %3187 = vmatpush1.bf16.msra.mxu0 0
    %3188 = vmatprep.subr.bf16.mxu0 0
    %3189 = vmatpush1.bf16.msra.mxu0 0
    %3190 = vmatprep.subr.bf16.mxu0 0
    %3191 = vmatpush1.bf16.msra.mxu0 0
    %3192 = vmatprep.subr.bf16.mxu0 0
    %3193 = vmatpush1.bf16.msra.mxu0 0
    %3194 = vmatprep.subr.bf16.mxu0 0
    %3195 = vmatpush1.bf16.msra.mxu0 0
    %3196 = vmatprep.mubr.bf16.mxu0 0
    %3197 = vmatmul.mubr.bf16.gmra.mrb[0].mxu0 %v3122
    %v3198 = vpop.f32.mrb[0].mxu0
    %v3199 = vadd.f32 0.0, %v3198
    %v3200 = vpop.f32.mrb[0].mxu0
    %v3201 = vadd.f32 0.0, %v3200
    %v3202 = vpop.f32.mrb[0].mxu0
    %v3203 = vpop.f32.mrb[0].mxu0
    %3204 = vdwg.mxu0
    %3205 = vmatprep.subr.bf16.mxu0 %v1193
    %3206 = vmatpush1.bf16.msra.mxu0 %v1192
    %3207 = vmatprep.subr.bf16.mxu0 %v1197
    %3208 = vmatpush1.bf16.msra.mxu0 %v1196
    %3209 = vmatprep.subr.bf16.mxu0 %v1201
    %3210 = vmatpush1.bf16.msra.mxu0 %v1200
    %3211 = vmatprep.subr.bf16.mxu0 %v1205
    %3212 = vmatpush1.bf16.msra.mxu0 %v1204
    %3213 = vmatprep.subr.bf16.mxu0 %v1209
    %3214 = vmatpush1.bf16.msra.mxu0 %v1208
    %3215 = vmatprep.subr.bf16.mxu0 %v1213
    %3216 = vmatpush1.bf16.msra.mxu0 %v1212
    %3217 = vmatprep.subr.bf16.mxu0 %v1217
    %3218 = vmatpush1.bf16.msra.mxu0 %v1216
    %3219 = vmatprep.subr.bf16.mxu0 %v1221
    %3220 = vmatpush1.bf16.msra.mxu0 %v1220
    %3221 = vmatprep.subr.bf16.mxu0 0
    %3222 = vmatpush1.bf16.msra.mxu0 0
    %3223 = vmatprep.subr.bf16.mxu0 0
    %3224 = vmatpush1.bf16.msra.mxu0 0
    %3225 = vmatprep.subr.bf16.mxu0 0
    %3226 = vmatpush1.bf16.msra.mxu0 0
    %3227 = vmatprep.subr.bf16.mxu0 0
    %3228 = vmatpush1.bf16.msra.mxu0 0
    %3229 = vmatprep.subr.bf16.mxu0 0
    %3230 = vmatpush1.bf16.msra.mxu0 0
    %3231 = vmatprep.subr.bf16.mxu0 0
    %3232 = vmatpush1.bf16.msra.mxu0 0
    %3233 = vmatprep.subr.bf16.mxu0 0
    %3234 = vmatpush1.bf16.msra.mxu0 0
    %3235 = vmatprep.subr.bf16.mxu0 0
    %3236 = vmatpush1.bf16.msra.mxu0 0
    %3237 = vmatprep.mubr.bf16.mxu0 0
    %3238 = vmatmul.mubr.bf16.gmra.mrb[0].mxu0 %v3121
    %v3239 = vpop.f32.mrb[0].mxu0
    %v3240 = vadd.f32 %v3158, %v3239
    %v3241 = vpop.f32.mrb[0].mxu0
    %v3242 = vadd.f32 %v3160, %v3241
    %v3243 = vpop.f32.mrb[0].mxu0
    %v3244 = vpop.f32.mrb[0].mxu0
    %3245 = vdwg.mxu0
    %3246 = vmatprep.subr.bf16.mxu0 %v1195
    %3247 = vmatpush1.bf16.msra.mxu0 %v1194
    %3248 = vmatprep.subr.bf16.mxu0 %v1199
    %3249 = vmatpush1.bf16.msra.mxu0 %v1198
    %3250 = vmatprep.subr.bf16.mxu0 %v1203
    %3251 = vmatpush1.bf16.msra.mxu0 %v1202
    %3252 = vmatprep.subr.bf16.mxu0 %v1207
    %3253 = vmatpush1.bf16.msra.mxu0 %v1206
    %3254 = vmatprep.subr.bf16.mxu0 %v1211
    %3255 = vmatpush1.bf16.msra.mxu0 %v1210
    %3256 = vmatprep.subr.bf16.mxu0 %v1215
    %3257 = vmatpush1.bf16.msra.mxu0 %v1214
    %3258 = vmatprep.subr.bf16.mxu0 %v1219
    %3259 = vmatpush1.bf16.msra.mxu0 %v1218
    %3260 = vmatprep.subr.bf16.mxu0 %v1223
    %3261 = vmatpush1.bf16.msra.mxu0 %v1222
    %3262 = vmatprep.subr.bf16.mxu0 0
    %3263 = vmatpush1.bf16.msra.mxu0 0
    %3264 = vmatprep.subr.bf16.mxu0 0
    %3265 = vmatpush1.bf16.msra.mxu0 0
    %3266 = vmatprep.subr.bf16.mxu0 0
    %3267 = vmatpush1.bf16.msra.mxu0 0
    %3268 = vmatprep.subr.bf16.mxu0 0
    %3269 = vmatpush1.bf16.msra.mxu0 0
    %3270 = vmatprep.subr.bf16.mxu0 0
    %3271 = vmatpush1.bf16.msra.mxu0 0
    %3272 = vmatprep.subr.bf16.mxu0 0
    %3273 = vmatpush1.bf16.msra.mxu0 0
    %3274 = vmatprep.subr.bf16.mxu0 0
    %3275 = vmatpush1.bf16.msra.mxu0 0
    %3276 = vmatprep.subr.bf16.mxu0 0
    %3277 = vmatpush1.bf16.msra.mxu0 0
    %3278 = vmatprep.mubr.bf16.mxu0 0
    %3279 = vmatmul.mubr.bf16.gmra.mrb[0].mxu0 %v3121
    %v3280 = vpop.f32.mrb[0].mxu0
    %v3281 = vadd.f32 %v3199, %v3280
    %v3282 = vpop.f32.mrb[0].mxu0
    %v3283 = vadd.f32 %v3201, %v3282
    %v3284 = vpop.f32.mrb[0].mxu0
    %v3285 = vpop.f32.mrb[0].mxu0
    %3286 = vdwg.mxu0
    %v3287 = vadd.f32 %v3240, %v317
    %v3288 = vadd.f32 %v3242, %v321
    %v3289 = vadd.f32 %v3281, %v325
    %v3290 = vadd.f32 %v3283, %v329
    %v3291 = vxor.u32 %v3287, 2147483648
    %v3292 = vxor.u32 %v3288, 2147483648
    %v3293 = vxor.u32 %v3289, 2147483648
    %v3294 = vmul.f32 %v3291, 1.442695
    %v3295 = vpow.pop %v3294
    %v3296 = vmul.f32 %v3292, 1.442695
    %v3297 = vpow.pop %v3296
    %v3298 = vmul.f32 %v3293, 1.442695
    %v3299 = vpow.pop %v3298
    %v3300 = vadd.f32 %v3295, 1.0
    %v3301 = vadd.f32 %v3297, 1.0
    %v3302 = vadd.f32 %v3299, 1.0
    %v3303 = vrcp.pop %v3300
    %v3304 = vmul.f32 1.0, %v3303
    %v3305 = vrcp.pop %v3301
    %v3306 = vmul.f32 1.0, %v3305
    %v3307 = vrcp.pop %v3302
    %v3308 = vmul.f32 1.0, %v3307
    %v3309 = vtanh.pop %v3290
    %v3310 = vmul.f32 %v3306, %v2922
    %v3311 = vmul.f32 %v3304, %v3309
    %v3312 = vadd.f32 %v3310, %v3311
    %v3313 = vtanh.pop %v3312
    %v3314 = vmul.f32 %v3308, %v3313
    %s3315 = scalar_lea.vmem [#allocation6], 40
    %3316 = vst [vmem:[%s3315] sm:$0xff] %v3314
    %s3317 = scalar_lea.vmem [#allocation7], 24
    %v3318 = vld [vmem:[%s3317] sm:$0xf]
    %3319 = vmatprep.subr.bf16.mxu0 %v437
    %3320 = vmatpush1.bf16.msra.mxu0 %v436
    %3321 = vmatprep.subr.bf16.mxu0 %v441
    %3322 = vmatpush1.bf16.msra.mxu0 %v440
    %3323 = vmatprep.subr.bf16.mxu0 %v445
    %3324 = vmatpush1.bf16.msra.mxu0 %v444
    %3325 = vmatprep.subr.bf16.mxu0 %v449
    %3326 = vmatpush1.bf16.msra.mxu0 %v448
    %3327 = vmatprep.subr.bf16.mxu0 %v453
    %3328 = vmatpush1.bf16.msra.mxu0 %v452
    %3329 = vmatprep.subr.bf16.mxu0 %v457
    %3330 = vmatpush1.bf16.msra.mxu0 %v456
    %3331 = vmatprep.subr.bf16.mxu0 %v461
    %3332 = vmatpush1.bf16.msra.mxu0 %v460
    %3333 = vmatprep.subr.bf16.mxu0 %v465
    %3334 = vmatpush1.bf16.msra.mxu0 %v464
    %3335 = vmatprep.subr.bf16.mxu0 0
    %3336 = vmatpush1.bf16.msra.mxu0 0
    %3337 = vmatprep.subr.bf16.mxu0 0
    %3338 = vmatpush1.bf16.msra.mxu0 0
    %3339 = vmatprep.subr.bf16.mxu0 0
    %3340 = vmatpush1.bf16.msra.mxu0 0
    %3341 = vmatprep.subr.bf16.mxu0 0
    %3342 = vmatpush1.bf16.msra.mxu0 0
    %3343 = vmatprep.subr.bf16.mxu0 0
    %3344 = vmatpush1.bf16.msra.mxu0 0
    %3345 = vmatprep.subr.bf16.mxu0 0
    %3346 = vmatpush1.bf16.msra.mxu0 0
    %3347 = vmatprep.subr.bf16.mxu0 0
    %3348 = vmatpush1.bf16.msra.mxu0 0
    %3349 = vmatprep.subr.bf16.mxu0 0
    %3350 = vmatpush1.bf16.msra.mxu0 0
    %3351 = vmatprep.mubr.bf16.mxu0 0
    %3352 = vmatmul.mubr.bf16.gmra.mrb[0].mxu0 %v3121
    %v3353 = vpop.f32.mrb[0].mxu0
    %v3354 = vadd.f32 0.0, %v3353
    %v3355 = vpop.f32.mrb[0].mxu0
    %v3356 = vadd.f32 0.0, %v3355
    %v3357 = vpop.f32.mrb[0].mxu0
    %v3358 = vpop.f32.mrb[0].mxu0
    %3359 = vdwg.mxu0
    %3360 = vmatprep.subr.bf16.mxu0 %v439
    %3361 = vmatpush1.bf16.msra.mxu0 %v438
    %3362 = vmatprep.subr.bf16.mxu0 %v443
    %3363 = vmatpush1.bf16.msra.mxu0 %v442
    %3364 = vmatprep.subr.bf16.mxu0 %v447
    %3365 = vmatpush1.bf16.msra.mxu0 %v446
    %3366 = vmatprep.subr.bf16.mxu0 %v451
    %3367 = vmatpush1.bf16.msra.mxu0 %v450
    %3368 = vmatprep.subr.bf16.mxu0 %v455
    %3369 = vmatpush1.bf16.msra.mxu0 %v454
    %3370 = vmatprep.subr.bf16.mxu0 %v459
    %3371 = vmatpush1.bf16.msra.mxu0 %v458
    %3372 = vmatprep.subr.bf16.mxu0 %v463
    %3373 = vmatpush1.bf16.msra.mxu0 %v462
    %3374 = vmatprep.subr.bf16.mxu0 %v467
    %3375 = vmatpush1.bf16.msra.mxu0 %v466
    %3376 = vmatprep.subr.bf16.mxu0 0
    %3377 = vmatpush1.bf16.msra.mxu0 0
    %3378 = vmatprep.subr.bf16.mxu0 0
    %3379 = vmatpush1.bf16.msra.mxu0 0
    %3380 = vmatprep.subr.bf16.mxu0 0
    %3381 = vmatpush1.bf16.msra.mxu0 0
    %3382 = vmatprep.subr.bf16.mxu0 0
    %3383 = vmatpush1.bf16.msra.mxu0 0
    %3384 = vmatprep.subr.bf16.mxu0 0
    %3385 = vmatpush1.bf16.msra.mxu0 0
    %3386 = vmatprep.subr.bf16.mxu0 0
    %3387 = vmatpush1.bf16.msra.mxu0 0
    %3388 = vmatprep.subr.bf16.mxu0 0
    %3389 = vmatpush1.bf16.msra.mxu0 0
    %3390 = vmatprep.subr.bf16.mxu0 0
    %3391 = vmatpush1.bf16.msra.mxu0 0
    %3392 = vmatprep.mubr.bf16.mxu0 0
    %3393 = vmatmul.mubr.bf16.gmra.mrb[0].mxu0 %v3121
    %v3394 = vpop.f32.mrb[0].mxu0
    %v3395 = vadd.f32 0.0, %v3394
    %v3396 = vpop.f32.mrb[0].mxu0
    %v3397 = vadd.f32 0.0, %v3396
    %v3398 = vpop.f32.mrb[0].mxu0
    %v3399 = vpop.f32.mrb[0].mxu0
    %3400 = vdwg.mxu0
    %3401 = vmatprep.subr.bf16.mxu0 %v679
    %3402 = vmatpush1.bf16.msra.mxu0 %v678
    %3403 = vmatprep.subr.bf16.mxu0 %v683
    %3404 = vmatpush1.bf16.msra.mxu0 %v682
    %3405 = vmatprep.subr.bf16.mxu0 %v687
    %3406 = vmatpush1.bf16.msra.mxu0 %v686
    %3407 = vmatprep.subr.bf16.mxu0 %v691
    %3408 = vmatpush1.bf16.msra.mxu0 %v690
    %3409 = vmatprep.subr.bf16.mxu0 %v695
    %3410 = vmatpush1.bf16.msra.mxu0 %v694
    %3411 = vmatprep.subr.bf16.mxu0 %v699
    %3412 = vmatpush1.bf16.msra.mxu0 %v698
    %3413 = vmatprep.subr.bf16.mxu0 %v703
    %3414 = vmatpush1.bf16.msra.mxu0 %v702
    %3415 = vmatprep.subr.bf16.mxu0 %v707
    %3416 = vmatpush1.bf16.msra.mxu0 %v706
    %3417 = vmatprep.subr.bf16.mxu0 0
    %3418 = vmatpush1.bf16.msra.mxu0 0
    %3419 = vmatprep.subr.bf16.mxu0 0
    %3420 = vmatpush1.bf16.msra.mxu0 0
    %3421 = vmatprep.subr.bf16.mxu0 0
    %3422 = vmatpush1.bf16.msra.mxu0 0
    %3423 = vmatprep.subr.bf16.mxu0 0
    %3424 = vmatpush1.bf16.msra.mxu0 0
    %3425 = vmatprep.subr.bf16.mxu0 0
    %3426 = vmatpush1.bf16.msra.mxu0 0
    %3427 = vmatprep.subr.bf16.mxu0 0
    %3428 = vmatpush1.bf16.msra.mxu0 0
    %3429 = vmatprep.subr.bf16.mxu0 0
    %3430 = vmatpush1.bf16.msra.mxu0 0
    %3431 = vmatprep.subr.bf16.mxu0 0
    %3432 = vmatpush1.bf16.msra.mxu0 0
    %3433 = vmatprep.mubr.bf16.mxu0 0
    %3434 = vmatmul.mubr.bf16.gmra.mrb[0].mxu0 %v3318
    %v3435 = vpop.f32.mrb[0].mxu0
    %v3436 = vadd.f32 %v3354, %v3435
    %v3437 = vpop.f32.mrb[0].mxu0
    %v3438 = vadd.f32 %v3356, %v3437
    %v3439 = vpop.f32.mrb[0].mxu0
    %v3440 = vpop.f32.mrb[0].mxu0
    %3441 = vdwg.mxu0
    %3442 = vmatprep.subr.bf16.mxu0 %v681
    %3443 = vmatpush1.bf16.msra.mxu0 %v680
    %3444 = vmatprep.subr.bf16.mxu0 %v685
    %3445 = vmatpush1.bf16.msra.mxu0 %v684
    %3446 = vmatprep.subr.bf16.mxu0 %v689
    %3447 = vmatpush1.bf16.msra.mxu0 %v688
    %3448 = vmatprep.subr.bf16.mxu0 %v693
    %3449 = vmatpush1.bf16.msra.mxu0 %v692
    %3450 = vmatprep.subr.bf16.mxu0 %v697
    %3451 = vmatpush1.bf16.msra.mxu0 %v696
    %3452 = vmatprep.subr.bf16.mxu0 %v701
    %3453 = vmatpush1.bf16.msra.mxu0 %v700
    %3454 = vmatprep.subr.bf16.mxu0 %v705
    %3455 = vmatpush1.bf16.msra.mxu0 %v704
    %3456 = vmatprep.subr.bf16.mxu0 %v709
    %3457 = vmatpush1.bf16.msra.mxu0 %v708
    %3458 = vmatprep.subr.bf16.mxu0 0
    %3459 = vmatpush1.bf16.msra.mxu0 0
    %3460 = vmatprep.subr.bf16.mxu0 0
    %3461 = vmatpush1.bf16.msra.mxu0 0
    %3462 = vmatprep.subr.bf16.mxu0 0
    %3463 = vmatpush1.bf16.msra.mxu0 0
    %3464 = vmatprep.subr.bf16.mxu0 0
    %3465 = vmatpush1.bf16.msra.mxu0 0
    %3466 = vmatprep.subr.bf16.mxu0 0
    %3467 = vmatpush1.bf16.msra.mxu0 0
    %3468 = vmatprep.subr.bf16.mxu0 0
    %3469 = vmatpush1.bf16.msra.mxu0 0
    %3470 = vmatprep.subr.bf16.mxu0 0
    %3471 = vmatpush1.bf16.msra.mxu0 0
    %3472 = vmatprep.subr.bf16.mxu0 0
    %3473 = vmatpush1.bf16.msra.mxu0 0
    %3474 = vmatprep.mubr.bf16.mxu0 0
    %3475 = vmatmul.mubr.bf16.gmra.mrb[0].mxu0 %v3318
    %v3476 = vpop.f32.mrb[0].mxu0
    %v3477 = vadd.f32 %v3395, %v3476
    %v3478 = vpop.f32.mrb[0].mxu0
    %v3479 = vadd.f32 %v3397, %v3478
    %v3480 = vpop.f32.mrb[0].mxu0
    %v3481 = vpop.f32.mrb[0].mxu0
    %3482 = vdwg.mxu0
    %v3483 = vadd.f32 %v3436, %v295
    %v3484 = vadd.f32 %v3438, %v299
    %v3485 = vadd.f32 %v3477, %v303
    %v3486 = vadd.f32 %v3479, %v307
    %v3487 = vxor.u32 %v3483, 2147483648
    %v3488 = vxor.u32 %v3484, 2147483648
    %v3489 = vxor.u32 %v3485, 2147483648
    %v3490 = vmul.f32 %v3487, 1.442695
    %v3491 = vpow.pop %v3490
    %v3492 = vmul.f32 %v3488, 1.442695
    %v3493 = vpow.pop %v3492
    %v3494 = vmul.f32 %v3489, 1.442695
    %v3495 = vpow.pop %v3494
    %v3496 = vadd.f32 %v3491, 1.0
    %v3497 = vadd.f32 %v3493, 1.0
    %v3498 = vadd.f32 %v3495, 1.0
    %v3499 = vrcp.pop %v3496
    %v3500 = vmul.f32 1.0, %v3499
    %v3501 = vrcp.pop %v3497
    %v3502 = vmul.f32 1.0, %v3501
    %v3503 = vrcp.pop %v3498
    %v3504 = vmul.f32 1.0, %v3503
    %v3505 = vtanh.pop %v3486
    %v3506 = vmul.f32 %v3502, %v3118
    %v3507 = vmul.f32 %v3500, %v3505
    %v3508 = vadd.f32 %v3506, %v3507
    %v3509 = vtanh.pop %v3508
    %v3510 = vmul.f32 %v3504, %v3509
    %v3511 = vpack.c.bf16 %v3510, %v3510
    %v3512 = vpack.c.bf16 %v3314, %v3314
    %3513 = vmatprep.subr.bf16.mxu0 %v951
    %3514 = vmatpush1.bf16.msra.mxu0 %v950
    %3515 = vmatprep.subr.bf16.mxu0 %v955
    %3516 = vmatpush1.bf16.msra.mxu0 %v954
    %3517 = vmatprep.subr.bf16.mxu0 %v959
    %3518 = vmatpush1.bf16.msra.mxu0 %v958
    %3519 = vmatprep.subr.bf16.mxu0 %v963
    %3520 = vmatpush1.bf16.msra.mxu0 %v962
    %3521 = vmatprep.subr.bf16.mxu0 %v967
    %3522 = vmatpush1.bf16.msra.mxu0 %v966
    %3523 = vmatprep.subr.bf16.mxu0 %v971
    %3524 = vmatpush1.bf16.msra.mxu0 %v970
    %3525 = vmatprep.subr.bf16.mxu0 %v975
    %3526 = vmatpush1.bf16.msra.mxu0 %v974
    %3527 = vmatprep.subr.bf16.mxu0 %v979
    %3528 = vmatpush1.bf16.msra.mxu0 %v978
    %3529 = vmatprep.subr.bf16.mxu0 0
    %3530 = vmatpush1.bf16.msra.mxu0 0
    %3531 = vmatprep.subr.bf16.mxu0 0
    %3532 = vmatpush1.bf16.msra.mxu0 0
    %3533 = vmatprep.subr.bf16.mxu0 0
    %3534 = vmatpush1.bf16.msra.mxu0 0
    %3535 = vmatprep.subr.bf16.mxu0 0
    %3536 = vmatpush1.bf16.msra.mxu0 0
    %3537 = vmatprep.subr.bf16.mxu0 0
    %3538 = vmatpush1.bf16.msra.mxu0 0
    %3539 = vmatprep.subr.bf16.mxu0 0
    %3540 = vmatpush1.bf16.msra.mxu0 0
    %3541 = vmatprep.subr.bf16.mxu0 0
    %3542 = vmatpush1.bf16.msra.mxu0 0
    %3543 = vmatprep.subr.bf16.mxu0 0
    %3544 = vmatpush1.bf16.msra.mxu0 0
    %3545 = vmatprep.mubr.bf16.mxu0 0
    %3546 = vmatmul.mubr.bf16.gmra.mrb[0].mxu0 %v3512
    %v3547 = vpop.f32.mrb[0].mxu0
    %v3548 = vadd.f32 0.0, %v3547
    %v3549 = vpop.f32.mrb[0].mxu0
    %v3550 = vadd.f32 0.0, %v3549
    %v3551 = vpop.f32.mrb[0].mxu0
    %v3552 = vpop.f32.mrb[0].mxu0
    %3553 = vdwg.mxu0
    %3554 = vmatprep.subr.bf16.mxu0 %v953
    %3555 = vmatpush1.bf16.msra.mxu0 %v952
    %3556 = vmatprep.subr.bf16.mxu0 %v957
    %3557 = vmatpush1.bf16.msra.mxu0 %v956
    %3558 = vmatprep.subr.bf16.mxu0 %v961
    %3559 = vmatpush1.bf16.msra.mxu0 %v960
    %3560 = vmatprep.subr.bf16.mxu0 %v965
    %3561 = vmatpush1.bf16.msra.mxu0 %v964
    %3562 = vmatprep.subr.bf16.mxu0 %v969
    %3563 = vmatpush1.bf16.msra.mxu0 %v968
    %3564 = vmatprep.subr.bf16.mxu0 %v973
    %3565 = vmatpush1.bf16.msra.mxu0 %v972
    %3566 = vmatprep.subr.bf16.mxu0 %v977
    %3567 = vmatpush1.bf16.msra.mxu0 %v976
    %3568 = vmatprep.subr.bf16.mxu0 %v981
    %3569 = vmatpush1.bf16.msra.mxu0 %v980
    %3570 = vmatprep.subr.bf16.mxu0 0
    %3571 = vmatpush1.bf16.msra.mxu0 0
    %3572 = vmatprep.subr.bf16.mxu0 0
    %3573 = vmatpush1.bf16.msra.mxu0 0
    %3574 = vmatprep.subr.bf16.mxu0 0
    %3575 = vmatpush1.bf16.msra.mxu0 0
    %3576 = vmatprep.subr.bf16.mxu0 0
    %3577 = vmatpush1.bf16.msra.mxu0 0
    %3578 = vmatprep.subr.bf16.mxu0 0
    %3579 = vmatpush1.bf16.msra.mxu0 0
    %3580 = vmatprep.subr.bf16.mxu0 0
    %3581 = vmatpush1.bf16.msra.mxu0 0
    %3582 = vmatprep.subr.bf16.mxu0 0
    %3583 = vmatpush1.bf16.msra.mxu0 0
    %3584 = vmatprep.subr.bf16.mxu0 0
    %3585 = vmatpush1.bf16.msra.mxu0 0
    %3586 = vmatprep.mubr.bf16.mxu0 0
    %3587 = vmatmul.mubr.bf16.gmra.mrb[0].mxu0 %v3512
    %v3588 = vpop.f32.mrb[0].mxu0
    %v3589 = vadd.f32 0.0, %v3588
    %v3590 = vpop.f32.mrb[0].mxu0
    %v3591 = vadd.f32 0.0, %v3590
    %v3592 = vpop.f32.mrb[0].mxu0
    %v3593 = vpop.f32.mrb[0].mxu0
    %3594 = vdwg.mxu0
    %3595 = vmatprep.subr.bf16.mxu0 %v1193
    %3596 = vmatpush1.bf16.msra.mxu0 %v1192
    %3597 = vmatprep.subr.bf16.mxu0 %v1197
    %3598 = vmatpush1.bf16.msra.mxu0 %v1196
    %3599 = vmatprep.subr.bf16.mxu0 %v1201
    %3600 = vmatpush1.bf16.msra.mxu0 %v1200
    %3601 = vmatprep.subr.bf16.mxu0 %v1205
    %3602 = vmatpush1.bf16.msra.mxu0 %v1204
    %3603 = vmatprep.subr.bf16.mxu0 %v1209
    %3604 = vmatpush1.bf16.msra.mxu0 %v1208
    %3605 = vmatprep.subr.bf16.mxu0 %v1213
    %3606 = vmatpush1.bf16.msra.mxu0 %v1212
    %3607 = vmatprep.subr.bf16.mxu0 %v1217
    %3608 = vmatpush1.bf16.msra.mxu0 %v1216
    %3609 = vmatprep.subr.bf16.mxu0 %v1221
    %3610 = vmatpush1.bf16.msra.mxu0 %v1220
    %3611 = vmatprep.subr.bf16.mxu0 0
    %3612 = vmatpush1.bf16.msra.mxu0 0
    %3613 = vmatprep.subr.bf16.mxu0 0
    %3614 = vmatpush1.bf16.msra.mxu0 0
    %3615 = vmatprep.subr.bf16.mxu0 0
    %3616 = vmatpush1.bf16.msra.mxu0 0
    %3617 = vmatprep.subr.bf16.mxu0 0
    %3618 = vmatpush1.bf16.msra.mxu0 0
    %3619 = vmatprep.subr.bf16.mxu0 0
    %3620 = vmatpush1.bf16.msra.mxu0 0
    %3621 = vmatprep.subr.bf16.mxu0 0
    %3622 = vmatpush1.bf16.msra.mxu0 0
    %3623 = vmatprep.subr.bf16.mxu0 0
    %3624 = vmatpush1.bf16.msra.mxu0 0
    %3625 = vmatprep.subr.bf16.mxu0 0
    %3626 = vmatpush1.bf16.msra.mxu0 0
    %3627 = vmatprep.mubr.bf16.mxu0 0
    %3628 = vmatmul.mubr.bf16.gmra.mrb[0].mxu0 %v3511
    %v3629 = vpop.f32.mrb[0].mxu0
    %v3630 = vadd.f32 %v3548, %v3629
    %v3631 = vpop.f32.mrb[0].mxu0
    %v3632 = vadd.f32 %v3550, %v3631
    %v3633 = vpop.f32.mrb[0].mxu0
    %v3634 = vpop.f32.mrb[0].mxu0
    %3635 = vdwg.mxu0
    %3636 = vmatprep.subr.bf16.mxu0 %v1195
    %3637 = vmatpush1.bf16.msra.mxu0 %v1194
    %3638 = vmatprep.subr.bf16.mxu0 %v1199
    %3639 = vmatpush1.bf16.msra.mxu0 %v1198
    %3640 = vmatprep.subr.bf16.mxu0 %v1203
    %3641 = vmatpush1.bf16.msra.mxu0 %v1202
    %3642 = vmatprep.subr.bf16.mxu0 %v1207
    %3643 = vmatpush1.bf16.msra.mxu0 %v1206
    %3644 = vmatprep.subr.bf16.mxu0 %v1211
    %3645 = vmatpush1.bf16.msra.mxu0 %v1210
    %3646 = vmatprep.subr.bf16.mxu0 %v1215
    %3647 = vmatpush1.bf16.msra.mxu0 %v1214
    %3648 = vmatprep.subr.bf16.mxu0 %v1219
    %3649 = vmatpush1.bf16.msra.mxu0 %v1218
    %3650 = vmatprep.subr.bf16.mxu0 %v1223
    %3651 = vmatpush1.bf16.msra.mxu0 %v1222
    %3652 = vmatprep.subr.bf16.mxu0 0
    %3653 = vmatpush1.bf16.msra.mxu0 0
    %3654 = vmatprep.subr.bf16.mxu0 0
    %3655 = vmatpush1.bf16.msra.mxu0 0
    %3656 = vmatprep.subr.bf16.mxu0 0
    %3657 = vmatpush1.bf16.msra.mxu0 0
    %3658 = vmatprep.subr.bf16.mxu0 0
    %3659 = vmatpush1.bf16.msra.mxu0 0
    %3660 = vmatprep.subr.bf16.mxu0 0
    %3661 = vmatpush1.bf16.msra.mxu0 0
    %3662 = vmatprep.subr.bf16.mxu0 0
    %3663 = vmatpush1.bf16.msra.mxu0 0
    %3664 = vmatprep.subr.bf16.mxu0 0
    %3665 = vmatpush1.bf16.msra.mxu0 0
    %3666 = vmatprep.subr.bf16.mxu0 0
    %3667 = vmatpush1.bf16.msra.mxu0 0
    %3668 = vmatprep.mubr.bf16.mxu0 0
    %3669 = vmatmul.mubr.bf16.gmra.mrb[0].mxu0 %v3511
    %v3670 = vpop.f32.mrb[0].mxu0
    %v3671 = vadd.f32 %v3589, %v3670
    %v3672 = vpop.f32.mrb[0].mxu0
    %v3673 = vadd.f32 %v3591, %v3672
    %v3674 = vpop.f32.mrb[0].mxu0
    %v3675 = vpop.f32.mrb[0].mxu0
    %3676 = vdwg.mxu0
    %v3677 = vadd.f32 %v3630, %v317
    %v3678 = vadd.f32 %v3632, %v321
    %v3679 = vadd.f32 %v3671, %v325
    %v3680 = vadd.f32 %v3673, %v329
    %v3681 = vxor.u32 %v3677, 2147483648
    %v3682 = vxor.u32 %v3678, 2147483648
    %v3683 = vxor.u32 %v3679, 2147483648
    %v3684 = vmul.f32 %v3681, 1.442695
    %v3685 = vpow.pop %v3684
    %v3686 = vmul.f32 %v3682, 1.442695
    %v3687 = vpow.pop %v3686
    %v3688 = vmul.f32 %v3683, 1.442695
    %v3689 = vpow.pop %v3688
    %v3690 = vadd.f32 %v3685, 1.0
    %v3691 = vadd.f32 %v3687, 1.0
    %v3692 = vadd.f32 %v3689, 1.0
    %v3693 = vrcp.pop %v3690
    %v3694 = vmul.f32 1.0, %v3693
    %v3695 = vrcp.pop %v3691
    %v3696 = vmul.f32 1.0, %v3695
    %v3697 = vrcp.pop %v3692
    %v3698 = vmul.f32 1.0, %v3697
    %v3699 = vtanh.pop %v3680
    %v3700 = vmul.f32 %v3696, %v3312
    %v3701 = vmul.f32 %v3694, %v3699
    %v3702 = vadd.f32 %v3700, %v3701
    %v3703 = vtanh.pop %v3702
    %v3704 = vmul.f32 %v3698, %v3703
    %s3705 = scalar_lea.vmem [#allocation6], 48
    %3706 = vst [vmem:[%s3705] sm:$0xff] %v3704
    %s3707 = scalar_lea.vmem [#allocation7], 28
    %v3708 = vld [vmem:[%s3707] sm:$0xf]
    %3709 = vmatprep.subr.bf16.mxu0 %v437
    %3710 = vmatpush1.bf16.msra.mxu0 %v436
    %3711 = vmatprep.subr.bf16.mxu0 %v441
    %3712 = vmatpush1.bf16.msra.mxu0 %v440
    %3713 = vmatprep.subr.bf16.mxu0 %v445
    %3714 = vmatpush1.bf16.msra.mxu0 %v444
    %3715 = vmatprep.subr.bf16.mxu0 %v449
    %3716 = vmatpush1.bf16.msra.mxu0 %v448
    %3717 = vmatprep.subr.bf16.mxu0 %v453
    %3718 = vmatpush1.bf16.msra.mxu0 %v452
    %3719 = vmatprep.subr.bf16.mxu0 %v457
    %3720 = vmatpush1.bf16.msra.mxu0 %v456
    %3721 = vmatprep.subr.bf16.mxu0 %v461
    %3722 = vmatpush1.bf16.msra.mxu0 %v460
    %3723 = vmatprep.subr.bf16.mxu0 %v465
    %3724 = vmatpush1.bf16.msra.mxu0 %v464
    %3725 = vmatprep.subr.bf16.mxu0 0
    %3726 = vmatpush1.bf16.msra.mxu0 0
    %3727 = vmatprep.subr.bf16.mxu0 0
    %3728 = vmatpush1.bf16.msra.mxu0 0
    %3729 = vmatprep.subr.bf16.mxu0 0
    %3730 = vmatpush1.bf16.msra.mxu0 0
    %3731 = vmatprep.subr.bf16.mxu0 0
    %3732 = vmatpush1.bf16.msra.mxu0 0
    %3733 = vmatprep.subr.bf16.mxu0 0
    %3734 = vmatpush1.bf16.msra.mxu0 0
    %3735 = vmatprep.subr.bf16.mxu0 0
    %3736 = vmatpush1.bf16.msra.mxu0 0
    %3737 = vmatprep.subr.bf16.mxu0 0
    %3738 = vmatpush1.bf16.msra.mxu0 0
    %3739 = vmatprep.subr.bf16.mxu0 0
    %3740 = vmatpush1.bf16.msra.mxu0 0
    %3741 = vmatprep.mubr.bf16.mxu0 0
    %3742 = vmatmul.mubr.bf16.gmra.mrb[0].mxu0 %v3511
    %v3743 = vpop.f32.mrb[0].mxu0
    %v3744 = vadd.f32 0.0, %v3743
    %v3745 = vpop.f32.mrb[0].mxu0
    %v3746 = vadd.f32 0.0, %v3745
    %v3747 = vpop.f32.mrb[0].mxu0
    %v3748 = vpop.f32.mrb[0].mxu0
    %3749 = vdwg.mxu0
    %3750 = vmatprep.subr.bf16.mxu0 %v439
    %3751 = vmatpush1.bf16.msra.mxu0 %v438
    %3752 = vmatprep.subr.bf16.mxu0 %v443
    %3753 = vmatpush1.bf16.msra.mxu0 %v442
    %3754 = vmatprep.subr.bf16.mxu0 %v447
    %3755 = vmatpush1.bf16.msra.mxu0 %v446
    %3756 = vmatprep.subr.bf16.mxu0 %v451
    %3757 = vmatpush1.bf16.msra.mxu0 %v450
    %3758 = vmatprep.subr.bf16.mxu0 %v455
    %3759 = vmatpush1.bf16.msra.mxu0 %v454
    %3760 = vmatprep.subr.bf16.mxu0 %v459
    %3761 = vmatpush1.bf16.msra.mxu0 %v458
    %3762 = vmatprep.subr.bf16.mxu0 %v463
    %3763 = vmatpush1.bf16.msra.mxu0 %v462
    %3764 = vmatprep.subr.bf16.mxu0 %v467
    %3765 = vmatpush1.bf16.msra.mxu0 %v466
    %3766 = vmatprep.subr.bf16.mxu0 0
    %3767 = vmatpush1.bf16.msra.mxu0 0
    %3768 = vmatprep.subr.bf16.mxu0 0
    %3769 = vmatpush1.bf16.msra.mxu0 0
    %3770 = vmatprep.subr.bf16.mxu0 0
    %3771 = vmatpush1.bf16.msra.mxu0 0
    %3772 = vmatprep.subr.bf16.mxu0 0
    %3773 = vmatpush1.bf16.msra.mxu0 0
    %3774 = vmatprep.subr.bf16.mxu0 0
    %3775 = vmatpush1.bf16.msra.mxu0 0
    %3776 = vmatprep.subr.bf16.mxu0 0
    %3777 = vmatpush1.bf16.msra.mxu0 0
    %3778 = vmatprep.subr.bf16.mxu0 0
    %3779 = vmatpush1.bf16.msra.mxu0 0
    %3780 = vmatprep.subr.bf16.mxu0 0
    %3781 = vmatpush1.bf16.msra.mxu0 0
    %3782 = vmatprep.mubr.bf16.mxu0 0
    %3783 = vmatmul.mubr.bf16.gmra.mrb[0].mxu0 %v3511
    %v3784 = vpop.f32.mrb[0].mxu0
    %v3785 = vadd.f32 0.0, %v3784
    %v3786 = vpop.f32.mrb[0].mxu0
    %v3787 = vadd.f32 0.0, %v3786
    %v3788 = vpop.f32.mrb[0].mxu0
    %v3789 = vpop.f32.mrb[0].mxu0
    %3790 = vdwg.mxu0
    %3791 = vmatprep.subr.bf16.mxu0 %v679
    %3792 = vmatpush1.bf16.msra.mxu0 %v678
    %3793 = vmatprep.subr.bf16.mxu0 %v683
    %3794 = vmatpush1.bf16.msra.mxu0 %v682
    %3795 = vmatprep.subr.bf16.mxu0 %v687
    %3796 = vmatpush1.bf16.msra.mxu0 %v686
    %3797 = vmatprep.subr.bf16.mxu0 %v691
    %3798 = vmatpush1.bf16.msra.mxu0 %v690
    %3799 = vmatprep.subr.bf16.mxu0 %v695
    %3800 = vmatpush1.bf16.msra.mxu0 %v694
    %3801 = vmatprep.subr.bf16.mxu0 %v699
    %3802 = vmatpush1.bf16.msra.mxu0 %v698
    %3803 = vmatprep.subr.bf16.mxu0 %v703
    %3804 = vmatpush1.bf16.msra.mxu0 %v702
    %3805 = vmatprep.subr.bf16.mxu0 %v707
    %3806 = vmatpush1.bf16.msra.mxu0 %v706
    %3807 = vmatprep.subr.bf16.mxu0 0
    %3808 = vmatpush1.bf16.msra.mxu0 0
    %3809 = vmatprep.subr.bf16.mxu0 0
    %3810 = vmatpush1.bf16.msra.mxu0 0
    %3811 = vmatprep.subr.bf16.mxu0 0
    %3812 = vmatpush1.bf16.msra.mxu0 0
    %3813 = vmatprep.subr.bf16.mxu0 0
    %3814 = vmatpush1.bf16.msra.mxu0 0
    %3815 = vmatprep.subr.bf16.mxu0 0
    %3816 = vmatpush1.bf16.msra.mxu0 0
    %3817 = vmatprep.subr.bf16.mxu0 0
    %3818 = vmatpush1.bf16.msra.mxu0 0
    %3819 = vmatprep.subr.bf16.mxu0 0
    %3820 = vmatpush1.bf16.msra.mxu0 0
    %3821 = vmatprep.subr.bf16.mxu0 0
    %3822 = vmatpush1.bf16.msra.mxu0 0
    %3823 = vmatprep.mubr.bf16.mxu0 0
    %3824 = vmatmul.mubr.bf16.gmra.mrb[0].mxu0 %v3708
    %v3825 = vpop.f32.mrb[0].mxu0
    %v3826 = vadd.f32 %v3744, %v3825
    %v3827 = vpop.f32.mrb[0].mxu0
    %v3828 = vadd.f32 %v3746, %v3827
    %v3829 = vpop.f32.mrb[0].mxu0
    %v3830 = vpop.f32.mrb[0].mxu0
    %3831 = vdwg.mxu0
    %3832 = vmatprep.subr.bf16.mxu0 %v681
    %3833 = vmatpush1.bf16.msra.mxu0 %v680
    %3834 = vmatprep.subr.bf16.mxu0 %v685
    %3835 = vmatpush1.bf16.msra.mxu0 %v684
    %3836 = vmatprep.subr.bf16.mxu0 %v689
    %3837 = vmatpush1.bf16.msra.mxu0 %v688
    %3838 = vmatprep.subr.bf16.mxu0 %v693
    %3839 = vmatpush1.bf16.msra.mxu0 %v692
    %3840 = vmatprep.subr.bf16.mxu0 %v697
    %3841 = vmatpush1.bf16.msra.mxu0 %v696
    %3842 = vmatprep.subr.bf16.mxu0 %v701
    %3843 = vmatpush1.bf16.msra.mxu0 %v700
    %3844 = vmatprep.subr.bf16.mxu0 %v705
    %3845 = vmatpush1.bf16.msra.mxu0 %v704
    %3846 = vmatprep.subr.bf16.mxu0 %v709
    %3847 = vmatpush1.bf16.msra.mxu0 %v708
    %3848 = vmatprep.subr.bf16.mxu0 0
    %3849 = vmatpush1.bf16.msra.mxu0 0
    %3850 = vmatprep.subr.bf16.mxu0 0
    %3851 = vmatpush1.bf16.msra.mxu0 0
    %3852 = vmatprep.subr.bf16.mxu0 0
    %3853 = vmatpush1.bf16.msra.mxu0 0
    %3854 = vmatprep.subr.bf16.mxu0 0
    %3855 = vmatpush1.bf16.msra.mxu0 0
    %3856 = vmatprep.subr.bf16.mxu0 0
    %3857 = vmatpush1.bf16.msra.mxu0 0
    %3858 = vmatprep.subr.bf16.mxu0 0
    %3859 = vmatpush1.bf16.msra.mxu0 0
    %3860 = vmatprep.subr.bf16.mxu0 0
    %3861 = vmatpush1.bf16.msra.mxu0 0
    %3862 = vmatprep.subr.bf16.mxu0 0
    %3863 = vmatpush1.bf16.msra.mxu0 0
    %3864 = vmatprep.mubr.bf16.mxu0 0
    %3865 = vmatmul.mubr.bf16.gmra.mrb[0].mxu0 %v3708
    %v3866 = vpop.f32.mrb[0].mxu0
    %v3867 = vadd.f32 %v3785, %v3866
    %v3868 = vpop.f32.mrb[0].mxu0
    %v3869 = vadd.f32 %v3787, %v3868
    %v3870 = vpop.f32.mrb[0].mxu0
    %v3871 = vpop.f32.mrb[0].mxu0
    %3872 = vdwg.mxu0
    %v3873 = vadd.f32 %v3826, %v295
    %v3874 = vadd.f32 %v3828, %v299
    %v3875 = vadd.f32 %v3867, %v303
    %v3876 = vadd.f32 %v3869, %v307
    %v3877 = vxor.u32 %v3873, 2147483648
    %v3878 = vxor.u32 %v3874, 2147483648
    %v3879 = vxor.u32 %v3875, 2147483648
    %v3880 = vmul.f32 %v3877, 1.442695
    %v3881 = vpow.pop %v3880
    %v3882 = vmul.f32 %v3878, 1.442695
    %v3883 = vpow.pop %v3882
    %v3884 = vmul.f32 %v3879, 1.442695
    %v3885 = vpow.pop %v3884
    %v3886 = vadd.f32 %v3881, 1.0
    %v3887 = vadd.f32 %v3883, 1.0
    %v3888 = vadd.f32 %v3885, 1.0
    %v3889 = vrcp.pop %v3886
    %v3890 = vmul.f32 1.0, %v3889
    %v3891 = vrcp.pop %v3887
    %v3892 = vmul.f32 1.0, %v3891
    %v3893 = vrcp.pop %v3888
    %v3894 = vmul.f32 1.0, %v3893
    %v3895 = vtanh.pop %v3876
    %v3896 = vmul.f32 %v3892, %v3508
    %v3897 = vmul.f32 %v3890, %v3895
    %v3898 = vadd.f32 %v3896, %v3897
    %v3899 = vtanh.pop %v3898
    %v3900 = vmul.f32 %v3894, %v3899
    %v3901 = vpack.c.bf16 %v3900, %v3900
    %v3902 = vpack.c.bf16 %v3704, %v3704
    %3903 = vmatprep.subr.bf16.mxu0 %v951
    %3904 = vmatpush1.bf16.msra.mxu0 %v950
    %3905 = vmatprep.subr.bf16.mxu0 %v955
    %3906 = vmatpush1.bf16.msra.mxu0 %v954
    %3907 = vmatprep.subr.bf16.mxu0 %v959
    %3908 = vmatpush1.bf16.msra.mxu0 %v958
    %3909 = vmatprep.subr.bf16.mxu0 %v963
    %3910 = vmatpush1.bf16.msra.mxu0 %v962
    %3911 = vmatprep.subr.bf16.mxu0 %v967
    %3912 = vmatpush1.bf16.msra.mxu0 %v966
    %3913 = vmatprep.subr.bf16.mxu0 %v971
    %3914 = vmatpush1.bf16.msra.mxu0 %v970
    %3915 = vmatprep.subr.bf16.mxu0 %v975
    %3916 = vmatpush1.bf16.msra.mxu0 %v974
    %3917 = vmatprep.subr.bf16.mxu0 %v979
    %3918 = vmatpush1.bf16.msra.mxu0 %v978
    %3919 = vmatprep.subr.bf16.mxu0 0
    %3920 = vmatpush1.bf16.msra.mxu0 0
    %3921 = vmatprep.subr.bf16.mxu0 0
    %3922 = vmatpush1.bf16.msra.mxu0 0
    %3923 = vmatprep.subr.bf16.mxu0 0
    %3924 = vmatpush1.bf16.msra.mxu0 0
    %3925 = vmatprep.subr.bf16.mxu0 0
    %3926 = vmatpush1.bf16.msra.mxu0 0
    %3927 = vmatprep.subr.bf16.mxu0 0
    %3928 = vmatpush1.bf16.msra.mxu0 0
    %3929 = vmatprep.subr.bf16.mxu0 0
    %3930 = vmatpush1.bf16.msra.mxu0 0
    %3931 = vmatprep.subr.bf16.mxu0 0
    %3932 = vmatpush1.bf16.msra.mxu0 0
    %3933 = vmatprep.subr.bf16.mxu0 0
    %3934 = vmatpush1.bf16.msra.mxu0 0
    %3935 = vmatprep.mubr.bf16.mxu0 0
    %3936 = vmatmul.mubr.bf16.gmra.mrb[0].mxu0 %v3902
    %v3937 = vpop.f32.mrb[0].mxu0
    %v3938 = vadd.f32 0.0, %v3937
    %v3939 = vpop.f32.mrb[0].mxu0
    %v3940 = vadd.f32 0.0, %v3939
    %v3941 = vpop.f32.mrb[0].mxu0
    %v3942 = vpop.f32.mrb[0].mxu0
    %3943 = vdwg.mxu0
    %3944 = vmatprep.subr.bf16.mxu0 %v953
    %3945 = vmatpush1.bf16.msra.mxu0 %v952
    %3946 = vmatprep.subr.bf16.mxu0 %v957
    %3947 = vmatpush1.bf16.msra.mxu0 %v956
    %3948 = vmatprep.subr.bf16.mxu0 %v961
    %3949 = vmatpush1.bf16.msra.mxu0 %v960
    %3950 = vmatprep.subr.bf16.mxu0 %v965
    %3951 = vmatpush1.bf16.msra.mxu0 %v964
    %3952 = vmatprep.subr.bf16.mxu0 %v969
    %3953 = vmatpush1.bf16.msra.mxu0 %v968
    %3954 = vmatprep.subr.bf16.mxu0 %v973
    %3955 = vmatpush1.bf16.msra.mxu0 %v972
    %3956 = vmatprep.subr.bf16.mxu0 %v977
    %3957 = vmatpush1.bf16.msra.mxu0 %v976
    %3958 = vmatprep.subr.bf16.mxu0 %v981
    %3959 = vmatpush1.bf16.msra.mxu0 %v980
    %3960 = vmatprep.subr.bf16.mxu0 0
    %3961 = vmatpush1.bf16.msra.mxu0 0
    %3962 = vmatprep.subr.bf16.mxu0 0
    %3963 = vmatpush1.bf16.msra.mxu0 0
    %3964 = vmatprep.subr.bf16.mxu0 0
    %3965 = vmatpush1.bf16.msra.mxu0 0
    %3966 = vmatprep.subr.bf16.mxu0 0
    %3967 = vmatpush1.bf16.msra.mxu0 0
    %3968 = vmatprep.subr.bf16.mxu0 0
    %3969 = vmatpush1.bf16.msra.mxu0 0
    %3970 = vmatprep.subr.bf16.mxu0 0
    %3971 = vmatpush1.bf16.msra.mxu0 0
    %3972 = vmatprep.subr.bf16.mxu0 0
    %3973 = vmatpush1.bf16.msra.mxu0 0
    %3974 = vmatprep.subr.bf16.mxu0 0
    %3975 = vmatpush1.bf16.msra.mxu0 0
    %3976 = vmatprep.mubr.bf16.mxu0 0
    %3977 = vmatmul.mubr.bf16.gmra.mrb[0].mxu0 %v3902
    %v3978 = vpop.f32.mrb[0].mxu0
    %v3979 = vadd.f32 0.0, %v3978
    %v3980 = vpop.f32.mrb[0].mxu0
    %v3981 = vadd.f32 0.0, %v3980
    %v3982 = vpop.f32.mrb[0].mxu0
    %v3983 = vpop.f32.mrb[0].mxu0
    %3984 = vdwg.mxu0
    %3985 = vmatprep.subr.bf16.mxu0 %v1193
    %3986 = vmatpush1.bf16.msra.mxu0 %v1192
    %3987 = vmatprep.subr.bf16.mxu0 %v1197
    %3988 = vmatpush1.bf16.msra.mxu0 %v1196
    %3989 = vmatprep.subr.bf16.mxu0 %v1201
    %3990 = vmatpush1.bf16.msra.mxu0 %v1200
    %3991 = vmatprep.subr.bf16.mxu0 %v1205
    %3992 = vmatpush1.bf16.msra.mxu0 %v1204
    %3993 = vmatprep.subr.bf16.mxu0 %v1209
    %3994 = vmatpush1.bf16.msra.mxu0 %v1208
    %3995 = vmatprep.subr.bf16.mxu0 %v1213
    %3996 = vmatpush1.bf16.msra.mxu0 %v1212
    %3997 = vmatprep.subr.bf16.mxu0 %v1217
    %3998 = vmatpush1.bf16.msra.mxu0 %v1216
    %3999 = vmatprep.subr.bf16.mxu0 %v1221
    %4000 = vmatpush1.bf16.msra.mxu0 %v1220
    %4001 = vmatprep.subr.bf16.mxu0 0
    %4002 = vmatpush1.bf16.msra.mxu0 0
    %4003 = vmatprep.subr.bf16.mxu0 0
    %4004 = vmatpush1.bf16.msra.mxu0 0
    %4005 = vmatprep.subr.bf16.mxu0 0
    %4006 = vmatpush1.bf16.msra.mxu0 0
    %4007 = vmatprep.subr.bf16.mxu0 0
    %4008 = vmatpush1.bf16.msra.mxu0 0
    %4009 = vmatprep.subr.bf16.mxu0 0
    %4010 = vmatpush1.bf16.msra.mxu0 0
    %4011 = vmatprep.subr.bf16.mxu0 0
    %4012 = vmatpush1.bf16.msra.mxu0 0
    %4013 = vmatprep.subr.bf16.mxu0 0
    %4014 = vmatpush1.bf16.msra.mxu0 0
    %4015 = vmatprep.subr.bf16.mxu0 0
    %4016 = vmatpush1.bf16.msra.mxu0 0
    %4017 = vmatprep.mubr.bf16.mxu0 0
    %4018 = vmatmul.mubr.bf16.gmra.mrb[0].mxu0 %v3901
    %v4019 = vpop.f32.mrb[0].mxu0
    %v4020 = vadd.f32 %v3938, %v4019
    %v4021 = vpop.f32.mrb[0].mxu0
    %v4022 = vadd.f32 %v3940, %v4021
    %v4023 = vpop.f32.mrb[0].mxu0
    %v4024 = vpop.f32.mrb[0].mxu0
    %4025 = vdwg.mxu0
    %4026 = vmatprep.subr.bf16.mxu0 %v1195
    %4027 = vmatpush1.bf16.msra.mxu0 %v1194
    %4028 = vmatprep.subr.bf16.mxu0 %v1199
    %4029 = vmatpush1.bf16.msra.mxu0 %v1198
    %4030 = vmatprep.subr.bf16.mxu0 %v1203
    %4031 = vmatpush1.bf16.msra.mxu0 %v1202
    %4032 = vmatprep.subr.bf16.mxu0 %v1207
    %4033 = vmatpush1.bf16.msra.mxu0 %v1206
    %4034 = vmatprep.subr.bf16.mxu0 %v1211
    %4035 = vmatpush1.bf16.msra.mxu0 %v1210
    %4036 = vmatprep.subr.bf16.mxu0 %v1215
    %4037 = vmatpush1.bf16.msra.mxu0 %v1214
    %4038 = vmatprep.subr.bf16.mxu0 %v1219
    %4039 = vmatpush1.bf16.msra.mxu0 %v1218
    %4040 = vmatprep.subr.bf16.mxu0 %v1223
    %4041 = vmatpush1.bf16.msra.mxu0 %v1222
    %4042 = vmatprep.subr.bf16.mxu0 0
    %4043 = vmatpush1.bf16.msra.mxu0 0
    %4044 = vmatprep.subr.bf16.mxu0 0
    %4045 = vmatpush1.bf16.msra.mxu0 0
    %4046 = vmatprep.subr.bf16.mxu0 0
    %4047 = vmatpush1.bf16.msra.mxu0 0
    %4048 = vmatprep.subr.bf16.mxu0 0
    %4049 = vmatpush1.bf16.msra.mxu0 0
    %4050 = vmatprep.subr.bf16.mxu0 0
    %4051 = vmatpush1.bf16.msra.mxu0 0
    %4052 = vmatprep.subr.bf16.mxu0 0
    %4053 = vmatpush1.bf16.msra.mxu0 0
    %4054 = vmatprep.subr.bf16.mxu0 0
    %4055 = vmatpush1.bf16.msra.mxu0 0
    %4056 = vmatprep.subr.bf16.mxu0 0
    %4057 = vmatpush1.bf16.msra.mxu0 0
    %4058 = vmatprep.mubr.bf16.mxu0 0
    %4059 = vmatmul.mubr.bf16.gmra.mrb[0].mxu0 %v3901
    %v4060 = vpop.f32.mrb[0].mxu0
    %v4061 = vadd.f32 %v3979, %v4060
    %v4062 = vpop.f32.mrb[0].mxu0
    %v4063 = vadd.f32 %v3981, %v4062
    %v4064 = vpop.f32.mrb[0].mxu0
    %v4065 = vpop.f32.mrb[0].mxu0
    %4066 = vdwg.mxu0
    %v4067 = vadd.f32 %v4020, %v317
    %v4068 = vadd.f32 %v4022, %v321
    %v4069 = vadd.f32 %v4061, %v325
    %v4070 = vadd.f32 %v4063, %v329
    %v4071 = vxor.u32 %v4067, 2147483648
    %v4072 = vxor.u32 %v4068, 2147483648
    %v4073 = vxor.u32 %v4069, 2147483648
    %v4074 = vmul.f32 %v4071, 1.442695
    %v4075 = vpow.pop %v4074
    %v4076 = vmul.f32 %v4072, 1.442695
    %v4077 = vpow.pop %v4076
    %v4078 = vmul.f32 %v4073, 1.442695
    %v4079 = vpow.pop %v4078
    %v4080 = vadd.f32 %v4075, 1.0
    %v4081 = vadd.f32 %v4077, 1.0
    %v4082 = vadd.f32 %v4079, 1.0
    %v4083 = vrcp.pop %v4080
    %v4084 = vmul.f32 1.0, %v4083
    %v4085 = vrcp.pop %v4081
    %v4086 = vmul.f32 1.0, %v4085
    %v4087 = vrcp.pop %v4082
    %v4088 = vmul.f32 1.0, %v4087
    %v4089 = vtanh.pop %v4070
    %v4090 = vmul.f32 %v4086, %v3702
    %v4091 = vmul.f32 %v4084, %v4089
    %v4092 = vadd.f32 %v4090, %v4091
    %v4093 = vtanh.pop %v4092
    %v4094 = vmul.f32 %v4088, %v4093
    %s4095 = scalar_lea.vmem [#allocation6], 56
    %4096 = vst [vmem:[%s4095] sm:$0xff] %v4094
    %4097 = vst [vmem:[#allocation2] sm:$0xff] %v3900
    %4098 = vst [vmem:[#allocation3] sm:$0xff] %v3898
    %4099 = vst [vmem:[#allocation4] sm:$0xff] %v4094
    %4100 = vst [vmem:[#allocation5] sm:$0xff] %v4092
    %v4101 = vld [vmem:[#allocation6] sm:$0xff]
    %v4102 = vld [vmem:[#allocation6 + $0x8] sm:$0xff]
    %v4103 = vld [vmem:[#allocation6 + $0x10] sm:$0xff]
    %v4104 = vld [vmem:[#allocation6 + $0x18] sm:$0xff]
    %v4105 = vld [vmem:[#allocation6 + $0x20] sm:$0xff]
    %v4106 = vld [vmem:[#allocation6 + $0x28] sm:$0xff]
    %v4107 = vld [vmem:[#allocation6 + $0x30] sm:$0xff]
    %v4108 = vld [vmem:[#allocation6 + $0x38] sm:$0xff]
    %v4109 = vpack.c.bf16 %v4102, %v4101
    %v4110 = vpack.c.bf16 %v4104, %v4103
    %v4111 = vpack.c.bf16 %v4106, %v4105
    %v4112 = vpack.c.bf16 %v4108, %v4107
    %v4113 = vld [vmem:[#allocation19] sm:$0xf]
    %v4114 = vld [vmem:[#allocation19 + $0x4] sm:$0xf]
    %v4115 = vld [vmem:[#allocation19 + $0x8] sm:$0xf]
    %v4116 = vld [vmem:[#allocation19 + $0xc] sm:$0xf]
    %v4117 = vld [vmem:[#allocation19 + $0x10] sm:$0xf]
    %v4118 = vld [vmem:[#allocation19 + $0x14] sm:$0xf]
    %v4119 = vld [vmem:[#allocation19 + $0x18] sm:$0xf]
    %v4120 = vld [vmem:[#allocation19 + $0x1c] sm:$0xf]
    %v4121 = vld [vmem:[#allocation19 + $0x20] sm:$0xf]
    %v4122 = vld [vmem:[#allocation19 + $0x24] sm:$0xf]
    %v4123 = vld [vmem:[#allocation19 + $0x28] sm:$0xf]
    %v4124 = vld [vmem:[#allocation19 + $0x2c] sm:$0xf]
    %v4125 = vld [vmem:[#allocation19 + $0x30] sm:$0xf]
    %v4126 = vld [vmem:[#allocation19 + $0x34] sm:$0xf]
    %v4127 = vld [vmem:[#allocation19 + $0x38] sm:$0xf]
    %v4128 = vld [vmem:[#allocation19 + $0x3c] sm:$0xf]
    %v4129 = vld [vmem:[#allocation21] sm:$0x1]
    %v4131 = vlaneseq
    %v4132 = vshrl.u32 %v4131, 7
    %v4133 = vsub.s32 0, %v4132
    %v4134 = vrot.slane %v4129, %v4133
    %v4152 = vunpack.c.l.b16 %v4113
    %v4153 = vunpack.c.l.b16 %v4114
    %v4154 = vunpack.c.l.b16 %v4115
    %v4155 = vunpack.c.l.b16 %v4116
    %v4156 = vunpack.c.l.b16 %v4117
    %v4157 = vunpack.c.l.b16 %v4118
    %v4158 = vunpack.c.l.b16 %v4119
    %v4159 = vunpack.c.l.b16 %v4120
    %v4160 = vunpack.c.l.b16 %v4121
    %v4161 = vunpack.c.l.b16 %v4122
    %v4162 = vunpack.c.l.b16 %v4123
    %v4163 = vunpack.c.l.b16 %v4124
    %v4164 = vunpack.c.l.b16 %v4125
    %v4165 = vunpack.c.l.b16 %v4126
    %v4166 = vunpack.c.l.b16 %v4127
    %v4167 = vunpack.c.l.b16 %v4128
    %v4168 = vpack.c.b16 %v4153, %v4152
    %v4169 = vpack.c.b16 %v4155, %v4154
    %v4170 = vpack.c.b16 %v4157, %v4156
    %v4171 = vpack.c.b16 %v4159, %v4158
    %v4172 = vpack.c.b16 %v4161, %v4160
    %v4173 = vpack.c.b16 %v4163, %v4162
    %v4174 = vpack.c.b16 %v4165, %v4164
    %v4175 = vpack.c.b16 %v4167, %v4166
    %4184 = vmatprep.subr.bf16.mxu0 0
    %4185 = vmatpush1.bf16.msra.mxu0 %v4168
    %4186 = vmatprep.subr.bf16.mxu0 0
    %4187 = vmatpush1.bf16.msra.mxu0 %v4169
    %4188 = vmatprep.subr.bf16.mxu0 0
    %4189 = vmatpush1.bf16.msra.mxu0 %v4170
    %4190 = vmatprep.subr.bf16.mxu0 0
    %4191 = vmatpush1.bf16.msra.mxu0 %v4171
    %4192 = vmatprep.subr.bf16.mxu0 0
    %4193 = vmatpush1.bf16.msra.mxu0 %v4172
    %4194 = vmatprep.subr.bf16.mxu0 0
    %4195 = vmatpush1.bf16.msra.mxu0 %v4173
    %4196 = vmatprep.subr.bf16.mxu0 0
    %4197 = vmatpush1.bf16.msra.mxu0 %v4174
    %4198 = vmatprep.subr.bf16.mxu0 0
    %4199 = vmatpush1.bf16.msra.mxu0 %v4175
    %4200 = vmatprep.subr.bf16.mxu0 0
    %4201 = vmatpush1.bf16.msra.mxu0 0
    %4202 = vmatprep.subr.bf16.mxu0 0
    %4203 = vmatpush1.bf16.msra.mxu0 0
    %4204 = vmatprep.subr.bf16.mxu0 0
    %4205 = vmatpush1.bf16.msra.mxu0 0
    %4206 = vmatprep.subr.bf16.mxu0 0
    %4207 = vmatpush1.bf16.msra.mxu0 0
    %4208 = vmatprep.subr.bf16.mxu0 0
    %4209 = vmatpush1.bf16.msra.mxu0 0
    %4210 = vmatprep.subr.bf16.mxu0 0
    %4211 = vmatpush1.bf16.msra.mxu0 0
    %4212 = vmatprep.subr.bf16.mxu0 0
    %4213 = vmatpush1.bf16.msra.mxu0 0
    %4214 = vmatprep.subr.bf16.mxu0 0
    %4215 = vmatpush1.bf16.msra.mxu0 0
    %4216 = vmatprep.mubr.bf16.mxu0 0
    %4217 = vmatmul.mubr.bf16.gmra.mrb[0].mxu0 %v4109
    %v4218 = vpop.f32.mrb[0].mxu0
    %v4219 = vadd.f32 %v4134, %v4218
    %v4220 = vpop.f32.mrb[0].mxu0
    %v4221 = vpop.f32.mrb[0].mxu0
    %v4222 = vadd.f32 %v4134, %v4221
    %v4223 = vpop.f32.mrb[0].mxu0
    %4224 = vmatprep.mubr.bf16.mxu0 0
    %4225 = vmatmul.mubr.bf16.gmra.mrb[0].mxu0 %v4110
    %v4226 = vpop.f32.mrb[0].mxu0
    %v4227 = vadd.f32 %v4134, %v4226
    %v4228 = vpop.f32.mrb[0].mxu0
    %v4229 = vpop.f32.mrb[0].mxu0
    %v4230 = vadd.f32 %v4134, %v4229
    %v4231 = vpop.f32.mrb[0].mxu0
    %4232 = vmatprep.mubr.bf16.mxu0 0
    %4233 = vmatmul.mubr.bf16.gmra.mrb[0].mxu0 %v4111
    %v4234 = vpop.f32.mrb[0].mxu0
    %v4235 = vadd.f32 %v4134, %v4234
    %v4236 = vpop.f32.mrb[0].mxu0
    %v4237 = vpop.f32.mrb[0].mxu0
    %v4238 = vadd.f32 %v4134, %v4237
    %v4239 = vpop.f32.mrb[0].mxu0
    %4240 = vmatprep.mubr.bf16.mxu0 0
    %4241 = vmatmul.mubr.bf16.gmra.mrb[0].mxu0 %v4112
    %v4242 = vpop.f32.mrb[0].mxu0
    %v4243 = vadd.f32 %v4134, %v4242
    %v4244 = vpop.f32.mrb[0].mxu0
    %v4245 = vpop.f32.mrb[0].mxu0
    %v4246 = vadd.f32 %v4134, %v4245
    %v4247 = vpop.f32.mrb[0].mxu0
    %4248 = vdwg.mxu0
    %4249 = vst [vmem:[#allocation22] sm:$0xff] %v4219
    %4250 = vst [vmem:[#allocation22 + $0x8] sm:$0xff] %v4222
    %4251 = vst [vmem:[#allocation22 + $0x10] sm:$0xff] %v4227
    %4252 = vst [vmem:[#allocation22 + $0x18] sm:$0xff] %v4230
    %4253 = vst [vmem:[#allocation22 + $0x20] sm:$0xff] %v4235
    %4254 = vst [vmem:[#allocation22 + $0x28] sm:$0xff] %v4238
    %4255 = vst [vmem:[#allocation22 + $0x30] sm:$0xff] %v4243
    %4256 = vst [vmem:[#allocation22 + $0x38] sm:$0xff] %v4246
    // Predicated region
    $region78: #{poetry_forward.1} parent=1 // pred_check
      %p4257 = pneg %p154
    $region79: #{poetry_forward.1} parent=1 // pred_check_branch
      %4259 = sbr.rel (%p4257) target = $region81
    $region80: #{poetry_forward.1} parent=1 // pred_region
      %4260 = vst [vmem:[#allocation23] sm:$0xff] %v3900
      %s4261 = scalar_lea.vmem [#allocation23], 8
      %4262 = vst [vmem:[%s4261] sm:$0xff] %v4094
      %4263 = vst [vmem:[#allocation25] sm:$0xff] %v3898
      %s4264 = scalar_lea.vmem [#allocation25], 8
      %4265 = vst [vmem:[%s4264] sm:$0xff] %v4092
    $region81: #{poetry_forward.1} parent=1 // pred_fallthru
      _
    // Predicated region
    $region82: #{poetry_forward.1} parent=1 // pred_check
      _
    $region83: #{poetry_forward.1} parent=1 // pred_check_branch
      %4267 = sbr.rel (0) target = $region85
    $region84: #{poetry_forward.1} parent=1 // pred_region
      %s4269 = ssub.s32 1024, 1024
      %4270 = vsyncadd [#allocation9], %s4269
      %s4271 = sshll.u32 [#allocation22], 4
      %s4272 = int_to_ptr.vmem [resolvable:$true] %s4271
      %4277 = dma.vmem_to_hbm [thread:$0]  %s4272, 1024, %s9, [#allocation9], 128, 128, 8
    $region85: #{poetry_forward.1} parent=1 // pred_fallthru
      _
    // Predicated region
    $region86: #{poetry_forward.1} parent=1 // pred_check
      _
    $region87: #{poetry_forward.1} parent=1 // pred_check_branch
      %4279 = sbr.rel (0) target = $region89
    $region88: #{poetry_forward.1} parent=1 // pred_region
      %s4281 = ssub.s32 256, 256
      %4282 = vsyncadd [#allocation24], %s4281
      %s4283 = sshll.u32 [#allocation23], 4
      %s4284 = int_to_ptr.vmem [resolvable:$true] %s4283
      %4289 = dma.vmem_to_hbm [thread:$0]  %s4284, 256, %s10, [#allocation24], 128, 128, 8
    $region89: #{poetry_forward.1} parent=1 // pred_fallthru
      _
    // Predicated region
    $region90: #{poetry_forward.1} parent=1 // pred_check
      _
    $region91: #{poetry_forward.1} parent=1 // pred_check_branch
      %4291 = sbr.rel (0) target = $region93
    $region92: #{poetry_forward.1} parent=1 // pred_region
      %s4293 = ssub.s32 256, 256
      %4294 = vsyncadd [#allocation24], %s4293
      %s4295 = sshll.u32 [#allocation25], 4
      %s4296 = int_to_ptr.vmem [resolvable:$true] %s4295
      %4301 = dma.vmem_to_hbm [thread:$0]  %s4296, 256, %s11, [#allocation24], 128, 128, 8
    $region93: #{poetry_forward.1} parent=1 // pred_fallthru
      _
    // Predicated region
    $region94: #{poetry_forward.1} parent=1 // pred_check
      _
    $region95: #{poetry_forward.1} parent=1 // pred_check_branch
      %4303 = sbr.rel (0) target = $region97
    $region96: #{poetry_forward.1} parent=1 // pred_region
      %4304 = dma.done [#allocation9], 1024
    $region97: #{poetry_forward.1} parent=1 // pred_fallthru
      _
    // Predicated region
    $region98: #{poetry_forward.1} parent=1 // pred_check
      _
    $region99: #{poetry_forward.1} parent=1 // pred_check_branch
      %4306 = sbr.rel (0) target = $region101
    $region100: #{poetry_forward.1} parent=1 // pred_region
      %4307 = dma.done [#allocation24], 256
    $region101: #{poetry_forward.1} parent=1 // pred_fallthru
      _
    // Predicated region
    $region102: #{poetry_forward.1} parent=1 // pred_check
      _
    $region103: #{poetry_forward.1} parent=1 // pred_check_branch
      %4309 = sbr.rel (0) target = $region105
    $region104: #{poetry_forward.1} parent=1 // pred_region
      %4310 = dma.done [#allocation24], 256
    $region105: #{poetry_forward.1} parent=1 // pred_fallthru
      _
    %4311 = vsyncpa [#allocation8], 1
    %4312 = vsyncpa [#allocation11], 1
    %4313 = vsyncpa [#allocation14], 1
    %4314 = vsyncpa [#allocation17], 1
    %4315 = vsyncpa [#allocation20], 1
    %4316 = vsyncpa [#allocation9], 1
    %4317 = vsyncpa [#allocation24], 1

</llo_original>
